<compile_context>
chip_gen: v5e
topology: v5e:2x2
jax: 0.10.0
libtpu: 0.0.40
codegen_flags: <defaults>
</compile_context>

<pallas_src>
import math

import jax
import jax.numpy as jnp
from jax import lax
from jax.experimental import pallas as pl
from jax.experimental.pallas import tpu as pltpu


def _round_up(x, m):
    return (x + m - 1) // m * m


_GATE_REORDER = (0, 1, 3, 2)  # PyTorch (i, f, g, o) -> kernel (i, f, o, g)


# ------------------------------ fused kernel ---------------------------------
def _make_fused_kernel(T, Bp, Hp, I):
    """Kernel refs (in order): x, wih1, b1, whh1, w2cat, b2, wfc, bfc, out, xp_scr."""

    unroll = True if T <= 16 else 8  # cap unroll if T grows (review item)

    def lstm_act(g, c):
        # Gate order (i, f, o, g): one sigmoid over a contiguous 3*Hp slab,
        # sigmoid(x) == 0.5*tanh(0.5x)+0.5 (single EUP op, no exp+divide).
        s = 0.5 * jnp.tanh(0.5 * g[:, : 3 * Hp]) + 0.5
        i = s[:, 0 * Hp:1 * Hp]
        f = s[:, 1 * Hp:2 * Hp]
        o = s[:, 2 * Hp:3 * Hp]
        gg = jnp.tanh(g[:, 3 * Hp:4 * Hp])
        c_new = f * c + i * gg
        h_new = o * jnp.tanh(c_new)
        return h_new, c_new

    def kernel(x_ref, wih1_ref, b1_ref, whh1_ref, w2_ref, b2_ref,
               wfc_ref, bfc_ref, out_ref, xp_scr):
        # Hoisted layer-1 input projection for all T timesteps (off the serial chain).
        if I == 1:
            # K=1 matmul replaced by a VPU outer product (keeps the MXU free).
            xp_scr[...] = x_ref[...] * wih1_ref[...] + b1_ref[...]
        else:
            xp_scr[...] = (jnp.dot(x_ref[...], wih1_ref[...],
                                   preferred_element_type=jnp.float32) + b1_ref[...])

        zeros = jnp.zeros((Bp, Hp), jnp.float32)

        # Layer-1 timestep 0: h1 = c1 = 0, so the recurrent matmul vanishes.
        h1, c1 = lstm_act(xp_scr[pl.ds(0, Bp), :], zeros)

        def step(t, carry):
            h1, c1, h2, c2 = carry
            # ---- layer-2 timestep t-1: input h1 (== h1_{t-1}), state (h2, c2).
            #      Independent of the layer-1 update below (wavefront) -> overlappable.
            h12 = jnp.concatenate([h1, h2], axis=-1).astype(jnp.bfloat16)  # (Bp, 2*Hp)
            g2 = (jnp.dot(h12, w2_ref[...], preferred_element_type=jnp.float32)
                  + b2_ref[...])
            # ---- layer-1 timestep t.
            row = pl.multiple_of(t * Bp, 8)          # 8-aligned sublane offset
            g1 = xp_scr[pl.ds(row, Bp), :] + jnp.dot(
                h1.astype(jnp.bfloat16), whh1_ref[...],
                preferred_element_type=jnp.float32)
            h1n, c1n = lstm_act(g1, c1)
            h2n, c2n = lstm_act(g2, c2)
            return h1n, c1n, h2n, c2n

        h1, c1, h2, c2 = lax.fori_loop(1, T, step, (h1, c1, zeros, zeros),
                                       unroll=unroll)

        # Epilogue: layer-2 timestep T-1 on the final layer-1 hidden state.
        h12 = jnp.concatenate([h1, h2], axis=-1).astype(jnp.bfloat16)
        g2 = (jnp.dot(h12, w2_ref[...], preferred_element_type=jnp.float32)
              + b2_ref[...])
        h2, _ = lstm_act(g2, c2)

        # FC head fused into the same kernel (f32).
        out_ref[...] = (jnp.dot(h2, wfc_ref[...],
                                preferred_element_type=jnp.float32) + bfc_ref[...])

    return kernel


# --------------------------- param padding helpers ----------------------------
def _pad_gate_matrix(w, in_dim, in_pad, H, Hp, dtype):
    """PyTorch (4H, in_dim) gate-stacked weight -> padded transposed (in_pad, 4*Hp),
    with gates reordered (i, f, g, o) -> (i, f, o, g)."""
    w4 = w.reshape(4, H, in_dim).astype(jnp.float32)[jnp.array(_GATE_REORDER)]
    out = jnp.zeros((4, Hp, in_pad), jnp.float32).at[:, :H, :in_dim].set(w4)
    return jnp.transpose(out, (2, 0, 1)).reshape(in_pad, 4 * Hp).astype(dtype)


def _pad_bias(b_ih, b_hh, H, Hp):
    b = (b_ih + b_hh).reshape(4, H).astype(jnp.float32)[jnp.array(_GATE_REORDER)]
    out = jnp.zeros((4, Hp), jnp.float32).at[:, :H].set(b)
    return out.reshape(1, 4 * Hp)


# ------------------------------- model wrapper --------------------------------
@jax.jit
def lstm_model_forward(x, params):
    """x: (B, T, I) batch_first like PyTorch. Returns (B, output_size)."""
    B, T, I = x.shape
    assert len(params["lstm"]) == 2, "fused wavefront kernel is specialized to 2 layers"
    l1, l2 = params["lstm"]
    H = l1["w_hh"].shape[1]
    O = params["fc_w"].shape[0]

    Hp = _round_up(max(H, 128), 128)   # lane-aligned gate blocks
    Bp = _round_up(max(B, 8), 8)       # sublane-aligned batch

    # Time-major, batch-padded, flattened input: (T*Bp, I).
    x_tm = jnp.transpose(x.astype(jnp.float32), (1, 0, 2))          # (T, B, I)
    x_pad = jnp.zeros((T, Bp, I), jnp.float32).at[:, :B, :].set(x_tm)
    x_flat = x_pad.reshape(T * Bp, I)

    wih1 = _pad_gate_matrix(l1["w_ih"], I, I, H, Hp, jnp.float32)     # (I, 4*Hp)  f32
    b1 = _pad_bias(l1["b_ih"], l1["b_hh"], H, Hp)                     # (1, 4*Hp)  f32
    whh1 = _pad_gate_matrix(l1["w_hh"], H, Hp, H, Hp, jnp.bfloat16)   # (Hp, 4*Hp) bf16
    # Layer-2 weights concatenated on the contraction dim: [W_ih2 ; W_hh2].
    w2 = jnp.concatenate(
        [_pad_gate_matrix(l2["w_ih"], H, Hp, H, Hp, jnp.float32),
         _pad_gate_matrix(l2["w_hh"], H, Hp, H, Hp, jnp.float32)],
        axis=0).astype(jnp.bfloat16)                                  # (2*Hp, 4*Hp) bf16
    b2 = _pad_bias(l2["b_ih"], l2["b_hh"], H, Hp)                     # (1, 4*Hp)  f32
    wfc = jnp.zeros((Hp, O), jnp.float32).at[:H, :].set(
        params["fc_w"].T.astype(jnp.float32))                         # (Hp, O)    f32
    bfc = params["fc_b"].reshape(1, O).astype(jnp.float32)            # (1, O)     f32

    operands = [x_flat, wih1, b1, whh1, w2, b2, wfc, bfc]

    # VMEM budget: operands + xp_scr + headroom (guards v7x's 64 MiB if T/Hp grow).
    op_bytes = sum(math.prod(a.shape) * a.dtype.itemsize for a in operands)
    scr_bytes = T * Bp * 4 * Hp * 4
    vmem_limit = int(min(64 << 20, max(16 << 20, 2 * (op_bytes + scr_bytes) + (1 << 20))))

    kernel = _make_fused_kernel(T, Bp, Hp, I)
    out = pl.pallas_call(
        kernel,
        out_shape=jax.ShapeDtypeStruct((Bp, O), jnp.float32),
        in_specs=[pl.BlockSpec(memory_space=pltpu.MemorySpace.VMEM)] * len(operands),
        out_specs=pl.BlockSpec(memory_space=pltpu.MemorySpace.VMEM),
        scratch_shapes=[
            pltpu.VMEM((T * Bp, 4 * Hp), jnp.float32),   # hoisted layer-1 gate pre-acts
        ],
        compiler_params=pltpu.CompilerParams(vmem_limit_bytes=vmem_limit),
    )(*operands)
    return out[:B]


# ------------------------------ init / reference -------------------------------
def init_params(key, input_size, hidden_size, num_layers, output_size):
    """PyTorch-shaped params, uniform(-1/sqrt(H), 1/sqrt(H))."""
    H = hidden_size
    k = 1.0 / float(H) ** 0.5
    layers = []
    for l in range(num_layers):
        in_dim = input_size if l == 0 else H
        key, k1, k2, k3, k4 = jax.random.split(key, 5)
        layers.append({
            "w_ih": jax.random.uniform(k1, (4 * H, in_dim), jnp.float32, -k, k),
            "w_hh": jax.random.uniform(k2, (4 * H, H), jnp.float32, -k, k),
            "b_ih": jax.random.uniform(k3, (4 * H,), jnp.float32, -k, k),
            "b_hh": jax.random.uniform(k4, (4 * H,), jnp.float32, -k, k),
        })
    key, k5, k6 = jax.random.split(key, 3)
    fc_w = jax.random.uniform(k5, (output_size, H), jnp.float32, -k, k)
    fc_b = jax.random.uniform(k6, (output_size,), jnp.float32, -k, k)
    return {"lstm": layers, "fc_w": fc_w, "fc_b": fc_b}


def reference_forward(x, params):
    """Pure-JAX f32 reference matching PyTorch nn.LSTM (eval mode) + Linear."""
    B, T, _ = x.shape
    seq = x.astype(jnp.float32)
    for layer in params["lstm"]:
        H = layer["w_hh"].shape[1]
        wih_t, whh_t = layer["w_ih"].T, layer["w_hh"].T
        b = layer["b_ih"] + layer["b_hh"]
        h = jnp.zeros((B, H), jnp.float32)
        c = jnp.zeros((B, H), jnp.float32)
        outs = []
        for t in range(T):
            gates = seq[:, t, :] @ wih_t + h @ whh_t + b
            i = jax.nn.sigmoid(gates[:, :H])
            f = jax.nn.sigmoid(gates[:, H:2 * H])
            g = jnp.tanh(gates[:, 2 * H:3 * H])
            o = jax.nn.sigmoid(gates[:, 3 * H:4 * H])
            c = f * c + i * g
            h = o * jnp.tanh(c)
            outs.append(h)
        seq = jnp.stack(outs, axis=1)
    return seq[:, -1, :] @ params["fc_w"].T + params["fc_b"]


if __name__ == "__main__":
    B, T = 2, 8
    input_size, hidden_size, num_layers, output_size = 1, 50, 2, 1

    key = jax.random.PRNGKey(0)
    key, xkey = jax.random.split(key)
    x = jax.random.normal(xkey, (B, T, input_size), jnp.float32)
    params = init_params(key, input_size, hidden_size, num_layers, output_size)

    out = jax.block_until_ready(lstm_model_forward(x, params))
    assert out.shape == (B, output_size), out.shape

    ref = jax.block_until_ready(reference_forward(x, params))
    # bf16 MXU feeds with f32 accumulation -> relaxed tolerance vs. f32 reference.
    assert jnp.allclose(out, ref, rtol=3e-2, atol=1e-2), (out, ref)

    print("KERNEL_OK")
</pallas_src>

<mosaic_0001>
module attributes {stable_mosaic.version = 11 : i64} {
  func.func @kernel(%arg0: memref<64x1xf32, #tpu.memory_space<vmem>>, %arg1: memref<1x512xf32, #tpu.memory_space<vmem>>, %arg2: memref<1x512xf32, #tpu.memory_space<vmem>>, %arg3: memref<128x512xbf16, #tpu.memory_space<vmem>>, %arg4: memref<256x512xbf16, #tpu.memory_space<vmem>>, %arg5: memref<1x512xf32, #tpu.memory_space<vmem>>, %arg6: memref<128x1xf32, #tpu.memory_space<vmem>>, %arg7: memref<1x1xf32, #tpu.memory_space<vmem>>, %arg8: memref<8x1xf32, #tpu.memory_space<vmem>>, %arg9: memref<64x512xf32, #tpu.memory_space<vmem>>) attributes {dimension_semantics = [], scalar_prefetch = 0 : i64, scratch_operands = 1 : i64, tpu.core_type = #tpu.core_type<tc>} {
    %c0 = arith.constant 0 : index
    %c0_0 = arith.constant 0 : index
    %0 = vector.load %arg0[%c0, %c0_0] : memref<64x1xf32, #tpu.memory_space<vmem>>, vector<64x1xf32>
    %c0_1 = arith.constant 0 : index
    %c0_2 = arith.constant 0 : index
    %1 = vector.load %arg1[%c0_1, %c0_2] : memref<1x512xf32, #tpu.memory_space<vmem>>, vector<1x512xf32>
    %2 = vector.broadcast %0 : vector<64x1xf32> to vector<64x512xf32>
    %3 = vector.broadcast %1 : vector<1x512xf32> to vector<64x512xf32>
    %4 = arith.mulf %2, %3 : vector<64x512xf32>
    %c0_3 = arith.constant 0 : index
    %c0_4 = arith.constant 0 : index
    %5 = vector.load %arg2[%c0_3, %c0_4] : memref<1x512xf32, #tpu.memory_space<vmem>>, vector<1x512xf32>
    %6 = vector.broadcast %5 : vector<1x512xf32> to vector<64x512xf32>
    %7 = arith.addf %4, %6 : vector<64x512xf32>
    %c0_5 = arith.constant 0 : index
    %c0_6 = arith.constant 0 : index
    %8 = vector.load %arg9[%c0_5, %c0_6] : memref<64x512xf32, #tpu.memory_space<vmem>>, vector<64x512xf32>
    tpu.vector_store %arg9[%c0_5, %c0_6], %7 {strides = array<i32>} : memref<64x512xf32, #tpu.memory_space<vmem>>, vector<64x512xf32>,
    %cst = arith.constant 0.000000e+00 : f32
    %9 = vector.broadcast %cst : f32 to vector<8x128xf32>
    %c0_7 = arith.constant 0 : index
    %c0_8 = arith.constant 0 : index
    %10 = vector.load %arg9[%c0_7, %c0_8] : memref<64x512xf32, #tpu.memory_space<vmem>>, vector<8x512xf32>
    %11 = vector.extract_strided_slice %10 {offsets = [0, 0], sizes = [8, 384], strides = [1, 1]} : vector<8x512xf32> to vector<8x384xf32>
    %cst_9 = arith.constant 5.000000e-01 : f32
    %12 = vector.broadcast %cst_9 : f32 to vector<8x384xf32>
    %13 = arith.mulf %12, %11 : vector<8x384xf32>
    %14 = math.tanh %13 : vector<8x384xf32>
    %cst_10 = arith.constant 5.000000e-01 : f32
    %15 = vector.broadcast %cst_10 : f32 to vector<8x384xf32>
    %16 = arith.mulf %15, %14 : vector<8x384xf32>
    %cst_11 = arith.constant 5.000000e-01 : f32
    %17 = vector.broadcast %cst_11 : f32 to vector<8x384xf32>
    %18 = arith.addf %16, %17 : vector<8x384xf32>
    %19 = vector.extract_strided_slice %18 {offsets = [0, 0], sizes = [8, 128], strides = [1, 1]} : vector<8x384xf32> to vector<8x128xf32>
    %20 = vector.extract_strided_slice %18 {offsets = [0, 128], sizes = [8, 128], strides = [1, 1]} : vector<8x384xf32> to vector<8x128xf32>
    %21 = vector.extract_strided_slice %18 {offsets = [0, 256], sizes = [8, 128], strides = [1, 1]} : vector<8x384xf32> to vector<8x128xf32>
    %22 = vector.extract_strided_slice %10 {offsets = [0, 384], sizes = [8, 128], strides = [1, 1]} : vector<8x512xf32> to vector<8x128xf32>
    %23 = math.tanh %22 : vector<8x128xf32>
    %24 = arith.mulf %20, %9 : vector<8x128xf32>
    %25 = arith.mulf %19, %23 : vector<8x128xf32>
    %26 = arith.addf %24, %25 : vector<8x128xf32>
    %27 = math.tanh %26 : vector<8x128xf32>
    %28 = arith.mulf %21, %27 : vector<8x128xf32>
    %c1_i32 = arith.constant 1 : i32
    %29 = tpu.concatenate %28, %9 in 1 : vector<8x128xf32>, vector<8x128xf32> -> vector<8x256xf32>
    %30 = arith.truncf %29 : vector<8x256xf32> to vector<8x256xbf16>
    %c0_12 = arith.constant 0 : index
    %c0_13 = arith.constant 0 : index
    %31 = vector.load %arg4[%c0_12, %c0_13] : memref<256x512xbf16, #tpu.memory_space<vmem>>, vector<256x512xbf16>
    %cst_14 = arith.constant dense<0.000000e+00> : vector<8x512xf32>
    %32 = tpu.matmul %30, %31, %cst_14 {dimension_numbers = #tpu.dot_dimension_numbers<[1], [0], [0], [1], [0, 0, 1, 1], [], []>} : vector<8x256xbf16>, vector<256x512xbf16>, vector<8x512xf32> -> vector<8x512xf32>
    %c0_15 = arith.constant 0 : index
    %c0_16 = arith.constant 0 : index
    %33 = vector.load %arg5[%c0_15, %c0_16] : memref<1x512xf32, #tpu.memory_space<vmem>>, vector<1x512xf32>
    %34 = vector.broadcast %33 : vector<1x512xf32> to vector<8x512xf32>
    %35 = arith.addf %32, %34 : vector<8x512xf32>
    %c8_i32 = arith.constant 8 : i32
    %36 = arith.muli %c1_i32, %c8_i32 : i32
    %37 = tpu.assume_multiple %36, 8 : i32
    %38 = arith.index_cast %37 : i32 to index
    %c0_17 = arith.constant 0 : index
    %39 = vector.load %arg9[%38, %c0_17] : memref<64x512xf32, #tpu.memory_space<vmem>>, vector<8x512xf32>
    %40 = arith.truncf %28 : vector<8x128xf32> to vector<8x128xbf16>
    %c0_18 = arith.constant 0 : index
    %c0_19 = arith.constant 0 : index
    %41 = vector.load %arg3[%c0_18, %c0_19] : memref<128x512xbf16, #tpu.memory_space<vmem>>, vector<128x512xbf16>
    %cst_20 = arith.constant dense<0.000000e+00> : vector<8x512xf32>
    %42 = tpu.matmul %40, %41, %cst_20 {dimension_numbers = #tpu.dot_dimension_numbers<[1], [0], [0], [1], [0, 0, 1, 1], [], []>} : vector<8x128xbf16>, vector<128x512xbf16>, vector<8x512xf32> -> vector<8x512xf32>
    %43 = arith.addf %39, %42 : vector<8x512xf32>
    %44 = vector.extract_strided_slice %43 {offsets = [0, 0], sizes = [8, 384], strides = [1, 1]} : vector<8x512xf32> to vector<8x384xf32>
    %cst_21 = arith.constant 5.000000e-01 : f32
    %45 = vector.broadcast %cst_21 : f32 to vector<8x384xf32>
    %46 = arith.mulf %45, %44 : vector<8x384xf32>
    %47 = math.tanh %46 : vector<8x384xf32>
    %cst_22 = arith.constant 5.000000e-01 : f32
    %48 = vector.broadcast %cst_22 : f32 to vector<8x384xf32>
    %49 = arith.mulf %48, %47 : vector<8x384xf32>
    %cst_23 = arith.constant 5.000000e-01 : f32
    %50 = vector.broadcast %cst_23 : f32 to vector<8x384xf32>
    %51 = arith.addf %49, %50 : vector<8x384xf32>
    %52 = vector.extract_strided_slice %51 {offsets = [0, 0], sizes = [8, 128], strides = [1, 1]} : vector<8x384xf32> to vector<8x128xf32>
    %53 = vector.extract_strided_slice %51 {offsets = [0, 128], sizes = [8, 128], strides = [1, 1]} : vector<8x384xf32> to vector<8x128xf32>
    %54 = vector.extract_strided_slice %51 {offsets = [0, 256], sizes = [8, 128], strides = [1, 1]} : vector<8x384xf32> to vector<8x128xf32>
    %55 = vector.extract_strided_slice %43 {offsets = [0, 384], sizes = [8, 128], strides = [1, 1]} : vector<8x512xf32> to vector<8x128xf32>
    %56 = math.tanh %55 : vector<8x128xf32>
    %57 = arith.mulf %53, %26 : vector<8x128xf32>
    %58 = arith.mulf %52, %56 : vector<8x128xf32>
    %59 = arith.addf %57, %58 : vector<8x128xf32>
    %60 = math.tanh %59 : vector<8x128xf32>
    %61 = arith.mulf %54, %60 : vector<8x128xf32>
    %62 = vector.extract_strided_slice %35 {offsets = [0, 0], sizes = [8, 384], strides = [1, 1]} : vector<8x512xf32> to vector<8x384xf32>
    %cst_24 = arith.constant 5.000000e-01 : f32
    %63 = vector.broadcast %cst_24 : f32 to vector<8x384xf32>
    %64 = arith.mulf %63, %62 : vector<8x384xf32>
    %65 = math.tanh %64 : vector<8x384xf32>
    %cst_25 = arith.constant 5.000000e-01 : f32
    %66 = vector.broadcast %cst_25 : f32 to vector<8x384xf32>
    %67 = arith.mulf %66, %65 : vector<8x384xf32>
    %cst_26 = arith.constant 5.000000e-01 : f32
    %68 = vector.broadcast %cst_26 : f32 to vector<8x384xf32>
    %69 = arith.addf %67, %68 : vector<8x384xf32>
    %70 = vector.extract_strided_slice %69 {offsets = [0, 0], sizes = [8, 128], strides = [1, 1]} : vector<8x384xf32> to vector<8x128xf32>
    %71 = vector.extract_strided_slice %69 {offsets = [0, 128], sizes = [8, 128], strides = [1, 1]} : vector<8x384xf32> to vector<8x128xf32>
    %72 = vector.extract_strided_slice %69 {offsets = [0, 256], sizes = [8, 128], strides = [1, 1]} : vector<8x384xf32> to vector<8x128xf32>
    %73 = vector.extract_strided_slice %35 {offsets = [0, 384], sizes = [8, 128], strides = [1, 1]} : vector<8x512xf32> to vector<8x128xf32>
    %74 = math.tanh %73 : vector<8x128xf32>
    %75 = arith.mulf %71, %9 : vector<8x128xf32>
    %76 = arith.mulf %70, %74 : vector<8x128xf32>
    %77 = arith.addf %75, %76 : vector<8x128xf32>
    %78 = math.tanh %77 : vector<8x128xf32>
    %79 = arith.mulf %72, %78 : vector<8x128xf32>
    %c2_i32 = arith.constant 2 : i32
    %80 = tpu.concatenate %61, %79 in 1 : vector<8x128xf32>, vector<8x128xf32> -> vector<8x256xf32>
    %81 = arith.truncf %80 : vector<8x256xf32> to vector<8x256xbf16>
    %c0_27 = arith.constant 0 : index
    %c0_28 = arith.constant 0 : index
    %82 = vector.load %arg4[%c0_27, %c0_28] : memref<256x512xbf16, #tpu.memory_space<vmem>>, vector<256x512xbf16>
    %cst_29 = arith.constant dense<0.000000e+00> : vector<8x512xf32>
    %83 = tpu.matmul %81, %82, %cst_29 {dimension_numbers = #tpu.dot_dimension_numbers<[1], [0], [0], [1], [0, 0, 1, 1], [], []>} : vector<8x256xbf16>, vector<256x512xbf16>, vector<8x512xf32> -> vector<8x512xf32>
    %c0_30 = arith.constant 0 : index
    %c0_31 = arith.constant 0 : index
    %84 = vector.load %arg5[%c0_30, %c0_31] : memref<1x512xf32, #tpu.memory_space<vmem>>, vector<1x512xf32>
    %85 = vector.broadcast %84 : vector<1x512xf32> to vector<8x512xf32>
    %86 = arith.addf %83, %85 : vector<8x512xf32>
    %c8_i32_32 = arith.constant 8 : i32
    %87 = arith.muli %c2_i32, %c8_i32_32 : i32
    %88 = tpu.assume_multiple %87, 8 : i32
    %89 = arith.index_cast %88 : i32 to index
    %c0_33 = arith.constant 0 : index
    %90 = vector.load %arg9[%89, %c0_33] : memref<64x512xf32, #tpu.memory_space<vmem>>, vector<8x512xf32>
    %91 = arith.truncf %61 : vector<8x128xf32> to vector<8x128xbf16>
    %c0_34 = arith.constant 0 : index
    %c0_35 = arith.constant 0 : index
    %92 = vector.load %arg3[%c0_34, %c0_35] : memref<128x512xbf16, #tpu.memory_space<vmem>>, vector<128x512xbf16>
    %cst_36 = arith.constant dense<0.000000e+00> : vector<8x512xf32>
    %93 = tpu.matmul %91, %92, %cst_36 {dimension_numbers = #tpu.dot_dimension_numbers<[1], [0], [0], [1], [0, 0, 1, 1], [], []>} : vector<8x128xbf16>, vector<128x512xbf16>, vector<8x512xf32> -> vector<8x512xf32>
    %94 = arith.addf %90, %93 : vector<8x512xf32>
    %95 = vector.extract_strided_slice %94 {offsets = [0, 0], sizes = [8, 384], strides = [1, 1]} : vector<8x512xf32> to vector<8x384xf32>
    %cst_37 = arith.constant 5.000000e-01 : f32
    %96 = vector.broadcast %cst_37 : f32 to vector<8x384xf32>
    %97 = arith.mulf %96, %95 : vector<8x384xf32>
    %98 = math.tanh %97 : vector<8x384xf32>
    %cst_38 = arith.constant 5.000000e-01 : f32
    %99 = vector.broadcast %cst_38 : f32 to vector<8x384xf32>
    %100 = arith.mulf %99, %98 : vector<8x384xf32>
    %cst_39 = arith.constant 5.000000e-01 : f32
    %101 = vector.broadcast %cst_39 : f32 to vector<8x384xf32>
    %102 = arith.addf %100, %101 : vector<8x384xf32>
    %103 = vector.extract_strided_slice %102 {offsets = [0, 0], sizes = [8, 128], strides = [1, 1]} : vector<8x384xf32> to vector<8x128xf32>
    %104 = vector.extract_strided_slice %102 {offsets = [0, 128], sizes = [8, 128], strides = [1, 1]} : vector<8x384xf32> to vector<8x128xf32>
    %105 = vector.extract_strided_slice %102 {offsets = [0, 256], sizes = [8, 128], strides = [1, 1]} : vector<8x384xf32> to vector<8x128xf32>
    %106 = vector.extract_strided_slice %94 {offsets = [0, 384], sizes = [8, 128], strides = [1, 1]} : vector<8x512xf32> to vector<8x128xf32>
    %107 = math.tanh %106 : vector<8x128xf32>
    %108 = arith.mulf %104, %59 : vector<8x128xf32>
    %109 = arith.mulf %103, %107 : vector<8x128xf32>
    %110 = arith.addf %108, %109 : vector<8x128xf32>
    %111 = math.tanh %110 : vector<8x128xf32>
    %112 = arith.mulf %105, %111 : vector<8x128xf32>
    %113 = vector.extract_strided_slice %86 {offsets = [0, 0], sizes = [8, 384], strides = [1, 1]} : vector<8x512xf32> to vector<8x384xf32>
    %cst_40 = arith.constant 5.000000e-01 : f32
    %114 = vector.broadcast %cst_40 : f32 to vector<8x384xf32>
    %115 = arith.mulf %114, %113 : vector<8x384xf32>
    %116 = math.tanh %115 : vector<8x384xf32>
    %cst_41 = arith.constant 5.000000e-01 : f32
    %117 = vector.broadcast %cst_41 : f32 to vector<8x384xf32>
    %118 = arith.mulf %117, %116 : vector<8x384xf32>
    %cst_42 = arith.constant 5.000000e-01 : f32
    %119 = vector.broadcast %cst_42 : f32 to vector<8x384xf32>
    %120 = arith.addf %118, %119 : vector<8x384xf32>
    %121 = vector.extract_strided_slice %120 {offsets = [0, 0], sizes = [8, 128], strides = [1, 1]} : vector<8x384xf32> to vector<8x128xf32>
    %122 = vector.extract_strided_slice %120 {offsets = [0, 128], sizes = [8, 128], strides = [1, 1]} : vector<8x384xf32> to vector<8x128xf32>
    %123 = vector.extract_strided_slice %120 {offsets = [0, 256], sizes = [8, 128], strides = [1, 1]} : vector<8x384xf32> to vector<8x128xf32>
    %124 = vector.extract_strided_slice %86 {offsets = [0, 384], sizes = [8, 128], strides = [1, 1]} : vector<8x512xf32> to vector<8x128xf32>
    %125 = math.tanh %124 : vector<8x128xf32>
    %126 = arith.mulf %122, %77 : vector<8x128xf32>
    %127 = arith.mulf %121, %125 : vector<8x128xf32>
    %128 = arith.addf %126, %127 : vector<8x128xf32>
    %129 = math.tanh %128 : vector<8x128xf32>
    %130 = arith.mulf %123, %129 : vector<8x128xf32>
    %c3_i32 = arith.constant 3 : i32
    %131 = tpu.concatenate %112, %130 in 1 : vector<8x128xf32>, vector<8x128xf32> -> vector<8x256xf32>
    %132 = arith.truncf %131 : vector<8x256xf32> to vector<8x256xbf16>
    %c0_43 = arith.constant 0 : index
    %c0_44 = arith.constant 0 : index
    %133 = vector.load %arg4[%c0_43, %c0_44] : memref<256x512xbf16, #tpu.memory_space<vmem>>, vector<256x512xbf16>
    %cst_45 = arith.constant dense<0.000000e+00> : vector<8x512xf32>
    %134 = tpu.matmul %132, %133, %cst_45 {dimension_numbers = #tpu.dot_dimension_numbers<[1], [0], [0], [1], [0, 0, 1, 1], [], []>} : vector<8x256xbf16>, vector<256x512xbf16>, vector<8x512xf32> -> vector<8x512xf32>
    %c0_46 = arith.constant 0 : index
    %c0_47 = arith.constant 0 : index
    %135 = vector.load %arg5[%c0_46, %c0_47] : memref<1x512xf32, #tpu.memory_space<vmem>>, vector<1x512xf32>
    %136 = vector.broadcast %135 : vector<1x512xf32> to vector<8x512xf32>
    %137 = arith.addf %134, %136 : vector<8x512xf32>
    %c8_i32_48 = arith.constant 8 : i32
    %138 = arith.muli %c3_i32, %c8_i32_48 : i32
    %139 = tpu.assume_multiple %138, 8 : i32
    %140 = arith.index_cast %139 : i32 to index
    %c0_49 = arith.constant 0 : index
    %141 = vector.load %arg9[%140, %c0_49] : memref<64x512xf32, #tpu.memory_space<vmem>>, vector<8x512xf32>
    %142 = arith.truncf %112 : vector<8x128xf32> to vector<8x128xbf16>
    %c0_50 = arith.constant 0 : index
    %c0_51 = arith.constant 0 : index
    %143 = vector.load %arg3[%c0_50, %c0_51] : memref<128x512xbf16, #tpu.memory_space<vmem>>, vector<128x512xbf16>
    %cst_52 = arith.constant dense<0.000000e+00> : vector<8x512xf32>
    %144 = tpu.matmul %142, %143, %cst_52 {dimension_numbers = #tpu.dot_dimension_numbers<[1], [0], [0], [1], [0, 0, 1, 1], [], []>} : vector<8x128xbf16>, vector<128x512xbf16>, vector<8x512xf32> -> vector<8x512xf32>
    %145 = arith.addf %141, %144 : vector<8x512xf32>
    %146 = vector.extract_strided_slice %145 {offsets = [0, 0], sizes = [8, 384], strides = [1, 1]} : vector<8x512xf32> to vector<8x384xf32>
    %cst_53 = arith.constant 5.000000e-01 : f32
    %147 = vector.broadcast %cst_53 : f32 to vector<8x384xf32>
    %148 = arith.mulf %147, %146 : vector<8x384xf32>
    %149 = math.tanh %148 : vector<8x384xf32>
    %cst_54 = arith.constant 5.000000e-01 : f32
    %150 = vector.broadcast %cst_54 : f32 to vector<8x384xf32>
    %151 = arith.mulf %150, %149 : vector<8x384xf32>
    %cst_55 = arith.constant 5.000000e-01 : f32
    %152 = vector.broadcast %cst_55 : f32 to vector<8x384xf32>
    %153 = arith.addf %151, %152 : vector<8x384xf32>
    %154 = vector.extract_strided_slice %153 {offsets = [0, 0], sizes = [8, 128], strides = [1, 1]} : vector<8x384xf32> to vector<8x128xf32>
    %155 = vector.extract_strided_slice %153 {offsets = [0, 128], sizes = [8, 128], strides = [1, 1]} : vector<8x384xf32> to vector<8x128xf32>
    %156 = vector.extract_strided_slice %153 {offsets = [0, 256], sizes = [8, 128], strides = [1, 1]} : vector<8x384xf32> to vector<8x128xf32>
    %157 = vector.extract_strided_slice %145 {offsets = [0, 384], sizes = [8, 128], strides = [1, 1]} : vector<8x512xf32> to vector<8x128xf32>
    %158 = math.tanh %157 : vector<8x128xf32>
    %159 = arith.mulf %155, %110 : vector<8x128xf32>
    %160 = arith.mulf %154, %158 : vector<8x128xf32>
    %161 = arith.addf %159, %160 : vector<8x128xf32>
    %162 = math.tanh %161 : vector<8x128xf32>
    %163 = arith.mulf %156, %162 : vector<8x128xf32>
    %164 = vector.extract_strided_slice %137 {offsets = [0, 0], sizes = [8, 384], strides = [1, 1]} : vector<8x512xf32> to vector<8x384xf32>
    %cst_56 = arith.constant 5.000000e-01 : f32
    %165 = vector.broadcast %cst_56 : f32 to vector<8x384xf32>
    %166 = arith.mulf %165, %164 : vector<8x384xf32>
    %167 = math.tanh %166 : vector<8x384xf32>
    %cst_57 = arith.constant 5.000000e-01 : f32
    %168 = vector.broadcast %cst_57 : f32 to vector<8x384xf32>
    %169 = arith.mulf %168, %167 : vector<8x384xf32>
    %cst_58 = arith.constant 5.000000e-01 : f32
    %170 = vector.broadcast %cst_58 : f32 to vector<8x384xf32>
    %171 = arith.addf %169, %170 : vector<8x384xf32>
    %172 = vector.extract_strided_slice %171 {offsets = [0, 0], sizes = [8, 128], strides = [1, 1]} : vector<8x384xf32> to vector<8x128xf32>
    %173 = vector.extract_strided_slice %171 {offsets = [0, 128], sizes = [8, 128], strides = [1, 1]} : vector<8x384xf32> to vector<8x128xf32>
    %174 = vector.extract_strided_slice %171 {offsets = [0, 256], sizes = [8, 128], strides = [1, 1]} : vector<8x384xf32> to vector<8x128xf32>
    %175 = vector.extract_strided_slice %137 {offsets = [0, 384], sizes = [8, 128], strides = [1, 1]} : vector<8x512xf32> to vector<8x128xf32>
    %176 = math.tanh %175 : vector<8x128xf32>
    %177 = arith.mulf %173, %128 : vector<8x128xf32>
    %178 = arith.mulf %172, %176 : vector<8x128xf32>
    %179 = arith.addf %177, %178 : vector<8x128xf32>
    %180 = math.tanh %179 : vector<8x128xf32>
    %181 = arith.mulf %174, %180 : vector<8x128xf32>
    %c4_i32 = arith.constant 4 : i32
    %182 = tpu.concatenate %163, %181 in 1 : vector<8x128xf32>, vector<8x128xf32> -> vector<8x256xf32>
    %183 = arith.truncf %182 : vector<8x256xf32> to vector<8x256xbf16>
    %c0_59 = arith.constant 0 : index
    %c0_60 = arith.constant 0 : index
    %184 = vector.load %arg4[%c0_59, %c0_60] : memref<256x512xbf16, #tpu.memory_space<vmem>>, vector<256x512xbf16>
    %cst_61 = arith.constant dense<0.000000e+00> : vector<8x512xf32>
    %185 = tpu.matmul %183, %184, %cst_61 {dimension_numbers = #tpu.dot_dimension_numbers<[1], [0], [0], [1], [0, 0, 1, 1], [], []>} : vector<8x256xbf16>, vector<256x512xbf16>, vector<8x512xf32> -> vector<8x512xf32>
    %c0_62 = arith.constant 0 : index
    %c0_63 = arith.constant 0 : index
    %186 = vector.load %arg5[%c0_62, %c0_63] : memref<1x512xf32, #tpu.memory_space<vmem>>, vector<1x512xf32>
    %187 = vector.broadcast %186 : vector<1x512xf32> to vector<8x512xf32>
    %188 = arith.addf %185, %187 : vector<8x512xf32>
    %c8_i32_64 = arith.constant 8 : i32
    %189 = arith.muli %c4_i32, %c8_i32_64 : i32
    %190 = tpu.assume_multiple %189, 8 : i32
    %191 = arith.index_cast %190 : i32 to index
    %c0_65 = arith.constant 0 : index
    %192 = vector.load %arg9[%191, %c0_65] : memref<64x512xf32, #tpu.memory_space<vmem>>, vector<8x512xf32>
    %193 = arith.truncf %163 : vector<8x128xf32> to vector<8x128xbf16>
    %c0_66 = arith.constant 0 : index
    %c0_67 = arith.constant 0 : index
    %194 = vector.load %arg3[%c0_66, %c0_67] : memref<128x512xbf16, #tpu.memory_space<vmem>>, vector<128x512xbf16>
    %cst_68 = arith.constant dense<0.000000e+00> : vector<8x512xf32>
    %195 = tpu.matmul %193, %194, %cst_68 {dimension_numbers = #tpu.dot_dimension_numbers<[1], [0], [0], [1], [0, 0, 1, 1], [], []>} : vector<8x128xbf16>, vector<128x512xbf16>, vector<8x512xf32> -> vector<8x512xf32>
    %196 = arith.addf %192, %195 : vector<8x512xf32>
    %197 = vector.extract_strided_slice %196 {offsets = [0, 0], sizes = [8, 384], strides = [1, 1]} : vector<8x512xf32> to vector<8x384xf32>
    %cst_69 = arith.constant 5.000000e-01 : f32
    %198 = vector.broadcast %cst_69 : f32 to vector<8x384xf32>
    %199 = arith.mulf %198, %197 : vector<8x384xf32>
    %200 = math.tanh %199 : vector<8x384xf32>
    %cst_70 = arith.constant 5.000000e-01 : f32
    %201 = vector.broadcast %cst_70 : f32 to vector<8x384xf32>
    %202 = arith.mulf %201, %200 : vector<8x384xf32>
    %cst_71 = arith.constant 5.000000e-01 : f32
    %203 = vector.broadcast %cst_71 : f32 to vector<8x384xf32>
    %204 = arith.addf %202, %203 : vector<8x384xf32>
    %205 = vector.extract_strided_slice %204 {offsets = [0, 0], sizes = [8, 128], strides = [1, 1]} : vector<8x384xf32> to vector<8x128xf32>
    %206 = vector.extract_strided_slice %204 {offsets = [0, 128], sizes = [8, 128], strides = [1, 1]} : vector<8x384xf32> to vector<8x128xf32>
    %207 = vector.extract_strided_slice %204 {offsets = [0, 256], sizes = [8, 128], strides = [1, 1]} : vector<8x384xf32> to vector<8x128xf32>
    %208 = vector.extract_strided_slice %196 {offsets = [0, 384], sizes = [8, 128], strides = [1, 1]} : vector<8x512xf32> to vector<8x128xf32>
    %209 = math.tanh %208 : vector<8x128xf32>
    %210 = arith.mulf %206, %161 : vector<8x128xf32>
    %211 = arith.mulf %205, %209 : vector<8x128xf32>
    %212 = arith.addf %210, %211 : vector<8x128xf32>
    %213 = math.tanh %212 : vector<8x128xf32>
    %214 = arith.mulf %207, %213 : vector<8x128xf32>
    %215 = vector.extract_strided_slice %188 {offsets = [0, 0], sizes = [8, 384], strides = [1, 1]} : vector<8x512xf32> to vector<8x384xf32>
    %cst_72 = arith.constant 5.000000e-01 : f32
    %216 = vector.broadcast %cst_72 : f32 to vector<8x384xf32>
    %217 = arith.mulf %216, %215 : vector<8x384xf32>
    %218 = math.tanh %217 : vector<8x384xf32>
    %cst_73 = arith.constant 5.000000e-01 : f32
    %219 = vector.broadcast %cst_73 : f32 to vector<8x384xf32>
    %220 = arith.mulf %219, %218 : vector<8x384xf32>
    %cst_74 = arith.constant 5.000000e-01 : f32
    %221 = vector.broadcast %cst_74 : f32 to vector<8x384xf32>
    %222 = arith.addf %220, %221 : vector<8x384xf32>
    %223 = vector.extract_strided_slice %222 {offsets = [0, 0], sizes = [8, 128], strides = [1, 1]} : vector<8x384xf32> to vector<8x128xf32>
    %224 = vector.extract_strided_slice %222 {offsets = [0, 128], sizes = [8, 128], strides = [1, 1]} : vector<8x384xf32> to vector<8x128xf32>
    %225 = vector.extract_strided_slice %222 {offsets = [0, 256], sizes = [8, 128], strides = [1, 1]} : vector<8x384xf32> to vector<8x128xf32>
    %226 = vector.extract_strided_slice %188 {offsets = [0, 384], sizes = [8, 128], strides = [1, 1]} : vector<8x512xf32> to vector<8x128xf32>
    %227 = math.tanh %226 : vector<8x128xf32>
    %228 = arith.mulf %224, %179 : vector<8x128xf32>
    %229 = arith.mulf %223, %227 : vector<8x128xf32>
    %230 = arith.addf %228, %229 : vector<8x128xf32>
    %231 = math.tanh %230 : vector<8x128xf32>
    %232 = arith.mulf %225, %231 : vector<8x128xf32>
    %c5_i32 = arith.constant 5 : i32
    %233 = tpu.concatenate %214, %232 in 1 : vector<8x128xf32>, vector<8x128xf32> -> vector<8x256xf32>
    %234 = arith.truncf %233 : vector<8x256xf32> to vector<8x256xbf16>
    %c0_75 = arith.constant 0 : index
    %c0_76 = arith.constant 0 : index
    %235 = vector.load %arg4[%c0_75, %c0_76] : memref<256x512xbf16, #tpu.memory_space<vmem>>, vector<256x512xbf16>
    %cst_77 = arith.constant dense<0.000000e+00> : vector<8x512xf32>
    %236 = tpu.matmul %234, %235, %cst_77 {dimension_numbers = #tpu.dot_dimension_numbers<[1], [0], [0], [1], [0, 0, 1, 1], [], []>} : vector<8x256xbf16>, vector<256x512xbf16>, vector<8x512xf32> -> vector<8x512xf32>
    %c0_78 = arith.constant 0 : index
    %c0_79 = arith.constant 0 : index
    %237 = vector.load %arg5[%c0_78, %c0_79] : memref<1x512xf32, #tpu.memory_space<vmem>>, vector<1x512xf32>
    %238 = vector.broadcast %237 : vector<1x512xf32> to vector<8x512xf32>
    %239 = arith.addf %236, %238 : vector<8x512xf32>
    %c8_i32_80 = arith.constant 8 : i32
    %240 = arith.muli %c5_i32, %c8_i32_80 : i32
    %241 = tpu.assume_multiple %240, 8 : i32
    %242 = arith.index_cast %241 : i32 to index
    %c0_81 = arith.constant 0 : index
    %243 = vector.load %arg9[%242, %c0_81] : memref<64x512xf32, #tpu.memory_space<vmem>>, vector<8x512xf32>
    %244 = arith.truncf %214 : vector<8x128xf32> to vector<8x128xbf16>
    %c0_82 = arith.constant 0 : index
    %c0_83 = arith.constant 0 : index
    %245 = vector.load %arg3[%c0_82, %c0_83] : memref<128x512xbf16, #tpu.memory_space<vmem>>, vector<128x512xbf16>
    %cst_84 = arith.constant dense<0.000000e+00> : vector<8x512xf32>
    %246 = tpu.matmul %244, %245, %cst_84 {dimension_numbers = #tpu.dot_dimension_numbers<[1], [0], [0], [1], [0, 0, 1, 1], [], []>} : vector<8x128xbf16>, vector<128x512xbf16>, vector<8x512xf32> -> vector<8x512xf32>
    %247 = arith.addf %243, %246 : vector<8x512xf32>
    %248 = vector.extract_strided_slice %247 {offsets = [0, 0], sizes = [8, 384], strides = [1, 1]} : vector<8x512xf32> to vector<8x384xf32>
    %cst_85 = arith.constant 5.000000e-01 : f32
    %249 = vector.broadcast %cst_85 : f32 to vector<8x384xf32>
    %250 = arith.mulf %249, %248 : vector<8x384xf32>
    %251 = math.tanh %250 : vector<8x384xf32>
    %cst_86 = arith.constant 5.000000e-01 : f32
    %252 = vector.broadcast %cst_86 : f32 to vector<8x384xf32>
    %253 = arith.mulf %252, %251 : vector<8x384xf32>
    %cst_87 = arith.constant 5.000000e-01 : f32
    %254 = vector.broadcast %cst_87 : f32 to vector<8x384xf32>
    %255 = arith.addf %253, %254 : vector<8x384xf32>
    %256 = vector.extract_strided_slice %255 {offsets = [0, 0], sizes = [8, 128], strides = [1, 1]} : vector<8x384xf32> to vector<8x128xf32>
    %257 = vector.extract_strided_slice %255 {offsets = [0, 128], sizes = [8, 128], strides = [1, 1]} : vector<8x384xf32> to vector<8x128xf32>
    %258 = vector.extract_strided_slice %255 {offsets = [0, 256], sizes = [8, 128], strides = [1, 1]} : vector<8x384xf32> to vector<8x128xf32>
    %259 = vector.extract_strided_slice %247 {offsets = [0, 384], sizes = [8, 128], strides = [1, 1]} : vector<8x512xf32> to vector<8x128xf32>
    %260 = math.tanh %259 : vector<8x128xf32>
    %261 = arith.mulf %257, %212 : vector<8x128xf32>
    %262 = arith.mulf %256, %260 : vector<8x128xf32>
    %263 = arith.addf %261, %262 : vector<8x128xf32>
    %264 = math.tanh %263 : vector<8x128xf32>
    %265 = arith.mulf %258, %264 : vector<8x128xf32>
    %266 = vector.extract_strided_slice %239 {offsets = [0, 0], sizes = [8, 384], strides = [1, 1]} : vector<8x512xf32> to vector<8x384xf32>
    %cst_88 = arith.constant 5.000000e-01 : f32
    %267 = vector.broadcast %cst_88 : f32 to vector<8x384xf32>
    %268 = arith.mulf %267, %266 : vector<8x384xf32>
    %269 = math.tanh %268 : vector<8x384xf32>
    %cst_89 = arith.constant 5.000000e-01 : f32
    %270 = vector.broadcast %cst_89 : f32 to vector<8x384xf32>
    %271 = arith.mulf %270, %269 : vector<8x384xf32>
    %cst_90 = arith.constant 5.000000e-01 : f32
    %272 = vector.broadcast %cst_90 : f32 to vector<8x384xf32>
    %273 = arith.addf %271, %272 : vector<8x384xf32>
    %274 = vector.extract_strided_slice %273 {offsets = [0, 0], sizes = [8, 128], strides = [1, 1]} : vector<8x384xf32> to vector<8x128xf32>
    %275 = vector.extract_strided_slice %273 {offsets = [0, 128], sizes = [8, 128], strides = [1, 1]} : vector<8x384xf32> to vector<8x128xf32>
    %276 = vector.extract_strided_slice %273 {offsets = [0, 256], sizes = [8, 128], strides = [1, 1]} : vector<8x384xf32> to vector<8x128xf32>
    %277 = vector.extract_strided_slice %239 {offsets = [0, 384], sizes = [8, 128], strides = [1, 1]} : vector<8x512xf32> to vector<8x128xf32>
    %278 = math.tanh %277 : vector<8x128xf32>
    %279 = arith.mulf %275, %230 : vector<8x128xf32>
    %280 = arith.mulf %274, %278 : vector<8x128xf32>
    %281 = arith.addf %279, %280 : vector<8x128xf32>
    %282 = math.tanh %281 : vector<8x128xf32>
    %283 = arith.mulf %276, %282 : vector<8x128xf32>
    %c6_i32 = arith.constant 6 : i32
    %284 = tpu.concatenate %265, %283 in 1 : vector<8x128xf32>, vector<8x128xf32> -> vector<8x256xf32>
    %285 = arith.truncf %284 : vector<8x256xf32> to vector<8x256xbf16>
    %c0_91 = arith.constant 0 : index
    %c0_92 = arith.constant 0 : index
    %286 = vector.load %arg4[%c0_91, %c0_92] : memref<256x512xbf16, #tpu.memory_space<vmem>>, vector<256x512xbf16>
    %cst_93 = arith.constant dense<0.000000e+00> : vector<8x512xf32>
    %287 = tpu.matmul %285, %286, %cst_93 {dimension_numbers = #tpu.dot_dimension_numbers<[1], [0], [0], [1], [0, 0, 1, 1], [], []>} : vector<8x256xbf16>, vector<256x512xbf16>, vector<8x512xf32> -> vector<8x512xf32>
    %c0_94 = arith.constant 0 : index
    %c0_95 = arith.constant 0 : index
    %288 = vector.load %arg5[%c0_94, %c0_95] : memref<1x512xf32, #tpu.memory_space<vmem>>, vector<1x512xf32>
    %289 = vector.broadcast %288 : vector<1x512xf32> to vector<8x512xf32>
    %290 = arith.addf %287, %289 : vector<8x512xf32>
    %c8_i32_96 = arith.constant 8 : i32
    %291 = arith.muli %c6_i32, %c8_i32_96 : i32
    %292 = tpu.assume_multiple %291, 8 : i32
    %293 = arith.index_cast %292 : i32 to index
    %c0_97 = arith.constant 0 : index
    %294 = vector.load %arg9[%293, %c0_97] : memref<64x512xf32, #tpu.memory_space<vmem>>, vector<8x512xf32>
    %295 = arith.truncf %265 : vector<8x128xf32> to vector<8x128xbf16>
    %c0_98 = arith.constant 0 : index
    %c0_99 = arith.constant 0 : index
    %296 = vector.load %arg3[%c0_98, %c0_99] : memref<128x512xbf16, #tpu.memory_space<vmem>>, vector<128x512xbf16>
    %cst_100 = arith.constant dense<0.000000e+00> : vector<8x512xf32>
    %297 = tpu.matmul %295, %296, %cst_100 {dimension_numbers = #tpu.dot_dimension_numbers<[1], [0], [0], [1], [0, 0, 1, 1], [], []>} : vector<8x128xbf16>, vector<128x512xbf16>, vector<8x512xf32> -> vector<8x512xf32>
    %298 = arith.addf %294, %297 : vector<8x512xf32>
    %299 = vector.extract_strided_slice %298 {offsets = [0, 0], sizes = [8, 384], strides = [1, 1]} : vector<8x512xf32> to vector<8x384xf32>
    %cst_101 = arith.constant 5.000000e-01 : f32
    %300 = vector.broadcast %cst_101 : f32 to vector<8x384xf32>
    %301 = arith.mulf %300, %299 : vector<8x384xf32>
    %302 = math.tanh %301 : vector<8x384xf32>
    %cst_102 = arith.constant 5.000000e-01 : f32
    %303 = vector.broadcast %cst_102 : f32 to vector<8x384xf32>
    %304 = arith.mulf %303, %302 : vector<8x384xf32>
    %cst_103 = arith.constant 5.000000e-01 : f32
    %305 = vector.broadcast %cst_103 : f32 to vector<8x384xf32>
    %306 = arith.addf %304, %305 : vector<8x384xf32>
    %307 = vector.extract_strided_slice %306 {offsets = [0, 0], sizes = [8, 128], strides = [1, 1]} : vector<8x384xf32> to vector<8x128xf32>
    %308 = vector.extract_strided_slice %306 {offsets = [0, 128], sizes = [8, 128], strides = [1, 1]} : vector<8x384xf32> to vector<8x128xf32>
    %309 = vector.extract_strided_slice %306 {offsets = [0, 256], sizes = [8, 128], strides = [1, 1]} : vector<8x384xf32> to vector<8x128xf32>
    %310 = vector.extract_strided_slice %298 {offsets = [0, 384], sizes = [8, 128], strides = [1, 1]} : vector<8x512xf32> to vector<8x128xf32>
    %311 = math.tanh %310 : vector<8x128xf32>
    %312 = arith.mulf %308, %263 : vector<8x128xf32>
    %313 = arith.mulf %307, %311 : vector<8x128xf32>
    %314 = arith.addf %312, %313 : vector<8x128xf32>
    %315 = math.tanh %314 : vector<8x128xf32>
    %316 = arith.mulf %309, %315 : vector<8x128xf32>
    %317 = vector.extract_strided_slice %290 {offsets = [0, 0], sizes = [8, 384], strides = [1, 1]} : vector<8x512xf32> to vector<8x384xf32>
    %cst_104 = arith.constant 5.000000e-01 : f32
    %318 = vector.broadcast %cst_104 : f32 to vector<8x384xf32>
    %319 = arith.mulf %318, %317 : vector<8x384xf32>
    %320 = math.tanh %319 : vector<8x384xf32>
    %cst_105 = arith.constant 5.000000e-01 : f32
    %321 = vector.broadcast %cst_105 : f32 to vector<8x384xf32>
    %322 = arith.mulf %321, %320 : vector<8x384xf32>
    %cst_106 = arith.constant 5.000000e-01 : f32
    %323 = vector.broadcast %cst_106 : f32 to vector<8x384xf32>
    %324 = arith.addf %322, %323 : vector<8x384xf32>
    %325 = vector.extract_strided_slice %324 {offsets = [0, 0], sizes = [8, 128], strides = [1, 1]} : vector<8x384xf32> to vector<8x128xf32>
    %326 = vector.extract_strided_slice %324 {offsets = [0, 128], sizes = [8, 128], strides = [1, 1]} : vector<8x384xf32> to vector<8x128xf32>
    %327 = vector.extract_strided_slice %324 {offsets = [0, 256], sizes = [8, 128], strides = [1, 1]} : vector<8x384xf32> to vector<8x128xf32>
    %328 = vector.extract_strided_slice %290 {offsets = [0, 384], sizes = [8, 128], strides = [1, 1]} : vector<8x512xf32> to vector<8x128xf32>
    %329 = math.tanh %328 : vector<8x128xf32>
    %330 = arith.mulf %326, %281 : vector<8x128xf32>
    %331 = arith.mulf %325, %329 : vector<8x128xf32>
    %332 = arith.addf %330, %331 : vector<8x128xf32>
    %333 = math.tanh %332 : vector<8x128xf32>
    %334 = arith.mulf %327, %333 : vector<8x128xf32>
    %c7_i32 = arith.constant 7 : i32
    %335 = tpu.concatenate %316, %334 in 1 : vector<8x128xf32>, vector<8x128xf32> -> vector<8x256xf32>
    %336 = arith.truncf %335 : vector<8x256xf32> to vector<8x256xbf16>
    %c0_107 = arith.constant 0 : index
    %c0_108 = arith.constant 0 : index
    %337 = vector.load %arg4[%c0_107, %c0_108] : memref<256x512xbf16, #tpu.memory_space<vmem>>, vector<256x512xbf16>
    %cst_109 = arith.constant dense<0.000000e+00> : vector<8x512xf32>
    %338 = tpu.matmul %336, %337, %cst_109 {dimension_numbers = #tpu.dot_dimension_numbers<[1], [0], [0], [1], [0, 0, 1, 1], [], []>} : vector<8x256xbf16>, vector<256x512xbf16>, vector<8x512xf32> -> vector<8x512xf32>
    %c0_110 = arith.constant 0 : index
    %c0_111 = arith.constant 0 : index
    %339 = vector.load %arg5[%c0_110, %c0_111] : memref<1x512xf32, #tpu.memory_space<vmem>>, vector<1x512xf32>
    %340 = vector.broadcast %339 : vector<1x512xf32> to vector<8x512xf32>
    %341 = arith.addf %338, %340 : vector<8x512xf32>
    %c8_i32_112 = arith.constant 8 : i32
    %342 = arith.muli %c7_i32, %c8_i32_112 : i32
    %343 = tpu.assume_multiple %342, 8 : i32
    %344 = arith.index_cast %343 : i32 to index
    %c0_113 = arith.constant 0 : index
    %345 = vector.load %arg9[%344, %c0_113] : memref<64x512xf32, #tpu.memory_space<vmem>>, vector<8x512xf32>
    %346 = arith.truncf %316 : vector<8x128xf32> to vector<8x128xbf16>
    %c0_114 = arith.constant 0 : index
    %c0_115 = arith.constant 0 : index
    %347 = vector.load %arg3[%c0_114, %c0_115] : memref<128x512xbf16, #tpu.memory_space<vmem>>, vector<128x512xbf16>
    %cst_116 = arith.constant dense<0.000000e+00> : vector<8x512xf32>
    %348 = tpu.matmul %346, %347, %cst_116 {dimension_numbers = #tpu.dot_dimension_numbers<[1], [0], [0], [1], [0, 0, 1, 1], [], []>} : vector<8x128xbf16>, vector<128x512xbf16>, vector<8x512xf32> -> vector<8x512xf32>
    %349 = arith.addf %345, %348 : vector<8x512xf32>
    %350 = vector.extract_strided_slice %349 {offsets = [0, 0], sizes = [8, 384], strides = [1, 1]} : vector<8x512xf32> to vector<8x384xf32>
    %cst_117 = arith.constant 5.000000e-01 : f32
    %351 = vector.broadcast %cst_117 : f32 to vector<8x384xf32>
    %352 = arith.mulf %351, %350 : vector<8x384xf32>
    %353 = math.tanh %352 : vector<8x384xf32>
    %cst_118 = arith.constant 5.000000e-01 : f32
    %354 = vector.broadcast %cst_118 : f32 to vector<8x384xf32>
    %355 = arith.mulf %354, %353 : vector<8x384xf32>
    %cst_119 = arith.constant 5.000000e-01 : f32
    %356 = vector.broadcast %cst_119 : f32 to vector<8x384xf32>
    %357 = arith.addf %355, %356 : vector<8x384xf32>
    %358 = vector.extract_strided_slice %357 {offsets = [0, 0], sizes = [8, 128], strides = [1, 1]} : vector<8x384xf32> to vector<8x128xf32>
    %359 = vector.extract_strided_slice %357 {offsets = [0, 128], sizes = [8, 128], strides = [1, 1]} : vector<8x384xf32> to vector<8x128xf32>
    %360 = vector.extract_strided_slice %357 {offsets = [0, 256], sizes = [8, 128], strides = [1, 1]} : vector<8x384xf32> to vector<8x128xf32>
    %361 = vector.extract_strided_slice %349 {offsets = [0, 384], sizes = [8, 128], strides = [1, 1]} : vector<8x512xf32> to vector<8x128xf32>
    %362 = math.tanh %361 : vector<8x128xf32>
    %363 = arith.mulf %359, %314 : vector<8x128xf32>
    %364 = arith.mulf %358, %362 : vector<8x128xf32>
    %365 = arith.addf %363, %364 : vector<8x128xf32>
    %366 = math.tanh %365 : vector<8x128xf32>
    %367 = arith.mulf %360, %366 : vector<8x128xf32>
    %368 = vector.extract_strided_slice %341 {offsets = [0, 0], sizes = [8, 384], strides = [1, 1]} : vector<8x512xf32> to vector<8x384xf32>
    %cst_120 = arith.constant 5.000000e-01 : f32
    %369 = vector.broadcast %cst_120 : f32 to vector<8x384xf32>
    %370 = arith.mulf %369, %368 : vector<8x384xf32>
    %371 = math.tanh %370 : vector<8x384xf32>
    %cst_121 = arith.constant 5.000000e-01 : f32
    %372 = vector.broadcast %cst_121 : f32 to vector<8x384xf32>
    %373 = arith.mulf %372, %371 : vector<8x384xf32>
    %cst_122 = arith.constant 5.000000e-01 : f32
    %374 = vector.broadcast %cst_122 : f32 to vector<8x384xf32>
    %375 = arith.addf %373, %374 : vector<8x384xf32>
    %376 = vector.extract_strided_slice %375 {offsets = [0, 0], sizes = [8, 128], strides = [1, 1]} : vector<8x384xf32> to vector<8x128xf32>
    %377 = vector.extract_strided_slice %375 {offsets = [0, 128], sizes = [8, 128], strides = [1, 1]} : vector<8x384xf32> to vector<8x128xf32>
    %378 = vector.extract_strided_slice %375 {offsets = [0, 256], sizes = [8, 128], strides = [1, 1]} : vector<8x384xf32> to vector<8x128xf32>
    %379 = vector.extract_strided_slice %341 {offsets = [0, 384], sizes = [8, 128], strides = [1, 1]} : vector<8x512xf32> to vector<8x128xf32>
    %380 = math.tanh %379 : vector<8x128xf32>
    %381 = arith.mulf %377, %332 : vector<8x128xf32>
    %382 = arith.mulf %376, %380 : vector<8x128xf32>
    %383 = arith.addf %381, %382 : vector<8x128xf32>
    %384 = math.tanh %383 : vector<8x128xf32>
    %385 = arith.mulf %378, %384 : vector<8x128xf32>
    %c7_i32_123 = arith.constant 7 : i32
    %386 = tpu.concatenate %367, %385 in 1 : vector<8x128xf32>, vector<8x128xf32> -> vector<8x256xf32>
    %387 = arith.truncf %386 : vector<8x256xf32> to vector<8x256xbf16>
    %c0_124 = arith.constant 0 : index
    %c0_125 = arith.constant 0 : index
    %388 = vector.load %arg4[%c0_124, %c0_125] : memref<256x512xbf16, #tpu.memory_space<vmem>>, vector<256x512xbf16>
    %cst_126 = arith.constant dense<0.000000e+00> : vector<8x512xf32>
    %389 = tpu.matmul %387, %388, %cst_126 {dimension_numbers = #tpu.dot_dimension_numbers<[1], [0], [0], [1], [0, 0, 1, 1], [], []>} : vector<8x256xbf16>, vector<256x512xbf16>, vector<8x512xf32> -> vector<8x512xf32>
    %c0_127 = arith.constant 0 : index
    %c0_128 = arith.constant 0 : index
    %390 = vector.load %arg5[%c0_127, %c0_128] : memref<1x512xf32, #tpu.memory_space<vmem>>, vector<1x512xf32>
    %391 = vector.broadcast %390 : vector<1x512xf32> to vector<8x512xf32>
    %392 = arith.addf %389, %391 : vector<8x512xf32>
    %393 = vector.extract_strided_slice %392 {offsets = [0, 0], sizes = [8, 384], strides = [1, 1]} : vector<8x512xf32> to vector<8x384xf32>
    %cst_129 = arith.constant 5.000000e-01 : f32
    %394 = vector.broadcast %cst_129 : f32 to vector<8x384xf32>
    %395 = arith.mulf %394, %393 : vector<8x384xf32>
    %396 = math.tanh %395 : vector<8x384xf32>
    %cst_130 = arith.constant 5.000000e-01 : f32
    %397 = vector.broadcast %cst_130 : f32 to vector<8x384xf32>
    %398 = arith.mulf %397, %396 : vector<8x384xf32>
    %cst_131 = arith.constant 5.000000e-01 : f32
    %399 = vector.broadcast %cst_131 : f32 to vector<8x384xf32>
    %400 = arith.addf %398, %399 : vector<8x384xf32>
    %401 = vector.extract_strided_slice %400 {offsets = [0, 0], sizes = [8, 128], strides = [1, 1]} : vector<8x384xf32> to vector<8x128xf32>
    %402 = vector.extract_strided_slice %400 {offsets = [0, 128], sizes = [8, 128], strides = [1, 1]} : vector<8x384xf32> to vector<8x128xf32>
    %403 = vector.extract_strided_slice %400 {offsets = [0, 256], sizes = [8, 128], strides = [1, 1]} : vector<8x384xf32> to vector<8x128xf32>
    %404 = vector.extract_strided_slice %392 {offsets = [0, 384], sizes = [8, 128], strides = [1, 1]} : vector<8x512xf32> to vector<8x128xf32>
    %405 = math.tanh %404 : vector<8x128xf32>
    %406 = arith.mulf %402, %383 : vector<8x128xf32>
    %407 = arith.mulf %401, %405 : vector<8x128xf32>
    %408 = arith.addf %406, %407 : vector<8x128xf32>
    %409 = math.tanh %408 : vector<8x128xf32>
    %410 = arith.mulf %403, %409 : vector<8x128xf32>
    %c0_132 = arith.constant 0 : index
    %c0_133 = arith.constant 0 : index
    %411 = vector.load %arg6[%c0_132, %c0_133] : memref<128x1xf32, #tpu.memory_space<vmem>>, vector<128x1xf32>
    %cst_134 = arith.constant dense<0.000000e+00> : vector<8x1xf32>
    %412 = tpu.matmul %410, %411, %cst_134 {dimension_numbers = #tpu.dot_dimension_numbers<[1], [0], [0], [1], [0, 0, 1, 1], [], []>} : vector<8x128xf32>, vector<128x1xf32>, vector<8x1xf32> -> vector<8x1xf32>
    %c0_135 = arith.constant 0 : index
    %c0_136 = arith.constant 0 : index
    %413 = vector.load %arg7[%c0_135, %c0_136] : memref<1x1xf32, #tpu.memory_space<vmem>>, vector<1x1xf32>
    %414 = vector.broadcast %413 : vector<1x1xf32> to vector<8x1xf32>
    %415 = arith.addf %412, %414 : vector<8x1xf32>
    %c0_137 = arith.constant 0 : index
    %c0_138 = arith.constant 0 : index
    %416 = vector.load %arg8[%c0_137, %c0_138] : memref<8x1xf32, #tpu.memory_space<vmem>>, vector<8x1xf32>
    tpu.vector_store %arg8[%c0_137, %c0_138], %415 {strides = array<i32>} : memref<8x1xf32, #tpu.memory_space<vmem>>, vector<8x1xf32>,
    return
  }
}

</mosaic_0001>

<llo_original>
// kernel: lstm_model_forward.1
$region0: #{lstm_model_forward.1}
  #allocation0 [shape = 'u32[]', space=smem, size = 0x4, offset = 0x4, fixed_abs, tag = 'smem constant byte address 0x4 - core index']
  #allocation1 [shape = 'u32[72,128]{1,0:T(1,128)}', space=vmem, size = 0x9000, scoped, tag = 'internal scratch']
  #allocation2 [shape = 'f32[64,512]{1,0:T(8,128)}', space=vmem, size = 0x20000, scoped, tag = 'scratch operand']
  #allocation3 [shape = 'f32[1,1]{1,0:T(1,128)S(1)}', space=vmem, size = 0x200, scoped, tag = 'scoped memory for lstm_model_forward.1']
  %s0 = inlined_call_operand.vmem [shape: f32[64,1], index: 0, kind: input, shape index: {}]
  %s1 = inlined_call_operand.vmem [shape: f32[1,512], index: 1, kind: input, shape index: {}]
  %s2 = inlined_call_operand.vmem [shape: f32[1,512], index: 2, kind: input, shape index: {}]
  %s3 = inlined_call_operand.vmem [shape: bf16[128,512], index: 3, kind: input, shape index: {}]
  %s4 = inlined_call_operand.vmem [shape: bf16[256,512], index: 4, kind: input, shape index: {}]
  %s5 = inlined_call_operand.vmem [shape: f32[1,512], index: 5, kind: input, shape index: {}]
  %s6 = inlined_call_operand.vmem [shape: f32[128,1], index: 6, kind: input, shape index: {}]
  %s7 = inlined_call_operand.<no memory space> [shape: f32[1,1], index: 7, kind: input, shape index: {}]
  %s8 = inlined_call_operand.vmem [shape: f32[8,1], index: 8, kind: output, shape index: {}]
  %s9 = sld [smem:[#allocation0]]
  $region42: #{lstm_model_forward.1} parent=0
    _
  %s11 = ssub.s32 1, %s9
  %s12 = scalar_select 0, %s11, %s9
  %v13 = vstv %s7
  %14 = vst [vmem:[#allocation3] sm:$0x1] %v13
  // Predicated region
  $region2: #{lstm_model_forward.1} parent=0 // pred_check
    _
  $region3: #{lstm_model_forward.1} parent=0 // pred_check_branch
    %16 = sbr.rel (0) target = $region5
  $region4: #{lstm_model_forward.1} parent=0 // pred_region
    _
  $region5: #{lstm_model_forward.1} parent=0 // pred_fallthru
    _
  // Predicated region
  $region6: #{lstm_model_forward.1} parent=0 // pred_check
    _
  $region7: #{lstm_model_forward.1} parent=0 // pred_check_branch
    %18 = sbr.rel (0) target = $region9
  $region8: #{lstm_model_forward.1} parent=0 // pred_region
    _
  $region9: #{lstm_model_forward.1} parent=0 // pred_fallthru
    _
  // Predicated region
  $region10: #{lstm_model_forward.1} parent=0 // pred_check
    _
  $region11: #{lstm_model_forward.1} parent=0 // pred_check_branch
    %20 = sbr.rel (0) target = $region13
  $region12: #{lstm_model_forward.1} parent=0 // pred_region
    _
  $region13: #{lstm_model_forward.1} parent=0 // pred_fallthru
    _
  // Predicated region
  $region14: #{lstm_model_forward.1} parent=0 // pred_check
    _
  $region15: #{lstm_model_forward.1} parent=0 // pred_check_branch
    %22 = sbr.rel (0) target = $region17
  $region16: #{lstm_model_forward.1} parent=0 // pred_region
    _
  $region17: #{lstm_model_forward.1} parent=0 // pred_fallthru
    _
  // Predicated region
  $region18: #{lstm_model_forward.1} parent=0 // pred_check
    _
  $region19: #{lstm_model_forward.1} parent=0 // pred_check_branch
    %24 = sbr.rel (0) target = $region21
  $region20: #{lstm_model_forward.1} parent=0 // pred_region
    _
  $region21: #{lstm_model_forward.1} parent=0 // pred_fallthru
    _
  // Predicated region
  $region22: #{lstm_model_forward.1} parent=0 // pred_check
    _
  $region23: #{lstm_model_forward.1} parent=0 // pred_check_branch
    %26 = sbr.rel (0) target = $region25
  $region24: #{lstm_model_forward.1} parent=0 // pred_region
    _
  $region25: #{lstm_model_forward.1} parent=0 // pred_fallthru
    _
  // Predicated region
  $region26: #{lstm_model_forward.1} parent=0 // pred_check
    _
  $region27: #{lstm_model_forward.1} parent=0 // pred_check_branch
    %28 = sbr.rel (0) target = $region29
  $region28: #{lstm_model_forward.1} parent=0 // pred_region
    _
  $region29: #{lstm_model_forward.1} parent=0 // pred_fallthru
    _
  // Predicated region
  $region30: #{lstm_model_forward.1} parent=0 // pred_check
    _
  $region31: #{lstm_model_forward.1} parent=0 // pred_check_branch
    %30 = sbr.rel (0) target = $region33
  $region32: #{lstm_model_forward.1} parent=0 // pred_region
    _
  $region33: #{lstm_model_forward.1} parent=0 // pred_fallthru
    _
  %v31 = vld [vmem:[%s0] sm:$0xff]
  %v32 = vld [vmem:[%s0 + $0x8] sm:$0xff]
  %v33 = vld [vmem:[%s0 + $0x10] sm:$0xff]
  %v34 = vld [vmem:[%s0 + $0x18] sm:$0xff]
  %v35 = vld [vmem:[%s0 + $0x20] sm:$0xff]
  %v36 = vld [vmem:[%s0 + $0x28] sm:$0xff]
  %v37 = vld [vmem:[%s0 + $0x30] sm:$0xff]
  %v38 = vld [vmem:[%s0 + $0x38] sm:$0xff]
  %v39 = vld [vmem:[%s1] sm:$0xf]
  %41 = vset.pattern.permute.xlu0 0
  %42 = vperm.xlu0 %41, %v31
  %v43 = vpop.permute.xlu0 %42
  %46 = vset.pattern.permute.xlu0 0
  %47 = vperm.xlu0 %46, %v32
  %v48 = vpop.permute.xlu0 %47
  %51 = vset.pattern.permute.xlu0 0
  %52 = vperm.xlu0 %51, %v33
  %v53 = vpop.permute.xlu0 %52
  %56 = vset.pattern.permute.xlu0 0
  %57 = vperm.xlu0 %56, %v34
  %v58 = vpop.permute.xlu0 %57
  %61 = vset.pattern.permute.xlu0 0
  %62 = vperm.xlu0 %61, %v35
  %v63 = vpop.permute.xlu0 %62
  %66 = vset.pattern.permute.xlu0 0
  %67 = vperm.xlu0 %66, %v36
  %v68 = vpop.permute.xlu0 %67
  %71 = vset.pattern.permute.xlu0 0
  %72 = vperm.xlu0 %71, %v37
  %v73 = vpop.permute.xlu0 %72
  %76 = vset.pattern.permute.xlu0 0
  %77 = vperm.xlu0 %76, %v38
  %v78 = vpop.permute.xlu0 %77
  %v81 = vperm.slane %v39, 0
  %v82 = vperm.slane %v39, 1
  %v83 = vperm.slane %v39, 2
  %v84 = vperm.slane %v39, 3
  %v89 = vmul.f32 %v43, %v81
  %v90 = vmul.f32 %v43, %v82
  %v91 = vmul.f32 %v43, %v83
  %v92 = vmul.f32 %v43, %v84
  %v93 = vmul.f32 %v48, %v81
  %v94 = vmul.f32 %v48, %v82
  %v95 = vmul.f32 %v48, %v83
  %v96 = vmul.f32 %v48, %v84
  %v97 = vmul.f32 %v53, %v81
  %v98 = vmul.f32 %v53, %v82
  %v99 = vmul.f32 %v53, %v83
  %v100 = vmul.f32 %v53, %v84
  %v101 = vmul.f32 %v58, %v81
  %v102 = vmul.f32 %v58, %v82
  %v103 = vmul.f32 %v58, %v83
  %v104 = vmul.f32 %v58, %v84
  %v105 = vmul.f32 %v63, %v81
  %v106 = vmul.f32 %v63, %v82
  %v107 = vmul.f32 %v63, %v83
  %v108 = vmul.f32 %v63, %v84
  %v109 = vmul.f32 %v68, %v81
  %v110 = vmul.f32 %v68, %v82
  %v111 = vmul.f32 %v68, %v83
  %v112 = vmul.f32 %v68, %v84
  %v113 = vmul.f32 %v73, %v81
  %v114 = vmul.f32 %v73, %v82
  %v115 = vmul.f32 %v73, %v83
  %v116 = vmul.f32 %v73, %v84
  %v117 = vmul.f32 %v78, %v81
  %v118 = vmul.f32 %v78, %v82
  %v119 = vmul.f32 %v78, %v83
  %v120 = vmul.f32 %v78, %v84
  %v121 = vld [vmem:[%s2] sm:$0xf]
  %v123 = vperm.slane %v121, 0
  %v124 = vperm.slane %v121, 1
  %v125 = vperm.slane %v121, 2
  %v126 = vperm.slane %v121, 3
  %v131 = vadd.f32 %v89, %v123
  %v132 = vadd.f32 %v90, %v124
  %v133 = vadd.f32 %v91, %v125
  %v134 = vadd.f32 %v92, %v126
  %v135 = vadd.f32 %v93, %v123
  %v136 = vadd.f32 %v94, %v124
  %v137 = vadd.f32 %v95, %v125
  %v138 = vadd.f32 %v96, %v126
  %v139 = vadd.f32 %v97, %v123
  %v140 = vadd.f32 %v98, %v124
  %v141 = vadd.f32 %v99, %v125
  %v142 = vadd.f32 %v100, %v126
  %v143 = vadd.f32 %v101, %v123
  %v144 = vadd.f32 %v102, %v124
  %v145 = vadd.f32 %v103, %v125
  %v146 = vadd.f32 %v104, %v126
  %v147 = vadd.f32 %v105, %v123
  %v148 = vadd.f32 %v106, %v124
  %v149 = vadd.f32 %v107, %v125
  %v150 = vadd.f32 %v108, %v126
  %v151 = vadd.f32 %v109, %v123
  %v152 = vadd.f32 %v110, %v124
  %v153 = vadd.f32 %v111, %v125
  %v154 = vadd.f32 %v112, %v126
  %v155 = vadd.f32 %v113, %v123
  %v156 = vadd.f32 %v114, %v124
  %v157 = vadd.f32 %v115, %v125
  %v158 = vadd.f32 %v116, %v126
  %v159 = vadd.f32 %v117, %v123
  %v160 = vadd.f32 %v118, %v124
  %v161 = vadd.f32 %v119, %v125
  %v162 = vadd.f32 %v120, %v126
  %163 = vst [vmem:[#allocation2] sm:$0xff] %v131
  %164 = vst [vmem:[#allocation2 + $0x8] sm:$0xff] %v132
  %165 = vst [vmem:[#allocation2 + $0x10] sm:$0xff] %v133
  %166 = vst [vmem:[#allocation2 + $0x18] sm:$0xff] %v134
  %167 = vst [vmem:[#allocation2 + $0x20] sm:$0xff] %v135
  %168 = vst [vmem:[#allocation2 + $0x28] sm:$0xff] %v136
  %169 = vst [vmem:[#allocation2 + $0x30] sm:$0xff] %v137
  %170 = vst [vmem:[#allocation2 + $0x38] sm:$0xff] %v138
  %171 = vst [vmem:[#allocation2 + $0x40] sm:$0xff] %v139
  %172 = vst [vmem:[#allocation2 + $0x48] sm:$0xff] %v140
  %173 = vst [vmem:[#allocation2 + $0x50] sm:$0xff] %v141
  %174 = vst [vmem:[#allocation2 + $0x58] sm:$0xff] %v142
  %175 = vst [vmem:[#allocation2 + $0x60] sm:$0xff] %v143
  %176 = vst [vmem:[#allocation2 + $0x68] sm:$0xff] %v144
  %177 = vst [vmem:[#allocation2 + $0x70] sm:$0xff] %v145
  %178 = vst [vmem:[#allocation2 + $0x78] sm:$0xff] %v146
  %179 = vst [vmem:[#allocation2 + $0x80] sm:$0xff] %v147
  %180 = vst [vmem:[#allocation2 + $0x88] sm:$0xff] %v148
  %181 = vst [vmem:[#allocation2 + $0x90] sm:$0xff] %v149
  %182 = vst [vmem:[#allocation2 + $0x98] sm:$0xff] %v150
  %183 = vst [vmem:[#allocation2 + $0xa0] sm:$0xff] %v151
  %184 = vst [vmem:[#allocation2 + $0xa8] sm:$0xff] %v152
  %185 = vst [vmem:[#allocation2 + $0xb0] sm:$0xff] %v153
  %186 = vst [vmem:[#allocation2 + $0xb8] sm:$0xff] %v154
  %187 = vst [vmem:[#allocation2 + $0xc0] sm:$0xff] %v155
  %188 = vst [vmem:[#allocation2 + $0xc8] sm:$0xff] %v156
  %189 = vst [vmem:[#allocation2 + $0xd0] sm:$0xff] %v157
  %190 = vst [vmem:[#allocation2 + $0xd8] sm:$0xff] %v158
  %191 = vst [vmem:[#allocation2 + $0xe0] sm:$0xff] %v159
  %192 = vst [vmem:[#allocation2 + $0xe8] sm:$0xff] %v160
  %193 = vst [vmem:[#allocation2 + $0xf0] sm:$0xff] %v161
  %194 = vst [vmem:[#allocation2 + $0xf8] sm:$0xff] %v162
  %v195 = vld [vmem:[#allocation2] sm:$0xff]
  %v196 = vld [vmem:[#allocation2 + $0x8] sm:$0xff]
  %v197 = vld [vmem:[#allocation2 + $0x10] sm:$0xff]
  %v198 = vld [vmem:[#allocation2 + $0x18] sm:$0xff]
  %v199 = vmul.f32 %v195, 0.5
  %v200 = vmul.f32 %v196, 0.5
  %v201 = vmul.f32 %v197, 0.5
  %v202 = vtanh.pop %v199
  %v203 = vtanh.pop %v200
  %v204 = vtanh.pop %v201
  %v205 = vmul.f32 %v202, 0.5
  %v206 = vmul.f32 %v203, 0.5
  %v207 = vmul.f32 %v204, 0.5
  %v208 = vadd.f32 %v205, 0.5
  %v209 = vadd.f32 %v206, 0.5
  %v210 = vadd.f32 %v207, 0.5
  %v211 = vtanh.pop %v198
  %v212 = vmul.f32 %v209, 0.0
  %v213 = vmul.f32 %v208, %v211
  %v214 = vadd.f32 %v212, %v213
  %v215 = vtanh.pop %v214
  %v216 = vmul.f32 %v210, %v215
  %v217 = vpack.c.bf16 %v216, %v216
  %v218 = vpack.c.bf16 0.0, 0.0
  %v219 = vld [vmem:[%s4] sm:$0xff]
  %v220 = vld [vmem:[%s4 + $0x8] sm:$0xff]
  %v221 = vld [vmem:[%s4 + $0x10] sm:$0xff]
  %v222 = vld [vmem:[%s4 + $0x18] sm:$0xff]
  %v223 = vld [vmem:[%s4 + $0x20] sm:$0xff]
  %v224 = vld [vmem:[%s4 + $0x28] sm:$0xff]
  %v225 = vld [vmem:[%s4 + $0x30] sm:$0xff]
  %v226 = vld [vmem:[%s4 + $0x38] sm:$0xff]
  %v227 = vld [vmem:[%s4 + $0x40] sm:$0xff]
  %v228 = vld [vmem:[%s4 + $0x48] sm:$0xff]
  %v229 = vld [vmem:[%s4 + $0x50] sm:$0xff]
  %v230 = vld [vmem:[%s4 + $0x58] sm:$0xff]
  %v231 = vld [vmem:[%s4 + $0x60] sm:$0xff]
  %v232 = vld [vmem:[%s4 + $0x68] sm:$0xff]
  %v233 = vld [vmem:[%s4 + $0x70] sm:$0xff]
  %v234 = vld [vmem:[%s4 + $0x78] sm:$0xff]
  %v235 = vld [vmem:[%s4 + $0x80] sm:$0xff]
  %v236 = vld [vmem:[%s4 + $0x88] sm:$0xff]
  %v237 = vld [vmem:[%s4 + $0x90] sm:$0xff]
  %v238 = vld [vmem:[%s4 + $0x98] sm:$0xff]
  %v239 = vld [vmem:[%s4 + $0xa0] sm:$0xff]
  %v240 = vld [vmem:[%s4 + $0xa8] sm:$0xff]
  %v241 = vld [vmem:[%s4 + $0xb0] sm:$0xff]
  %v242 = vld [vmem:[%s4 + $0xb8] sm:$0xff]
  %v243 = vld [vmem:[%s4 + $0xc0] sm:$0xff]
  %v244 = vld [vmem:[%s4 + $0xc8] sm:$0xff]
  %v245 = vld [vmem:[%s4 + $0xd0] sm:$0xff]
  %v246 = vld [vmem:[%s4 + $0xd8] sm:$0xff]
  %v247 = vld [vmem:[%s4 + $0xe0] sm:$0xff]
  %v248 = vld [vmem:[%s4 + $0xe8] sm:$0xff]
  %v249 = vld [vmem:[%s4 + $0xf0] sm:$0xff]
  %v250 = vld [vmem:[%s4 + $0xf8] sm:$0xff]
  %v251 = vld [vmem:[%s4 + $0x100] sm:$0xff]
  %v252 = vld [vmem:[%s4 + $0x108] sm:$0xff]
  %v253 = vld [vmem:[%s4 + $0x110] sm:$0xff]
  %v254 = vld [vmem:[%s4 + $0x118] sm:$0xff]
  %v255 = vld [vmem:[%s4 + $0x120] sm:$0xff]
  %v256 = vld [vmem:[%s4 + $0x128] sm:$0xff]
  %v257 = vld [vmem:[%s4 + $0x130] sm:$0xff]
  %v258 = vld [vmem:[%s4 + $0x138] sm:$0xff]
  %v259 = vld [vmem:[%s4 + $0x140] sm:$0xff]
  %v260 = vld [vmem:[%s4 + $0x148] sm:$0xff]
  %v261 = vld [vmem:[%s4 + $0x150] sm:$0xff]
  %v262 = vld [vmem:[%s4 + $0x158] sm:$0xff]
  %v263 = vld [vmem:[%s4 + $0x160] sm:$0xff]
  %v264 = vld [vmem:[%s4 + $0x168] sm:$0xff]
  %v265 = vld [vmem:[%s4 + $0x170] sm:$0xff]
  %v266 = vld [vmem:[%s4 + $0x178] sm:$0xff]
  %v267 = vld [vmem:[%s4 + $0x180] sm:$0xff]
  %v268 = vld [vmem:[%s4 + $0x188] sm:$0xff]
  %v269 = vld [vmem:[%s4 + $0x190] sm:$0xff]
  %v270 = vld [vmem:[%s4 + $0x198] sm:$0xff]
  %v271 = vld [vmem:[%s4 + $0x1a0] sm:$0xff]
  %v272 = vld [vmem:[%s4 + $0x1a8] sm:$0xff]
  %v273 = vld [vmem:[%s4 + $0x1b0] sm:$0xff]
  %v274 = vld [vmem:[%s4 + $0x1b8] sm:$0xff]
  %v275 = vld [vmem:[%s4 + $0x1c0] sm:$0xff]
  %v276 = vld [vmem:[%s4 + $0x1c8] sm:$0xff]
  %v277 = vld [vmem:[%s4 + $0x1d0] sm:$0xff]
  %v278 = vld [vmem:[%s4 + $0x1d8] sm:$0xff]
  %v279 = vld [vmem:[%s4 + $0x1e0] sm:$0xff]
  %v280 = vld [vmem:[%s4 + $0x1e8] sm:$0xff]
  %v281 = vld [vmem:[%s4 + $0x1f0] sm:$0xff]
  %v282 = vld [vmem:[%s4 + $0x1f8] sm:$0xff]
  %v283 = vld [vmem:[%s5] sm:$0xf]
  %v285 = vperm.slane %v283, 0
  %v286 = vperm.slane %v283, 1
  %v287 = vperm.slane %v283, 2
  %v288 = vperm.slane %v283, 3
  %v357 = vunpack.c.l.b16 %v219
  %v358 = vunpack.c.h.b16 %v219
  %v359 = vunpack.c.l.b16 %v220
  %v360 = vunpack.c.h.b16 %v220
  %v361 = vunpack.c.l.b16 %v221
  %v362 = vunpack.c.h.b16 %v221
  %v363 = vunpack.c.l.b16 %v222
  %v364 = vunpack.c.h.b16 %v222
  %v365 = vunpack.c.l.b16 %v223
  %v366 = vunpack.c.h.b16 %v223
  %v367 = vunpack.c.l.b16 %v224
  %v368 = vunpack.c.h.b16 %v224
  %v369 = vunpack.c.l.b16 %v225
  %v370 = vunpack.c.h.b16 %v225
  %v371 = vunpack.c.l.b16 %v226
  %v372 = vunpack.c.h.b16 %v226
  %v373 = vunpack.c.l.b16 %v227
  %v374 = vunpack.c.h.b16 %v227
  %v375 = vunpack.c.l.b16 %v228
  %v376 = vunpack.c.h.b16 %v228
  %v377 = vunpack.c.l.b16 %v229
  %v378 = vunpack.c.h.b16 %v229
  %v379 = vunpack.c.l.b16 %v230
  %v380 = vunpack.c.h.b16 %v230
  %v381 = vunpack.c.l.b16 %v231
  %v382 = vunpack.c.h.b16 %v231
  %v383 = vunpack.c.l.b16 %v232
  %v384 = vunpack.c.h.b16 %v232
  %v385 = vunpack.c.l.b16 %v233
  %v386 = vunpack.c.h.b16 %v233
  %v387 = vunpack.c.l.b16 %v234
  %v388 = vunpack.c.h.b16 %v234
  %v389 = vunpack.c.l.b16 %v235
  %v390 = vunpack.c.h.b16 %v235
  %v391 = vunpack.c.l.b16 %v236
  %v392 = vunpack.c.h.b16 %v236
  %v393 = vunpack.c.l.b16 %v237
  %v394 = vunpack.c.h.b16 %v237
  %v395 = vunpack.c.l.b16 %v238
  %v396 = vunpack.c.h.b16 %v238
  %v397 = vunpack.c.l.b16 %v239
  %v398 = vunpack.c.h.b16 %v239
  %v399 = vunpack.c.l.b16 %v240
  %v400 = vunpack.c.h.b16 %v240
  %v401 = vunpack.c.l.b16 %v241
  %v402 = vunpack.c.h.b16 %v241
  %v403 = vunpack.c.l.b16 %v242
  %v404 = vunpack.c.h.b16 %v242
  %v405 = vunpack.c.l.b16 %v243
  %v406 = vunpack.c.h.b16 %v243
  %v407 = vunpack.c.l.b16 %v244
  %v408 = vunpack.c.h.b16 %v244
  %v409 = vunpack.c.l.b16 %v245
  %v410 = vunpack.c.h.b16 %v245
  %v411 = vunpack.c.l.b16 %v246
  %v412 = vunpack.c.h.b16 %v246
  %v413 = vunpack.c.l.b16 %v247
  %v414 = vunpack.c.h.b16 %v247
  %v415 = vunpack.c.l.b16 %v248
  %v416 = vunpack.c.h.b16 %v248
  %v417 = vunpack.c.l.b16 %v249
  %v418 = vunpack.c.h.b16 %v249
  %v419 = vunpack.c.l.b16 %v250
  %v420 = vunpack.c.h.b16 %v250
  %v421 = vunpack.c.l.b16 %v251
  %v422 = vunpack.c.h.b16 %v251
  %v423 = vunpack.c.l.b16 %v252
  %v424 = vunpack.c.h.b16 %v252
  %v425 = vunpack.c.l.b16 %v253
  %v426 = vunpack.c.h.b16 %v253
  %v427 = vunpack.c.l.b16 %v254
  %v428 = vunpack.c.h.b16 %v254
  %v429 = vunpack.c.l.b16 %v255
  %v430 = vunpack.c.h.b16 %v255
  %v431 = vunpack.c.l.b16 %v256
  %v432 = vunpack.c.h.b16 %v256
  %v433 = vunpack.c.l.b16 %v257
  %v434 = vunpack.c.h.b16 %v257
  %v435 = vunpack.c.l.b16 %v258
  %v436 = vunpack.c.h.b16 %v258
  %v437 = vunpack.c.l.b16 %v259
  %v438 = vunpack.c.h.b16 %v259
  %v439 = vunpack.c.l.b16 %v260
  %v440 = vunpack.c.h.b16 %v260
  %v441 = vunpack.c.l.b16 %v261
  %v442 = vunpack.c.h.b16 %v261
  %v443 = vunpack.c.l.b16 %v262
  %v444 = vunpack.c.h.b16 %v262
  %v445 = vunpack.c.l.b16 %v263
  %v446 = vunpack.c.h.b16 %v263
  %v447 = vunpack.c.l.b16 %v264
  %v448 = vunpack.c.h.b16 %v264
  %v449 = vunpack.c.l.b16 %v265
  %v450 = vunpack.c.h.b16 %v265
  %v451 = vunpack.c.l.b16 %v266
  %v452 = vunpack.c.h.b16 %v266
  %v453 = vunpack.c.l.b16 %v267
  %v454 = vunpack.c.h.b16 %v267
  %v455 = vunpack.c.l.b16 %v268
  %v456 = vunpack.c.h.b16 %v268
  %v457 = vunpack.c.l.b16 %v269
  %v458 = vunpack.c.h.b16 %v269
  %v459 = vunpack.c.l.b16 %v270
  %v460 = vunpack.c.h.b16 %v270
  %v461 = vunpack.c.l.b16 %v271
  %v462 = vunpack.c.h.b16 %v271
  %v463 = vunpack.c.l.b16 %v272
  %v464 = vunpack.c.h.b16 %v272
  %v465 = vunpack.c.l.b16 %v273
  %v466 = vunpack.c.h.b16 %v273
  %v467 = vunpack.c.l.b16 %v274
  %v468 = vunpack.c.h.b16 %v274
  %v469 = vunpack.c.l.b16 %v275
  %v470 = vunpack.c.h.b16 %v275
  %v471 = vunpack.c.l.b16 %v276
  %v472 = vunpack.c.h.b16 %v276
  %v473 = vunpack.c.l.b16 %v277
  %v474 = vunpack.c.h.b16 %v277
  %v475 = vunpack.c.l.b16 %v278
  %v476 = vunpack.c.h.b16 %v278
  %v477 = vunpack.c.l.b16 %v279
  %v478 = vunpack.c.h.b16 %v279
  %v479 = vunpack.c.l.b16 %v280
  %v480 = vunpack.c.h.b16 %v280
  %v481 = vunpack.c.l.b16 %v281
  %v482 = vunpack.c.h.b16 %v281
  %v483 = vunpack.c.l.b16 %v282
  %v484 = vunpack.c.h.b16 %v282
  %v485 = vpack.c.b16 %v361, %v357
  %v486 = vpack.c.b16 %v362, %v358
  %v487 = vpack.c.b16 %v363, %v359
  %v488 = vpack.c.b16 %v364, %v360
  %v489 = vpack.c.b16 %v369, %v365
  %v490 = vpack.c.b16 %v370, %v366
  %v491 = vpack.c.b16 %v371, %v367
  %v492 = vpack.c.b16 %v372, %v368
  %v493 = vpack.c.b16 %v377, %v373
  %v494 = vpack.c.b16 %v378, %v374
  %v495 = vpack.c.b16 %v379, %v375
  %v496 = vpack.c.b16 %v380, %v376
  %v497 = vpack.c.b16 %v385, %v381
  %v498 = vpack.c.b16 %v386, %v382
  %v499 = vpack.c.b16 %v387, %v383
  %v500 = vpack.c.b16 %v388, %v384
  %v501 = vpack.c.b16 %v393, %v389
  %v502 = vpack.c.b16 %v394, %v390
  %v503 = vpack.c.b16 %v395, %v391
  %v504 = vpack.c.b16 %v396, %v392
  %v505 = vpack.c.b16 %v401, %v397
  %v506 = vpack.c.b16 %v402, %v398
  %v507 = vpack.c.b16 %v403, %v399
  %v508 = vpack.c.b16 %v404, %v400
  %v509 = vpack.c.b16 %v409, %v405
  %v510 = vpack.c.b16 %v410, %v406
  %v511 = vpack.c.b16 %v411, %v407
  %v512 = vpack.c.b16 %v412, %v408
  %v513 = vpack.c.b16 %v417, %v413
  %v514 = vpack.c.b16 %v418, %v414
  %v515 = vpack.c.b16 %v419, %v415
  %v516 = vpack.c.b16 %v420, %v416
  %v517 = vpack.c.b16 %v425, %v421
  %v518 = vpack.c.b16 %v426, %v422
  %v519 = vpack.c.b16 %v427, %v423
  %v520 = vpack.c.b16 %v428, %v424
  %v521 = vpack.c.b16 %v433, %v429
  %v522 = vpack.c.b16 %v434, %v430
  %v523 = vpack.c.b16 %v435, %v431
  %v524 = vpack.c.b16 %v436, %v432
  %v525 = vpack.c.b16 %v441, %v437
  %v526 = vpack.c.b16 %v442, %v438
  %v527 = vpack.c.b16 %v443, %v439
  %v528 = vpack.c.b16 %v444, %v440
  %v529 = vpack.c.b16 %v449, %v445
  %v530 = vpack.c.b16 %v450, %v446
  %v531 = vpack.c.b16 %v451, %v447
  %v532 = vpack.c.b16 %v452, %v448
  %v533 = vpack.c.b16 %v457, %v453
  %v534 = vpack.c.b16 %v458, %v454
  %v535 = vpack.c.b16 %v459, %v455
  %v536 = vpack.c.b16 %v460, %v456
  %v537 = vpack.c.b16 %v465, %v461
  %v538 = vpack.c.b16 %v466, %v462
  %v539 = vpack.c.b16 %v467, %v463
  %v540 = vpack.c.b16 %v468, %v464
  %v541 = vpack.c.b16 %v473, %v469
  %v542 = vpack.c.b16 %v474, %v470
  %v543 = vpack.c.b16 %v475, %v471
  %v544 = vpack.c.b16 %v476, %v472
  %v545 = vpack.c.b16 %v481, %v477
  %v546 = vpack.c.b16 %v482, %v478
  %v547 = vpack.c.b16 %v483, %v479
  %v548 = vpack.c.b16 %v484, %v480
  %613 = vmatpush.bf16.msra.mxu0 %v513
  %614 = vmatpush.bf16.msra.mxu0 %v509
  %615 = vmatpush.bf16.msra.mxu0 %v505
  %616 = vmatpush.bf16.msra.mxu0 %v501
  %617 = vmatpush.bf16.msra.mxu0 %v497
  %618 = vmatpush.bf16.msra.mxu0 %v493
  %619 = vmatpush.bf16.msra.mxu0 %v489
  %620 = vmatpush.bf16.msra.mxu0 %v485
  %621 = vmatmul.bf16.gmra.mxu0 %v217
  %v622 = vpop.f32.mrf.mxu0
  %v623 = vadd.f32 %v285, %v622
  %v624 = vpop.f32.mrf.mxu0
  %625 = vdwg.mxu0
  %626 = vmatpush.bf16.msra.mxu0 %v545
  %627 = vmatpush.bf16.msra.mxu0 %v541
  %628 = vmatpush.bf16.msra.mxu0 %v537
  %629 = vmatpush.bf16.msra.mxu0 %v533
  %630 = vmatpush.bf16.msra.mxu0 %v529
  %631 = vmatpush.bf16.msra.mxu0 %v525
  %632 = vmatpush.bf16.msra.mxu0 %v521
  %633 = vmatpush.bf16.msra.mxu0 %v517
  %634 = vmatmul.bf16.gmra.mxu0 %v218
  %v635 = vpop.f32.mrf.mxu0
  %v636 = vadd.f32 %v623, %v635
  %v637 = vpop.f32.mrf.mxu0
  %638 = vdwg.mxu0
  %639 = vmatpush.bf16.msra.mxu0 %v514
  %640 = vmatpush.bf16.msra.mxu0 %v510
  %641 = vmatpush.bf16.msra.mxu0 %v506
  %642 = vmatpush.bf16.msra.mxu0 %v502
  %643 = vmatpush.bf16.msra.mxu0 %v498
  %644 = vmatpush.bf16.msra.mxu0 %v494
  %645 = vmatpush.bf16.msra.mxu0 %v490
  %646 = vmatpush.bf16.msra.mxu0 %v486
  %647 = vmatmul.bf16.gmra.mxu0 %v217
  %v648 = vpop.f32.mrf.mxu0
  %v649 = vadd.f32 %v286, %v648
  %v650 = vpop.f32.mrf.mxu0
  %651 = vdwg.mxu0
  %652 = vmatpush.bf16.msra.mxu0 %v546
  %653 = vmatpush.bf16.msra.mxu0 %v542
  %654 = vmatpush.bf16.msra.mxu0 %v538
  %655 = vmatpush.bf16.msra.mxu0 %v534
  %656 = vmatpush.bf16.msra.mxu0 %v530
  %657 = vmatpush.bf16.msra.mxu0 %v526
  %658 = vmatpush.bf16.msra.mxu0 %v522
  %659 = vmatpush.bf16.msra.mxu0 %v518
  %660 = vmatmul.bf16.gmra.mxu0 %v218
  %v661 = vpop.f32.mrf.mxu0
  %v662 = vadd.f32 %v649, %v661
  %v663 = vpop.f32.mrf.mxu0
  %664 = vdwg.mxu0
  %665 = vmatpush.bf16.msra.mxu0 %v515
  %666 = vmatpush.bf16.msra.mxu0 %v511
  %667 = vmatpush.bf16.msra.mxu0 %v507
  %668 = vmatpush.bf16.msra.mxu0 %v503
  %669 = vmatpush.bf16.msra.mxu0 %v499
  %670 = vmatpush.bf16.msra.mxu0 %v495
  %671 = vmatpush.bf16.msra.mxu0 %v491
  %672 = vmatpush.bf16.msra.mxu0 %v487
  %673 = vmatmul.bf16.gmra.mxu0 %v217
  %v674 = vpop.f32.mrf.mxu0
  %v675 = vadd.f32 %v287, %v674
  %v676 = vpop.f32.mrf.mxu0
  %677 = vdwg.mxu0
  %678 = vmatpush.bf16.msra.mxu0 %v547
  %679 = vmatpush.bf16.msra.mxu0 %v543
  %680 = vmatpush.bf16.msra.mxu0 %v539
  %681 = vmatpush.bf16.msra.mxu0 %v535
  %682 = vmatpush.bf16.msra.mxu0 %v531
  %683 = vmatpush.bf16.msra.mxu0 %v527
  %684 = vmatpush.bf16.msra.mxu0 %v523
  %685 = vmatpush.bf16.msra.mxu0 %v519
  %686 = vmatmul.bf16.gmra.mxu0 %v218
  %v687 = vpop.f32.mrf.mxu0
  %v688 = vadd.f32 %v675, %v687
  %v689 = vpop.f32.mrf.mxu0
  %690 = vdwg.mxu0
  %691 = vmatpush.bf16.msra.mxu0 %v516
  %692 = vmatpush.bf16.msra.mxu0 %v512
  %693 = vmatpush.bf16.msra.mxu0 %v508
  %694 = vmatpush.bf16.msra.mxu0 %v504
  %695 = vmatpush.bf16.msra.mxu0 %v500
  %696 = vmatpush.bf16.msra.mxu0 %v496
  %697 = vmatpush.bf16.msra.mxu0 %v492
  %698 = vmatpush.bf16.msra.mxu0 %v488
  %699 = vmatmul.bf16.gmra.mxu0 %v217
  %v700 = vpop.f32.mrf.mxu0
  %v701 = vadd.f32 %v288, %v700
  %v702 = vpop.f32.mrf.mxu0
  %703 = vdwg.mxu0
  %704 = vmatpush.bf16.msra.mxu0 %v548
  %705 = vmatpush.bf16.msra.mxu0 %v544
  %706 = vmatpush.bf16.msra.mxu0 %v540
  %707 = vmatpush.bf16.msra.mxu0 %v536
  %708 = vmatpush.bf16.msra.mxu0 %v532
  %709 = vmatpush.bf16.msra.mxu0 %v528
  %710 = vmatpush.bf16.msra.mxu0 %v524
  %711 = vmatpush.bf16.msra.mxu0 %v520
  %712 = vmatmul.bf16.gmra.mxu0 %v218
  %v713 = vpop.f32.mrf.mxu0
  %v714 = vadd.f32 %v701, %v713
  %v715 = vpop.f32.mrf.mxu0
  %716 = vdwg.mxu0
  %s717 = smul.u32 1, 4
  %s718 = smul.addr %s717, 8
  %s719 = scalar_lea.vmem [#allocation2], %s718
  %v720 = vld [vmem:[%s719] sm:$0xff]
  %v721 = vld [vmem:[%s719 + $0x8] sm:$0xff]
  %v722 = vld [vmem:[%s719 + $0x10] sm:$0xff]
  %v723 = vld [vmem:[%s719 + $0x18] sm:$0xff]
  %v724 = vld [vmem:[%s3] sm:$0xff]
  %v725 = vld [vmem:[%s3 + $0x8] sm:$0xff]
  %v726 = vld [vmem:[%s3 + $0x10] sm:$0xff]
  %v727 = vld [vmem:[%s3 + $0x18] sm:$0xff]
  %v728 = vld [vmem:[%s3 + $0x20] sm:$0xff]
  %v729 = vld [vmem:[%s3 + $0x28] sm:$0xff]
  %v730 = vld [vmem:[%s3 + $0x30] sm:$0xff]
  %v731 = vld [vmem:[%s3 + $0x38] sm:$0xff]
  %v732 = vld [vmem:[%s3 + $0x40] sm:$0xff]
  %v733 = vld [vmem:[%s3 + $0x48] sm:$0xff]
  %v734 = vld [vmem:[%s3 + $0x50] sm:$0xff]
  %v735 = vld [vmem:[%s3 + $0x58] sm:$0xff]
  %v736 = vld [vmem:[%s3 + $0x60] sm:$0xff]
  %v737 = vld [vmem:[%s3 + $0x68] sm:$0xff]
  %v738 = vld [vmem:[%s3 + $0x70] sm:$0xff]
  %v739 = vld [vmem:[%s3 + $0x78] sm:$0xff]
  %v740 = vld [vmem:[%s3 + $0x80] sm:$0xff]
  %v741 = vld [vmem:[%s3 + $0x88] sm:$0xff]
  %v742 = vld [vmem:[%s3 + $0x90] sm:$0xff]
  %v743 = vld [vmem:[%s3 + $0x98] sm:$0xff]
  %v744 = vld [vmem:[%s3 + $0xa0] sm:$0xff]
  %v745 = vld [vmem:[%s3 + $0xa8] sm:$0xff]
  %v746 = vld [vmem:[%s3 + $0xb0] sm:$0xff]
  %v747 = vld [vmem:[%s3 + $0xb8] sm:$0xff]
  %v748 = vld [vmem:[%s3 + $0xc0] sm:$0xff]
  %v749 = vld [vmem:[%s3 + $0xc8] sm:$0xff]
  %v750 = vld [vmem:[%s3 + $0xd0] sm:$0xff]
  %v751 = vld [vmem:[%s3 + $0xd8] sm:$0xff]
  %v752 = vld [vmem:[%s3 + $0xe0] sm:$0xff]
  %v753 = vld [vmem:[%s3 + $0xe8] sm:$0xff]
  %v754 = vld [vmem:[%s3 + $0xf0] sm:$0xff]
  %v755 = vld [vmem:[%s3 + $0xf8] sm:$0xff]
  %v788 = vunpack.c.l.b16 %v724
  %v789 = vunpack.c.h.b16 %v724
  %v790 = vunpack.c.l.b16 %v725
  %v791 = vunpack.c.h.b16 %v725
  %v792 = vunpack.c.l.b16 %v726
  %v793 = vunpack.c.h.b16 %v726
  %v794 = vunpack.c.l.b16 %v727
  %v795 = vunpack.c.h.b16 %v727
  %v796 = vunpack.c.l.b16 %v728
  %v797 = vunpack.c.h.b16 %v728
  %v798 = vunpack.c.l.b16 %v729
  %v799 = vunpack.c.h.b16 %v729
  %v800 = vunpack.c.l.b16 %v730
  %v801 = vunpack.c.h.b16 %v730
  %v802 = vunpack.c.l.b16 %v731
  %v803 = vunpack.c.h.b16 %v731
  %v804 = vunpack.c.l.b16 %v732
  %v805 = vunpack.c.h.b16 %v732
  %v806 = vunpack.c.l.b16 %v733
  %v807 = vunpack.c.h.b16 %v733
  %v808 = vunpack.c.l.b16 %v734
  %v809 = vunpack.c.h.b16 %v734
  %v810 = vunpack.c.l.b16 %v735
  %v811 = vunpack.c.h.b16 %v735
  %v812 = vunpack.c.l.b16 %v736
  %v813 = vunpack.c.h.b16 %v736
  %v814 = vunpack.c.l.b16 %v737
  %v815 = vunpack.c.h.b16 %v737
  %v816 = vunpack.c.l.b16 %v738
  %v817 = vunpack.c.h.b16 %v738
  %v818 = vunpack.c.l.b16 %v739
  %v819 = vunpack.c.h.b16 %v739
  %v820 = vunpack.c.l.b16 %v740
  %v821 = vunpack.c.h.b16 %v740
  %v822 = vunpack.c.l.b16 %v741
  %v823 = vunpack.c.h.b16 %v741
  %v824 = vunpack.c.l.b16 %v742
  %v825 = vunpack.c.h.b16 %v742
  %v826 = vunpack.c.l.b16 %v743
  %v827 = vunpack.c.h.b16 %v743
  %v828 = vunpack.c.l.b16 %v744
  %v829 = vunpack.c.h.b16 %v744
  %v830 = vunpack.c.l.b16 %v745
  %v831 = vunpack.c.h.b16 %v745
  %v832 = vunpack.c.l.b16 %v746
  %v833 = vunpack.c.h.b16 %v746
  %v834 = vunpack.c.l.b16 %v747
  %v835 = vunpack.c.h.b16 %v747
  %v836 = vunpack.c.l.b16 %v748
  %v837 = vunpack.c.h.b16 %v748
  %v838 = vunpack.c.l.b16 %v749
  %v839 = vunpack.c.h.b16 %v749
  %v840 = vunpack.c.l.b16 %v750
  %v841 = vunpack.c.h.b16 %v750
  %v842 = vunpack.c.l.b16 %v751
  %v843 = vunpack.c.h.b16 %v751
  %v844 = vunpack.c.l.b16 %v752
  %v845 = vunpack.c.h.b16 %v752
  %v846 = vunpack.c.l.b16 %v753
  %v847 = vunpack.c.h.b16 %v753
  %v848 = vunpack.c.l.b16 %v754
  %v849 = vunpack.c.h.b16 %v754
  %v850 = vunpack.c.l.b16 %v755
  %v851 = vunpack.c.h.b16 %v755
  %v852 = vpack.c.b16 %v792, %v788
  %v853 = vpack.c.b16 %v793, %v789
  %v854 = vpack.c.b16 %v794, %v790
  %v855 = vpack.c.b16 %v795, %v791
  %v856 = vpack.c.b16 %v800, %v796
  %v857 = vpack.c.b16 %v801, %v797
  %v858 = vpack.c.b16 %v802, %v798
  %v859 = vpack.c.b16 %v803, %v799
  %v860 = vpack.c.b16 %v808, %v804
  %v861 = vpack.c.b16 %v809, %v805
  %v862 = vpack.c.b16 %v810, %v806
  %v863 = vpack.c.b16 %v811, %v807
  %v864 = vpack.c.b16 %v816, %v812
  %v865 = vpack.c.b16 %v817, %v813
  %v866 = vpack.c.b16 %v818, %v814
  %v867 = vpack.c.b16 %v819, %v815
  %v868 = vpack.c.b16 %v824, %v820
  %v869 = vpack.c.b16 %v825, %v821
  %v870 = vpack.c.b16 %v826, %v822
  %v871 = vpack.c.b16 %v827, %v823
  %v872 = vpack.c.b16 %v832, %v828
  %v873 = vpack.c.b16 %v833, %v829
  %v874 = vpack.c.b16 %v834, %v830
  %v875 = vpack.c.b16 %v835, %v831
  %v876 = vpack.c.b16 %v840, %v836
  %v877 = vpack.c.b16 %v841, %v837
  %v878 = vpack.c.b16 %v842, %v838
  %v879 = vpack.c.b16 %v843, %v839
  %v880 = vpack.c.b16 %v848, %v844
  %v881 = vpack.c.b16 %v849, %v845
  %v882 = vpack.c.b16 %v850, %v846
  %v883 = vpack.c.b16 %v851, %v847
  %916 = vmatpush.bf16.msra.mxu0 %v880
  %917 = vmatpush.bf16.msra.mxu0 %v876
  %918 = vmatpush.bf16.msra.mxu0 %v872
  %919 = vmatpush.bf16.msra.mxu0 %v868
  %920 = vmatpush.bf16.msra.mxu0 %v864
  %921 = vmatpush.bf16.msra.mxu0 %v860
  %922 = vmatpush.bf16.msra.mxu0 %v856
  %923 = vmatpush.bf16.msra.mxu0 %v852
  %924 = vmatmul.bf16.gmra.mxu0 %v217
  %v925 = vpop.f32.mrf.mxu0
  %v926 = vadd.f32 0.0, %v925
  %v927 = vpop.f32.mrf.mxu0
  %928 = vdwg.mxu0
  %929 = vmatpush.bf16.msra.mxu0 %v881
  %930 = vmatpush.bf16.msra.mxu0 %v877
  %931 = vmatpush.bf16.msra.mxu0 %v873
  %932 = vmatpush.bf16.msra.mxu0 %v869
  %933 = vmatpush.bf16.msra.mxu0 %v865
  %934 = vmatpush.bf16.msra.mxu0 %v861
  %935 = vmatpush.bf16.msra.mxu0 %v857
  %936 = vmatpush.bf16.msra.mxu0 %v853
  %937 = vmatmul.bf16.gmra.mxu0 %v217
  %v938 = vpop.f32.mrf.mxu0
  %v939 = vadd.f32 0.0, %v938
  %v940 = vpop.f32.mrf.mxu0
  %941 = vdwg.mxu0
  %942 = vmatpush.bf16.msra.mxu0 %v882
  %943 = vmatpush.bf16.msra.mxu0 %v878
  %944 = vmatpush.bf16.msra.mxu0 %v874
  %945 = vmatpush.bf16.msra.mxu0 %v870
  %946 = vmatpush.bf16.msra.mxu0 %v866
  %947 = vmatpush.bf16.msra.mxu0 %v862
  %948 = vmatpush.bf16.msra.mxu0 %v858
  %949 = vmatpush.bf16.msra.mxu0 %v854
  %950 = vmatmul.bf16.gmra.mxu0 %v217
  %v951 = vpop.f32.mrf.mxu0
  %v952 = vadd.f32 0.0, %v951
  %v953 = vpop.f32.mrf.mxu0
  %954 = vdwg.mxu0
  %955 = vmatpush.bf16.msra.mxu0 %v883
  %956 = vmatpush.bf16.msra.mxu0 %v879
  %957 = vmatpush.bf16.msra.mxu0 %v875
  %958 = vmatpush.bf16.msra.mxu0 %v871
  %959 = vmatpush.bf16.msra.mxu0 %v867
  %960 = vmatpush.bf16.msra.mxu0 %v863
  %961 = vmatpush.bf16.msra.mxu0 %v859
  %962 = vmatpush.bf16.msra.mxu0 %v855
  %963 = vmatmul.bf16.gmra.mxu0 %v217
  %v964 = vpop.f32.mrf.mxu0
  %v965 = vadd.f32 0.0, %v964
  %v966 = vpop.f32.mrf.mxu0
  %967 = vdwg.mxu0
  %v968 = vadd.f32 %v720, %v926
  %v969 = vadd.f32 %v721, %v939
  %v970 = vadd.f32 %v722, %v952
  %v971 = vadd.f32 %v723, %v965
  %v972 = vmul.f32 %v968, 0.5
  %v973 = vmul.f32 %v969, 0.5
  %v974 = vmul.f32 %v970, 0.5
  %v975 = vtanh.pop %v972
  %v976 = vtanh.pop %v973
  %v977 = vtanh.pop %v974
  %v978 = vmul.f32 %v975, 0.5
  %v979 = vmul.f32 %v976, 0.5
  %v980 = vmul.f32 %v977, 0.5
  %v981 = vadd.f32 %v978, 0.5
  %v982 = vadd.f32 %v979, 0.5
  %v983 = vadd.f32 %v980, 0.5
  %v984 = vtanh.pop %v971
  %v985 = vmul.f32 %v982, %v214
  %v986 = vmul.f32 %v981, %v984
  %v987 = vadd.f32 %v985, %v986
  %v988 = vtanh.pop %v987
  %v989 = vmul.f32 %v983, %v988
  %v990 = vmul.f32 %v636, 0.5
  %v991 = vmul.f32 %v662, 0.5
  %v992 = vmul.f32 %v688, 0.5
  %v993 = vtanh.pop %v990
  %v994 = vtanh.pop %v991
  %v995 = vtanh.pop %v992
  %v996 = vmul.f32 %v993, 0.5
  %v997 = vmul.f32 %v994, 0.5
  %v998 = vmul.f32 %v995, 0.5
  %v999 = vadd.f32 %v996, 0.5
  %v1000 = vadd.f32 %v997, 0.5
  %v1001 = vadd.f32 %v998, 0.5
  %v1002 = vtanh.pop %v714
  %v1003 = vmul.f32 %v1000, 0.0
  %v1004 = vmul.f32 %v999, %v1002
  %v1005 = vadd.f32 %v1003, %v1004
  %v1006 = vtanh.pop %v1005
  %v1007 = vmul.f32 %v1001, %v1006
  %v1008 = vpack.c.bf16 %v989, %v989
  %v1009 = vpack.c.bf16 %v1007, %v1007
  %1010 = vmatpush.bf16.msra.mxu0 %v513
  %1011 = vmatpush.bf16.msra.mxu0 %v509
  %1012 = vmatpush.bf16.msra.mxu0 %v505
  %1013 = vmatpush.bf16.msra.mxu0 %v501
  %1014 = vmatpush.bf16.msra.mxu0 %v497
  %1015 = vmatpush.bf16.msra.mxu0 %v493
  %1016 = vmatpush.bf16.msra.mxu0 %v489
  %1017 = vmatpush.bf16.msra.mxu0 %v485
  %1018 = vmatmul.bf16.gmra.mxu0 %v1008
  %v1019 = vpop.f32.mrf.mxu0
  %v1020 = vadd.f32 %v285, %v1019
  %v1021 = vpop.f32.mrf.mxu0
  %1022 = vdwg.mxu0
  %1023 = vmatpush.bf16.msra.mxu0 %v545
  %1024 = vmatpush.bf16.msra.mxu0 %v541
  %1025 = vmatpush.bf16.msra.mxu0 %v537
  %1026 = vmatpush.bf16.msra.mxu0 %v533
  %1027 = vmatpush.bf16.msra.mxu0 %v529
  %1028 = vmatpush.bf16.msra.mxu0 %v525
  %1029 = vmatpush.bf16.msra.mxu0 %v521
  %1030 = vmatpush.bf16.msra.mxu0 %v517
  %1031 = vmatmul.bf16.gmra.mxu0 %v1009
  %v1032 = vpop.f32.mrf.mxu0
  %v1033 = vadd.f32 %v1020, %v1032
  %v1034 = vpop.f32.mrf.mxu0
  %1035 = vdwg.mxu0
  %1036 = vmatpush.bf16.msra.mxu0 %v514
  %1037 = vmatpush.bf16.msra.mxu0 %v510
  %1038 = vmatpush.bf16.msra.mxu0 %v506
  %1039 = vmatpush.bf16.msra.mxu0 %v502
  %1040 = vmatpush.bf16.msra.mxu0 %v498
  %1041 = vmatpush.bf16.msra.mxu0 %v494
  %1042 = vmatpush.bf16.msra.mxu0 %v490
  %1043 = vmatpush.bf16.msra.mxu0 %v486
  %1044 = vmatmul.bf16.gmra.mxu0 %v1008
  %v1045 = vpop.f32.mrf.mxu0
  %v1046 = vadd.f32 %v286, %v1045
  %v1047 = vpop.f32.mrf.mxu0
  %1048 = vdwg.mxu0
  %1049 = vmatpush.bf16.msra.mxu0 %v546
  %1050 = vmatpush.bf16.msra.mxu0 %v542
  %1051 = vmatpush.bf16.msra.mxu0 %v538
  %1052 = vmatpush.bf16.msra.mxu0 %v534
  %1053 = vmatpush.bf16.msra.mxu0 %v530
  %1054 = vmatpush.bf16.msra.mxu0 %v526
  %1055 = vmatpush.bf16.msra.mxu0 %v522
  %1056 = vmatpush.bf16.msra.mxu0 %v518
  %1057 = vmatmul.bf16.gmra.mxu0 %v1009
  %v1058 = vpop.f32.mrf.mxu0
  %v1059 = vadd.f32 %v1046, %v1058
  %v1060 = vpop.f32.mrf.mxu0
  %1061 = vdwg.mxu0
  %1062 = vmatpush.bf16.msra.mxu0 %v515
  %1063 = vmatpush.bf16.msra.mxu0 %v511
  %1064 = vmatpush.bf16.msra.mxu0 %v507
  %1065 = vmatpush.bf16.msra.mxu0 %v503
  %1066 = vmatpush.bf16.msra.mxu0 %v499
  %1067 = vmatpush.bf16.msra.mxu0 %v495
  %1068 = vmatpush.bf16.msra.mxu0 %v491
  %1069 = vmatpush.bf16.msra.mxu0 %v487
  %1070 = vmatmul.bf16.gmra.mxu0 %v1008
  %v1071 = vpop.f32.mrf.mxu0
  %v1072 = vadd.f32 %v287, %v1071
  %v1073 = vpop.f32.mrf.mxu0
  %1074 = vdwg.mxu0
  %1075 = vmatpush.bf16.msra.mxu0 %v547
  %1076 = vmatpush.bf16.msra.mxu0 %v543
  %1077 = vmatpush.bf16.msra.mxu0 %v539
  %1078 = vmatpush.bf16.msra.mxu0 %v535
  %1079 = vmatpush.bf16.msra.mxu0 %v531
  %1080 = vmatpush.bf16.msra.mxu0 %v527
  %1081 = vmatpush.bf16.msra.mxu0 %v523
  %1082 = vmatpush.bf16.msra.mxu0 %v519
  %1083 = vmatmul.bf16.gmra.mxu0 %v1009
  %v1084 = vpop.f32.mrf.mxu0
  %v1085 = vadd.f32 %v1072, %v1084
  %v1086 = vpop.f32.mrf.mxu0
  %1087 = vdwg.mxu0
  %1088 = vmatpush.bf16.msra.mxu0 %v516
  %1089 = vmatpush.bf16.msra.mxu0 %v512
  %1090 = vmatpush.bf16.msra.mxu0 %v508
  %1091 = vmatpush.bf16.msra.mxu0 %v504
  %1092 = vmatpush.bf16.msra.mxu0 %v500
  %1093 = vmatpush.bf16.msra.mxu0 %v496
  %1094 = vmatpush.bf16.msra.mxu0 %v492
  %1095 = vmatpush.bf16.msra.mxu0 %v488
  %1096 = vmatmul.bf16.gmra.mxu0 %v1008
  %v1097 = vpop.f32.mrf.mxu0
  %v1098 = vadd.f32 %v288, %v1097
  %v1099 = vpop.f32.mrf.mxu0
  %1100 = vdwg.mxu0
  %1101 = vmatpush.bf16.msra.mxu0 %v548
  %1102 = vmatpush.bf16.msra.mxu0 %v544
  %1103 = vmatpush.bf16.msra.mxu0 %v540
  %1104 = vmatpush.bf16.msra.mxu0 %v536
  %1105 = vmatpush.bf16.msra.mxu0 %v532
  %1106 = vmatpush.bf16.msra.mxu0 %v528
  %1107 = vmatpush.bf16.msra.mxu0 %v524
  %1108 = vmatpush.bf16.msra.mxu0 %v520
  %1109 = vmatmul.bf16.gmra.mxu0 %v1009
  %v1110 = vpop.f32.mrf.mxu0
  %v1111 = vadd.f32 %v1098, %v1110
  %v1112 = vpop.f32.mrf.mxu0
  %1113 = vdwg.mxu0
  %s1114 = smul.u32 2, 4
  %s1115 = smul.addr %s1114, 8
  %s1116 = scalar_lea.vmem [#allocation2], %s1115
  %v1117 = vld [vmem:[%s1116] sm:$0xff]
  %v1118 = vld [vmem:[%s1116 + $0x8] sm:$0xff]
  %v1119 = vld [vmem:[%s1116 + $0x10] sm:$0xff]
  %v1120 = vld [vmem:[%s1116 + $0x18] sm:$0xff]
  %1121 = vmatpush.bf16.msra.mxu0 %v880
  %1122 = vmatpush.bf16.msra.mxu0 %v876
  %1123 = vmatpush.bf16.msra.mxu0 %v872
  %1124 = vmatpush.bf16.msra.mxu0 %v868
  %1125 = vmatpush.bf16.msra.mxu0 %v864
  %1126 = vmatpush.bf16.msra.mxu0 %v860
  %1127 = vmatpush.bf16.msra.mxu0 %v856
  %1128 = vmatpush.bf16.msra.mxu0 %v852
  %1129 = vmatmul.bf16.gmra.mxu0 %v1008
  %v1130 = vpop.f32.mrf.mxu0
  %v1131 = vadd.f32 0.0, %v1130
  %v1132 = vpop.f32.mrf.mxu0
  %1133 = vdwg.mxu0
  %1134 = vmatpush.bf16.msra.mxu0 %v881
  %1135 = vmatpush.bf16.msra.mxu0 %v877
  %1136 = vmatpush.bf16.msra.mxu0 %v873
  %1137 = vmatpush.bf16.msra.mxu0 %v869
  %1138 = vmatpush.bf16.msra.mxu0 %v865
  %1139 = vmatpush.bf16.msra.mxu0 %v861
  %1140 = vmatpush.bf16.msra.mxu0 %v857
  %1141 = vmatpush.bf16.msra.mxu0 %v853
  %1142 = vmatmul.bf16.gmra.mxu0 %v1008
  %v1143 = vpop.f32.mrf.mxu0
  %v1144 = vadd.f32 0.0, %v1143
  %v1145 = vpop.f32.mrf.mxu0
  %1146 = vdwg.mxu0
  %1147 = vmatpush.bf16.msra.mxu0 %v882
  %1148 = vmatpush.bf16.msra.mxu0 %v878
  %1149 = vmatpush.bf16.msra.mxu0 %v874
  %1150 = vmatpush.bf16.msra.mxu0 %v870
  %1151 = vmatpush.bf16.msra.mxu0 %v866
  %1152 = vmatpush.bf16.msra.mxu0 %v862
  %1153 = vmatpush.bf16.msra.mxu0 %v858
  %1154 = vmatpush.bf16.msra.mxu0 %v854
  %1155 = vmatmul.bf16.gmra.mxu0 %v1008
  %v1156 = vpop.f32.mrf.mxu0
  %v1157 = vadd.f32 0.0, %v1156
  %v1158 = vpop.f32.mrf.mxu0
  %1159 = vdwg.mxu0
  %1160 = vmatpush.bf16.msra.mxu0 %v883
  %1161 = vmatpush.bf16.msra.mxu0 %v879
  %1162 = vmatpush.bf16.msra.mxu0 %v875
  %1163 = vmatpush.bf16.msra.mxu0 %v871
  %1164 = vmatpush.bf16.msra.mxu0 %v867
  %1165 = vmatpush.bf16.msra.mxu0 %v863
  %1166 = vmatpush.bf16.msra.mxu0 %v859
  %1167 = vmatpush.bf16.msra.mxu0 %v855
  %1168 = vmatmul.bf16.gmra.mxu0 %v1008
  %v1169 = vpop.f32.mrf.mxu0
  %v1170 = vadd.f32 0.0, %v1169
  %v1171 = vpop.f32.mrf.mxu0
  %1172 = vdwg.mxu0
  %v1173 = vadd.f32 %v1117, %v1131
  %v1174 = vadd.f32 %v1118, %v1144
  %v1175 = vadd.f32 %v1119, %v1157
  %v1176 = vadd.f32 %v1120, %v1170
  %v1177 = vmul.f32 %v1173, 0.5
  %v1178 = vmul.f32 %v1174, 0.5
  %v1179 = vmul.f32 %v1175, 0.5
  %v1180 = vtanh.pop %v1177
  %v1181 = vtanh.pop %v1178
  %v1182 = vtanh.pop %v1179
  %v1183 = vmul.f32 %v1180, 0.5
  %v1184 = vmul.f32 %v1181, 0.5
  %v1185 = vmul.f32 %v1182, 0.5
  %v1186 = vadd.f32 %v1183, 0.5
  %v1187 = vadd.f32 %v1184, 0.5
  %v1188 = vadd.f32 %v1185, 0.5
  %v1189 = vtanh.pop %v1176
  %v1190 = vmul.f32 %v1187, %v987
  %v1191 = vmul.f32 %v1186, %v1189
  %v1192 = vadd.f32 %v1190, %v1191
  %v1193 = vtanh.pop %v1192
  %v1194 = vmul.f32 %v1188, %v1193
  %v1195 = vmul.f32 %v1033, 0.5
  %v1196 = vmul.f32 %v1059, 0.5
  %v1197 = vmul.f32 %v1085, 0.5
  %v1198 = vtanh.pop %v1195
  %v1199 = vtanh.pop %v1196
  %v1200 = vtanh.pop %v1197
  %v1201 = vmul.f32 %v1198, 0.5
  %v1202 = vmul.f32 %v1199, 0.5
  %v1203 = vmul.f32 %v1200, 0.5
  %v1204 = vadd.f32 %v1201, 0.5
  %v1205 = vadd.f32 %v1202, 0.5
  %v1206 = vadd.f32 %v1203, 0.5
  %v1207 = vtanh.pop %v1111
  %v1208 = vmul.f32 %v1205, %v1005
  %v1209 = vmul.f32 %v1204, %v1207
  %v1210 = vadd.f32 %v1208, %v1209
  %v1211 = vtanh.pop %v1210
  %v1212 = vmul.f32 %v1206, %v1211
  %v1213 = vpack.c.bf16 %v1194, %v1194
  %v1214 = vpack.c.bf16 %v1212, %v1212
  %1215 = vmatpush.bf16.msra.mxu0 %v513
  %1216 = vmatpush.bf16.msra.mxu0 %v509
  %1217 = vmatpush.bf16.msra.mxu0 %v505
  %1218 = vmatpush.bf16.msra.mxu0 %v501
  %1219 = vmatpush.bf16.msra.mxu0 %v497
  %1220 = vmatpush.bf16.msra.mxu0 %v493
  %1221 = vmatpush.bf16.msra.mxu0 %v489
  %1222 = vmatpush.bf16.msra.mxu0 %v485
  %1223 = vmatmul.bf16.gmra.mxu0 %v1213
  %v1224 = vpop.f32.mrf.mxu0
  %v1225 = vadd.f32 %v285, %v1224
  %v1226 = vpop.f32.mrf.mxu0
  %1227 = vdwg.mxu0
  %1228 = vmatpush.bf16.msra.mxu0 %v545
  %1229 = vmatpush.bf16.msra.mxu0 %v541
  %1230 = vmatpush.bf16.msra.mxu0 %v537
  %1231 = vmatpush.bf16.msra.mxu0 %v533
  %1232 = vmatpush.bf16.msra.mxu0 %v529
  %1233 = vmatpush.bf16.msra.mxu0 %v525
  %1234 = vmatpush.bf16.msra.mxu0 %v521
  %1235 = vmatpush.bf16.msra.mxu0 %v517
  %1236 = vmatmul.bf16.gmra.mxu0 %v1214
  %v1237 = vpop.f32.mrf.mxu0
  %v1238 = vadd.f32 %v1225, %v1237
  %v1239 = vpop.f32.mrf.mxu0
  %1240 = vdwg.mxu0
  %1241 = vmatpush.bf16.msra.mxu0 %v514
  %1242 = vmatpush.bf16.msra.mxu0 %v510
  %1243 = vmatpush.bf16.msra.mxu0 %v506
  %1244 = vmatpush.bf16.msra.mxu0 %v502
  %1245 = vmatpush.bf16.msra.mxu0 %v498
  %1246 = vmatpush.bf16.msra.mxu0 %v494
  %1247 = vmatpush.bf16.msra.mxu0 %v490
  %1248 = vmatpush.bf16.msra.mxu0 %v486
  %1249 = vmatmul.bf16.gmra.mxu0 %v1213
  %v1250 = vpop.f32.mrf.mxu0
  %v1251 = vadd.f32 %v286, %v1250
  %v1252 = vpop.f32.mrf.mxu0
  %1253 = vdwg.mxu0
  %1254 = vmatpush.bf16.msra.mxu0 %v546
  %1255 = vmatpush.bf16.msra.mxu0 %v542
  %1256 = vmatpush.bf16.msra.mxu0 %v538
  %1257 = vmatpush.bf16.msra.mxu0 %v534
  %1258 = vmatpush.bf16.msra.mxu0 %v530
  %1259 = vmatpush.bf16.msra.mxu0 %v526
  %1260 = vmatpush.bf16.msra.mxu0 %v522
  %1261 = vmatpush.bf16.msra.mxu0 %v518
  %1262 = vmatmul.bf16.gmra.mxu0 %v1214
  %v1263 = vpop.f32.mrf.mxu0
  %v1264 = vadd.f32 %v1251, %v1263
  %v1265 = vpop.f32.mrf.mxu0
  %1266 = vdwg.mxu0
  %1267 = vmatpush.bf16.msra.mxu0 %v515
  %1268 = vmatpush.bf16.msra.mxu0 %v511
  %1269 = vmatpush.bf16.msra.mxu0 %v507
  %1270 = vmatpush.bf16.msra.mxu0 %v503
  %1271 = vmatpush.bf16.msra.mxu0 %v499
  %1272 = vmatpush.bf16.msra.mxu0 %v495
  %1273 = vmatpush.bf16.msra.mxu0 %v491
  %1274 = vmatpush.bf16.msra.mxu0 %v487
  %1275 = vmatmul.bf16.gmra.mxu0 %v1213
  %v1276 = vpop.f32.mrf.mxu0
  %v1277 = vadd.f32 %v287, %v1276
  %v1278 = vpop.f32.mrf.mxu0
  %1279 = vdwg.mxu0
  %1280 = vmatpush.bf16.msra.mxu0 %v547
  %1281 = vmatpush.bf16.msra.mxu0 %v543
  %1282 = vmatpush.bf16.msra.mxu0 %v539
  %1283 = vmatpush.bf16.msra.mxu0 %v535
  %1284 = vmatpush.bf16.msra.mxu0 %v531
  %1285 = vmatpush.bf16.msra.mxu0 %v527
  %1286 = vmatpush.bf16.msra.mxu0 %v523
  %1287 = vmatpush.bf16.msra.mxu0 %v519
  %1288 = vmatmul.bf16.gmra.mxu0 %v1214
  %v1289 = vpop.f32.mrf.mxu0
  %v1290 = vadd.f32 %v1277, %v1289
  %v1291 = vpop.f32.mrf.mxu0
  %1292 = vdwg.mxu0
  %1293 = vmatpush.bf16.msra.mxu0 %v516
  %1294 = vmatpush.bf16.msra.mxu0 %v512
  %1295 = vmatpush.bf16.msra.mxu0 %v508
  %1296 = vmatpush.bf16.msra.mxu0 %v504
  %1297 = vmatpush.bf16.msra.mxu0 %v500
  %1298 = vmatpush.bf16.msra.mxu0 %v496
  %1299 = vmatpush.bf16.msra.mxu0 %v492
  %1300 = vmatpush.bf16.msra.mxu0 %v488
  %1301 = vmatmul.bf16.gmra.mxu0 %v1213
  %v1302 = vpop.f32.mrf.mxu0
  %v1303 = vadd.f32 %v288, %v1302
  %v1304 = vpop.f32.mrf.mxu0
  %1305 = vdwg.mxu0
  %1306 = vmatpush.bf16.msra.mxu0 %v548
  %1307 = vmatpush.bf16.msra.mxu0 %v544
  %1308 = vmatpush.bf16.msra.mxu0 %v540
  %1309 = vmatpush.bf16.msra.mxu0 %v536
  %1310 = vmatpush.bf16.msra.mxu0 %v532
  %1311 = vmatpush.bf16.msra.mxu0 %v528
  %1312 = vmatpush.bf16.msra.mxu0 %v524
  %1313 = vmatpush.bf16.msra.mxu0 %v520
  %1314 = vmatmul.bf16.gmra.mxu0 %v1214
  %v1315 = vpop.f32.mrf.mxu0
  %v1316 = vadd.f32 %v1303, %v1315
  %v1317 = vpop.f32.mrf.mxu0
  %1318 = vdwg.mxu0
  %s1319 = smul.u32 3, 4
  %s1320 = smul.addr %s1319, 8
  %s1321 = scalar_lea.vmem [#allocation2], %s1320
  %v1322 = vld [vmem:[%s1321] sm:$0xff]
  %v1323 = vld [vmem:[%s1321 + $0x8] sm:$0xff]
  %v1324 = vld [vmem:[%s1321 + $0x10] sm:$0xff]
  %v1325 = vld [vmem:[%s1321 + $0x18] sm:$0xff]
  %1326 = vmatpush.bf16.msra.mxu0 %v880
  %1327 = vmatpush.bf16.msra.mxu0 %v876
  %1328 = vmatpush.bf16.msra.mxu0 %v872
  %1329 = vmatpush.bf16.msra.mxu0 %v868
  %1330 = vmatpush.bf16.msra.mxu0 %v864
  %1331 = vmatpush.bf16.msra.mxu0 %v860
  %1332 = vmatpush.bf16.msra.mxu0 %v856
  %1333 = vmatpush.bf16.msra.mxu0 %v852
  %1334 = vmatmul.bf16.gmra.mxu0 %v1213
  %v1335 = vpop.f32.mrf.mxu0
  %v1336 = vadd.f32 0.0, %v1335
  %v1337 = vpop.f32.mrf.mxu0
  %1338 = vdwg.mxu0
  %1339 = vmatpush.bf16.msra.mxu0 %v881
  %1340 = vmatpush.bf16.msra.mxu0 %v877
  %1341 = vmatpush.bf16.msra.mxu0 %v873
  %1342 = vmatpush.bf16.msra.mxu0 %v869
  %1343 = vmatpush.bf16.msra.mxu0 %v865
  %1344 = vmatpush.bf16.msra.mxu0 %v861
  %1345 = vmatpush.bf16.msra.mxu0 %v857
  %1346 = vmatpush.bf16.msra.mxu0 %v853
  %1347 = vmatmul.bf16.gmra.mxu0 %v1213
  %v1348 = vpop.f32.mrf.mxu0
  %v1349 = vadd.f32 0.0, %v1348
  %v1350 = vpop.f32.mrf.mxu0
  %1351 = vdwg.mxu0
  %1352 = vmatpush.bf16.msra.mxu0 %v882
  %1353 = vmatpush.bf16.msra.mxu0 %v878
  %1354 = vmatpush.bf16.msra.mxu0 %v874
  %1355 = vmatpush.bf16.msra.mxu0 %v870
  %1356 = vmatpush.bf16.msra.mxu0 %v866
  %1357 = vmatpush.bf16.msra.mxu0 %v862
  %1358 = vmatpush.bf16.msra.mxu0 %v858
  %1359 = vmatpush.bf16.msra.mxu0 %v854
  %1360 = vmatmul.bf16.gmra.mxu0 %v1213
  %v1361 = vpop.f32.mrf.mxu0
  %v1362 = vadd.f32 0.0, %v1361
  %v1363 = vpop.f32.mrf.mxu0
  %1364 = vdwg.mxu0
  %1365 = vmatpush.bf16.msra.mxu0 %v883
  %1366 = vmatpush.bf16.msra.mxu0 %v879
  %1367 = vmatpush.bf16.msra.mxu0 %v875
  %1368 = vmatpush.bf16.msra.mxu0 %v871
  %1369 = vmatpush.bf16.msra.mxu0 %v867
  %1370 = vmatpush.bf16.msra.mxu0 %v863
  %1371 = vmatpush.bf16.msra.mxu0 %v859
  %1372 = vmatpush.bf16.msra.mxu0 %v855
  %1373 = vmatmul.bf16.gmra.mxu0 %v1213
  %v1374 = vpop.f32.mrf.mxu0
  %v1375 = vadd.f32 0.0, %v1374
  %v1376 = vpop.f32.mrf.mxu0
  %1377 = vdwg.mxu0
  %v1378 = vadd.f32 %v1322, %v1336
  %v1379 = vadd.f32 %v1323, %v1349
  %v1380 = vadd.f32 %v1324, %v1362
  %v1381 = vadd.f32 %v1325, %v1375
  %v1382 = vmul.f32 %v1378, 0.5
  %v1383 = vmul.f32 %v1379, 0.5
  %v1384 = vmul.f32 %v1380, 0.5
  %v1385 = vtanh.pop %v1382
  %v1386 = vtanh.pop %v1383
  %v1387 = vtanh.pop %v1384
  %v1388 = vmul.f32 %v1385, 0.5
  %v1389 = vmul.f32 %v1386, 0.5
  %v1390 = vmul.f32 %v1387, 0.5
  %v1391 = vadd.f32 %v1388, 0.5
  %v1392 = vadd.f32 %v1389, 0.5
  %v1393 = vadd.f32 %v1390, 0.5
  %v1394 = vtanh.pop %v1381
  %v1395 = vmul.f32 %v1392, %v1192
  %v1396 = vmul.f32 %v1391, %v1394
  %v1397 = vadd.f32 %v1395, %v1396
  %v1398 = vtanh.pop %v1397
  %v1399 = vmul.f32 %v1393, %v1398
  %v1400 = vmul.f32 %v1238, 0.5
  %v1401 = vmul.f32 %v1264, 0.5
  %v1402 = vmul.f32 %v1290, 0.5
  %v1403 = vtanh.pop %v1400
  %v1404 = vtanh.pop %v1401
  %v1405 = vtanh.pop %v1402
  %v1406 = vmul.f32 %v1403, 0.5
  %v1407 = vmul.f32 %v1404, 0.5
  %v1408 = vmul.f32 %v1405, 0.5
  %v1409 = vadd.f32 %v1406, 0.5
  %v1410 = vadd.f32 %v1407, 0.5
  %v1411 = vadd.f32 %v1408, 0.5
  %v1412 = vtanh.pop %v1316
  %v1413 = vmul.f32 %v1410, %v1210
  %v1414 = vmul.f32 %v1409, %v1412
  %v1415 = vadd.f32 %v1413, %v1414
  %v1416 = vtanh.pop %v1415
  %v1417 = vmul.f32 %v1411, %v1416
  %v1418 = vpack.c.bf16 %v1399, %v1399
  %v1419 = vpack.c.bf16 %v1417, %v1417
  %1420 = vmatpush.bf16.msra.mxu0 %v513
  %1421 = vmatpush.bf16.msra.mxu0 %v509
  %1422 = vmatpush.bf16.msra.mxu0 %v505
  %1423 = vmatpush.bf16.msra.mxu0 %v501
  %1424 = vmatpush.bf16.msra.mxu0 %v497
  %1425 = vmatpush.bf16.msra.mxu0 %v493
  %1426 = vmatpush.bf16.msra.mxu0 %v489
  %1427 = vmatpush.bf16.msra.mxu0 %v485
  %1428 = vmatmul.bf16.gmra.mxu0 %v1418
  %v1429 = vpop.f32.mrf.mxu0
  %v1430 = vadd.f32 %v285, %v1429
  %v1431 = vpop.f32.mrf.mxu0
  %1432 = vdwg.mxu0
  %1433 = vmatpush.bf16.msra.mxu0 %v545
  %1434 = vmatpush.bf16.msra.mxu0 %v541
  %1435 = vmatpush.bf16.msra.mxu0 %v537
  %1436 = vmatpush.bf16.msra.mxu0 %v533
  %1437 = vmatpush.bf16.msra.mxu0 %v529
  %1438 = vmatpush.bf16.msra.mxu0 %v525
  %1439 = vmatpush.bf16.msra.mxu0 %v521
  %1440 = vmatpush.bf16.msra.mxu0 %v517
  %1441 = vmatmul.bf16.gmra.mxu0 %v1419
  %v1442 = vpop.f32.mrf.mxu0
  %v1443 = vadd.f32 %v1430, %v1442
  %v1444 = vpop.f32.mrf.mxu0
  %1445 = vdwg.mxu0
  %1446 = vmatpush.bf16.msra.mxu0 %v514
  %1447 = vmatpush.bf16.msra.mxu0 %v510
  %1448 = vmatpush.bf16.msra.mxu0 %v506
  %1449 = vmatpush.bf16.msra.mxu0 %v502
  %1450 = vmatpush.bf16.msra.mxu0 %v498
  %1451 = vmatpush.bf16.msra.mxu0 %v494
  %1452 = vmatpush.bf16.msra.mxu0 %v490
  %1453 = vmatpush.bf16.msra.mxu0 %v486
  %1454 = vmatmul.bf16.gmra.mxu0 %v1418
  %v1455 = vpop.f32.mrf.mxu0
  %v1456 = vadd.f32 %v286, %v1455
  %v1457 = vpop.f32.mrf.mxu0
  %1458 = vdwg.mxu0
  %1459 = vmatpush.bf16.msra.mxu0 %v546
  %1460 = vmatpush.bf16.msra.mxu0 %v542
  %1461 = vmatpush.bf16.msra.mxu0 %v538
  %1462 = vmatpush.bf16.msra.mxu0 %v534
  %1463 = vmatpush.bf16.msra.mxu0 %v530
  %1464 = vmatpush.bf16.msra.mxu0 %v526
  %1465 = vmatpush.bf16.msra.mxu0 %v522
  %1466 = vmatpush.bf16.msra.mxu0 %v518
  %1467 = vmatmul.bf16.gmra.mxu0 %v1419
  %v1468 = vpop.f32.mrf.mxu0
  %v1469 = vadd.f32 %v1456, %v1468
  %v1470 = vpop.f32.mrf.mxu0
  %1471 = vdwg.mxu0
  %1472 = vmatpush.bf16.msra.mxu0 %v515
  %1473 = vmatpush.bf16.msra.mxu0 %v511
  %1474 = vmatpush.bf16.msra.mxu0 %v507
  %1475 = vmatpush.bf16.msra.mxu0 %v503
  %1476 = vmatpush.bf16.msra.mxu0 %v499
  %1477 = vmatpush.bf16.msra.mxu0 %v495
  %1478 = vmatpush.bf16.msra.mxu0 %v491
  %1479 = vmatpush.bf16.msra.mxu0 %v487
  %1480 = vmatmul.bf16.gmra.mxu0 %v1418
  %v1481 = vpop.f32.mrf.mxu0
  %v1482 = vadd.f32 %v287, %v1481
  %v1483 = vpop.f32.mrf.mxu0
  %1484 = vdwg.mxu0
  %1485 = vmatpush.bf16.msra.mxu0 %v547
  %1486 = vmatpush.bf16.msra.mxu0 %v543
  %1487 = vmatpush.bf16.msra.mxu0 %v539
  %1488 = vmatpush.bf16.msra.mxu0 %v535
  %1489 = vmatpush.bf16.msra.mxu0 %v531
  %1490 = vmatpush.bf16.msra.mxu0 %v527
  %1491 = vmatpush.bf16.msra.mxu0 %v523
  %1492 = vmatpush.bf16.msra.mxu0 %v519
  %1493 = vmatmul.bf16.gmra.mxu0 %v1419
  %v1494 = vpop.f32.mrf.mxu0
  %v1495 = vadd.f32 %v1482, %v1494
  %v1496 = vpop.f32.mrf.mxu0
  %1497 = vdwg.mxu0
  %1498 = vmatpush.bf16.msra.mxu0 %v516
  %1499 = vmatpush.bf16.msra.mxu0 %v512
  %1500 = vmatpush.bf16.msra.mxu0 %v508
  %1501 = vmatpush.bf16.msra.mxu0 %v504
  %1502 = vmatpush.bf16.msra.mxu0 %v500
  %1503 = vmatpush.bf16.msra.mxu0 %v496
  %1504 = vmatpush.bf16.msra.mxu0 %v492
  %1505 = vmatpush.bf16.msra.mxu0 %v488
  %1506 = vmatmul.bf16.gmra.mxu0 %v1418
  %v1507 = vpop.f32.mrf.mxu0
  %v1508 = vadd.f32 %v288, %v1507
  %v1509 = vpop.f32.mrf.mxu0
  %1510 = vdwg.mxu0
  %1511 = vmatpush.bf16.msra.mxu0 %v548
  %1512 = vmatpush.bf16.msra.mxu0 %v544
  %1513 = vmatpush.bf16.msra.mxu0 %v540
  %1514 = vmatpush.bf16.msra.mxu0 %v536
  %1515 = vmatpush.bf16.msra.mxu0 %v532
  %1516 = vmatpush.bf16.msra.mxu0 %v528
  %1517 = vmatpush.bf16.msra.mxu0 %v524
  %1518 = vmatpush.bf16.msra.mxu0 %v520
  %1519 = vmatmul.bf16.gmra.mxu0 %v1419
  %v1520 = vpop.f32.mrf.mxu0
  %v1521 = vadd.f32 %v1508, %v1520
  %v1522 = vpop.f32.mrf.mxu0
  %1523 = vdwg.mxu0
  %s1524 = smul.u32 4, 4
  %s1525 = smul.addr %s1524, 8
  %s1526 = scalar_lea.vmem [#allocation2], %s1525
  %v1527 = vld [vmem:[%s1526] sm:$0xff]
  %v1528 = vld [vmem:[%s1526 + $0x8] sm:$0xff]
  %v1529 = vld [vmem:[%s1526 + $0x10] sm:$0xff]
  %v1530 = vld [vmem:[%s1526 + $0x18] sm:$0xff]
  %1531 = vmatpush.bf16.msra.mxu0 %v880
  %1532 = vmatpush.bf16.msra.mxu0 %v876
  %1533 = vmatpush.bf16.msra.mxu0 %v872
  %1534 = vmatpush.bf16.msra.mxu0 %v868
  %1535 = vmatpush.bf16.msra.mxu0 %v864
  %1536 = vmatpush.bf16.msra.mxu0 %v860
  %1537 = vmatpush.bf16.msra.mxu0 %v856
  %1538 = vmatpush.bf16.msra.mxu0 %v852
  %1539 = vmatmul.bf16.gmra.mxu0 %v1418
  %v1540 = vpop.f32.mrf.mxu0
  %v1541 = vadd.f32 0.0, %v1540
  %v1542 = vpop.f32.mrf.mxu0
  %1543 = vdwg.mxu0
  %1544 = vmatpush.bf16.msra.mxu0 %v881
  %1545 = vmatpush.bf16.msra.mxu0 %v877
  %1546 = vmatpush.bf16.msra.mxu0 %v873
  %1547 = vmatpush.bf16.msra.mxu0 %v869
  %1548 = vmatpush.bf16.msra.mxu0 %v865
  %1549 = vmatpush.bf16.msra.mxu0 %v861
  %1550 = vmatpush.bf16.msra.mxu0 %v857
  %1551 = vmatpush.bf16.msra.mxu0 %v853
  %1552 = vmatmul.bf16.gmra.mxu0 %v1418
  %v1553 = vpop.f32.mrf.mxu0
  %v1554 = vadd.f32 0.0, %v1553
  %v1555 = vpop.f32.mrf.mxu0
  %1556 = vdwg.mxu0
  %1557 = vmatpush.bf16.msra.mxu0 %v882
  %1558 = vmatpush.bf16.msra.mxu0 %v878
  %1559 = vmatpush.bf16.msra.mxu0 %v874
  %1560 = vmatpush.bf16.msra.mxu0 %v870
  %1561 = vmatpush.bf16.msra.mxu0 %v866
  %1562 = vmatpush.bf16.msra.mxu0 %v862
  %1563 = vmatpush.bf16.msra.mxu0 %v858
  %1564 = vmatpush.bf16.msra.mxu0 %v854
  %1565 = vmatmul.bf16.gmra.mxu0 %v1418
  %v1566 = vpop.f32.mrf.mxu0
  %v1567 = vadd.f32 0.0, %v1566
  %v1568 = vpop.f32.mrf.mxu0
  %1569 = vdwg.mxu0
  %1570 = vmatpush.bf16.msra.mxu0 %v883
  %1571 = vmatpush.bf16.msra.mxu0 %v879
  %1572 = vmatpush.bf16.msra.mxu0 %v875
  %1573 = vmatpush.bf16.msra.mxu0 %v871
  %1574 = vmatpush.bf16.msra.mxu0 %v867
  %1575 = vmatpush.bf16.msra.mxu0 %v863
  %1576 = vmatpush.bf16.msra.mxu0 %v859
  %1577 = vmatpush.bf16.msra.mxu0 %v855
  %1578 = vmatmul.bf16.gmra.mxu0 %v1418
  %v1579 = vpop.f32.mrf.mxu0
  %v1580 = vadd.f32 0.0, %v1579
  %v1581 = vpop.f32.mrf.mxu0
  %1582 = vdwg.mxu0
  %v1583 = vadd.f32 %v1527, %v1541
  %v1584 = vadd.f32 %v1528, %v1554
  %v1585 = vadd.f32 %v1529, %v1567
  %v1586 = vadd.f32 %v1530, %v1580
  %v1587 = vmul.f32 %v1583, 0.5
  %v1588 = vmul.f32 %v1584, 0.5
  %v1589 = vmul.f32 %v1585, 0.5
  %v1590 = vtanh.pop %v1587
  %v1591 = vtanh.pop %v1588
  %v1592 = vtanh.pop %v1589
  %v1593 = vmul.f32 %v1590, 0.5
  %v1594 = vmul.f32 %v1591, 0.5
  %v1595 = vmul.f32 %v1592, 0.5
  %v1596 = vadd.f32 %v1593, 0.5
  %v1597 = vadd.f32 %v1594, 0.5
  %v1598 = vadd.f32 %v1595, 0.5
  %v1599 = vtanh.pop %v1586
  %v1600 = vmul.f32 %v1597, %v1397
  %v1601 = vmul.f32 %v1596, %v1599
  %v1602 = vadd.f32 %v1600, %v1601
  %v1603 = vtanh.pop %v1602
  %v1604 = vmul.f32 %v1598, %v1603
  %v1605 = vmul.f32 %v1443, 0.5
  %v1606 = vmul.f32 %v1469, 0.5
  %v1607 = vmul.f32 %v1495, 0.5
  %v1608 = vtanh.pop %v1605
  %v1609 = vtanh.pop %v1606
  %v1610 = vtanh.pop %v1607
  %v1611 = vmul.f32 %v1608, 0.5
  %v1612 = vmul.f32 %v1609, 0.5
  %v1613 = vmul.f32 %v1610, 0.5
  %v1614 = vadd.f32 %v1611, 0.5
  %v1615 = vadd.f32 %v1612, 0.5
  %v1616 = vadd.f32 %v1613, 0.5
  %v1617 = vtanh.pop %v1521
  %v1618 = vmul.f32 %v1615, %v1415
  %v1619 = vmul.f32 %v1614, %v1617
  %v1620 = vadd.f32 %v1618, %v1619
  %v1621 = vtanh.pop %v1620
  %v1622 = vmul.f32 %v1616, %v1621
  %v1623 = vpack.c.bf16 %v1604, %v1604
  %v1624 = vpack.c.bf16 %v1622, %v1622
  %1625 = vmatpush.bf16.msra.mxu0 %v513
  %1626 = vmatpush.bf16.msra.mxu0 %v509
  %1627 = vmatpush.bf16.msra.mxu0 %v505
  %1628 = vmatpush.bf16.msra.mxu0 %v501
  %1629 = vmatpush.bf16.msra.mxu0 %v497
  %1630 = vmatpush.bf16.msra.mxu0 %v493
  %1631 = vmatpush.bf16.msra.mxu0 %v489
  %1632 = vmatpush.bf16.msra.mxu0 %v485
  %1633 = vmatmul.bf16.gmra.mxu0 %v1623
  %v1634 = vpop.f32.mrf.mxu0
  %v1635 = vadd.f32 %v285, %v1634
  %v1636 = vpop.f32.mrf.mxu0
  %1637 = vdwg.mxu0
  %1638 = vmatpush.bf16.msra.mxu0 %v545
  %1639 = vmatpush.bf16.msra.mxu0 %v541
  %1640 = vmatpush.bf16.msra.mxu0 %v537
  %1641 = vmatpush.bf16.msra.mxu0 %v533
  %1642 = vmatpush.bf16.msra.mxu0 %v529
  %1643 = vmatpush.bf16.msra.mxu0 %v525
  %1644 = vmatpush.bf16.msra.mxu0 %v521
  %1645 = vmatpush.bf16.msra.mxu0 %v517
  %1646 = vmatmul.bf16.gmra.mxu0 %v1624
  %v1647 = vpop.f32.mrf.mxu0
  %v1648 = vadd.f32 %v1635, %v1647
  %v1649 = vpop.f32.mrf.mxu0
  %1650 = vdwg.mxu0
  %1651 = vmatpush.bf16.msra.mxu0 %v514
  %1652 = vmatpush.bf16.msra.mxu0 %v510
  %1653 = vmatpush.bf16.msra.mxu0 %v506
  %1654 = vmatpush.bf16.msra.mxu0 %v502
  %1655 = vmatpush.bf16.msra.mxu0 %v498
  %1656 = vmatpush.bf16.msra.mxu0 %v494
  %1657 = vmatpush.bf16.msra.mxu0 %v490
  %1658 = vmatpush.bf16.msra.mxu0 %v486
  %1659 = vmatmul.bf16.gmra.mxu0 %v1623
  %v1660 = vpop.f32.mrf.mxu0
  %v1661 = vadd.f32 %v286, %v1660
  %v1662 = vpop.f32.mrf.mxu0
  %1663 = vdwg.mxu0
  %1664 = vmatpush.bf16.msra.mxu0 %v546
  %1665 = vmatpush.bf16.msra.mxu0 %v542
  %1666 = vmatpush.bf16.msra.mxu0 %v538
  %1667 = vmatpush.bf16.msra.mxu0 %v534
  %1668 = vmatpush.bf16.msra.mxu0 %v530
  %1669 = vmatpush.bf16.msra.mxu0 %v526
  %1670 = vmatpush.bf16.msra.mxu0 %v522
  %1671 = vmatpush.bf16.msra.mxu0 %v518
  %1672 = vmatmul.bf16.gmra.mxu0 %v1624
  %v1673 = vpop.f32.mrf.mxu0
  %v1674 = vadd.f32 %v1661, %v1673
  %v1675 = vpop.f32.mrf.mxu0
  %1676 = vdwg.mxu0
  %1677 = vmatpush.bf16.msra.mxu0 %v515
  %1678 = vmatpush.bf16.msra.mxu0 %v511
  %1679 = vmatpush.bf16.msra.mxu0 %v507
  %1680 = vmatpush.bf16.msra.mxu0 %v503
  %1681 = vmatpush.bf16.msra.mxu0 %v499
  %1682 = vmatpush.bf16.msra.mxu0 %v495
  %1683 = vmatpush.bf16.msra.mxu0 %v491
  %1684 = vmatpush.bf16.msra.mxu0 %v487
  %1685 = vmatmul.bf16.gmra.mxu0 %v1623
  %v1686 = vpop.f32.mrf.mxu0
  %v1687 = vadd.f32 %v287, %v1686
  %v1688 = vpop.f32.mrf.mxu0
  %1689 = vdwg.mxu0
  %1690 = vmatpush.bf16.msra.mxu0 %v547
  %1691 = vmatpush.bf16.msra.mxu0 %v543
  %1692 = vmatpush.bf16.msra.mxu0 %v539
  %1693 = vmatpush.bf16.msra.mxu0 %v535
  %1694 = vmatpush.bf16.msra.mxu0 %v531
  %1695 = vmatpush.bf16.msra.mxu0 %v527
  %1696 = vmatpush.bf16.msra.mxu0 %v523
  %1697 = vmatpush.bf16.msra.mxu0 %v519
  %1698 = vmatmul.bf16.gmra.mxu0 %v1624
  %v1699 = vpop.f32.mrf.mxu0
  %v1700 = vadd.f32 %v1687, %v1699
  %v1701 = vpop.f32.mrf.mxu0
  %1702 = vdwg.mxu0
  %1703 = vmatpush.bf16.msra.mxu0 %v516
  %1704 = vmatpush.bf16.msra.mxu0 %v512
  %1705 = vmatpush.bf16.msra.mxu0 %v508
  %1706 = vmatpush.bf16.msra.mxu0 %v504
  %1707 = vmatpush.bf16.msra.mxu0 %v500
  %1708 = vmatpush.bf16.msra.mxu0 %v496
  %1709 = vmatpush.bf16.msra.mxu0 %v492
  %1710 = vmatpush.bf16.msra.mxu0 %v488
  %1711 = vmatmul.bf16.gmra.mxu0 %v1623
  %v1712 = vpop.f32.mrf.mxu0
  %v1713 = vadd.f32 %v288, %v1712
  %v1714 = vpop.f32.mrf.mxu0
  %1715 = vdwg.mxu0
  %1716 = vmatpush.bf16.msra.mxu0 %v548
  %1717 = vmatpush.bf16.msra.mxu0 %v544
  %1718 = vmatpush.bf16.msra.mxu0 %v540
  %1719 = vmatpush.bf16.msra.mxu0 %v536
  %1720 = vmatpush.bf16.msra.mxu0 %v532
  %1721 = vmatpush.bf16.msra.mxu0 %v528
  %1722 = vmatpush.bf16.msra.mxu0 %v524
  %1723 = vmatpush.bf16.msra.mxu0 %v520
  %1724 = vmatmul.bf16.gmra.mxu0 %v1624
  %v1725 = vpop.f32.mrf.mxu0
  %v1726 = vadd.f32 %v1713, %v1725
  %v1727 = vpop.f32.mrf.mxu0
  %1728 = vdwg.mxu0
  %s1729 = smul.u32 5, 4
  %s1730 = smul.addr %s1729, 8
  %s1731 = scalar_lea.vmem [#allocation2], %s1730
  %v1732 = vld [vmem:[%s1731] sm:$0xff]
  %v1733 = vld [vmem:[%s1731 + $0x8] sm:$0xff]
  %v1734 = vld [vmem:[%s1731 + $0x10] sm:$0xff]
  %v1735 = vld [vmem:[%s1731 + $0x18] sm:$0xff]
  %1736 = vmatpush.bf16.msra.mxu0 %v880
  %1737 = vmatpush.bf16.msra.mxu0 %v876
  %1738 = vmatpush.bf16.msra.mxu0 %v872
  %1739 = vmatpush.bf16.msra.mxu0 %v868
  %1740 = vmatpush.bf16.msra.mxu0 %v864
  %1741 = vmatpush.bf16.msra.mxu0 %v860
  %1742 = vmatpush.bf16.msra.mxu0 %v856
  %1743 = vmatpush.bf16.msra.mxu0 %v852
  %1744 = vmatmul.bf16.gmra.mxu0 %v1623
  %v1745 = vpop.f32.mrf.mxu0
  %v1746 = vadd.f32 0.0, %v1745
  %v1747 = vpop.f32.mrf.mxu0
  %1748 = vdwg.mxu0
  %1749 = vmatpush.bf16.msra.mxu0 %v881
  %1750 = vmatpush.bf16.msra.mxu0 %v877
  %1751 = vmatpush.bf16.msra.mxu0 %v873
  %1752 = vmatpush.bf16.msra.mxu0 %v869
  %1753 = vmatpush.bf16.msra.mxu0 %v865
  %1754 = vmatpush.bf16.msra.mxu0 %v861
  %1755 = vmatpush.bf16.msra.mxu0 %v857
  %1756 = vmatpush.bf16.msra.mxu0 %v853
  %1757 = vmatmul.bf16.gmra.mxu0 %v1623
  %v1758 = vpop.f32.mrf.mxu0
  %v1759 = vadd.f32 0.0, %v1758
  %v1760 = vpop.f32.mrf.mxu0
  %1761 = vdwg.mxu0
  %1762 = vmatpush.bf16.msra.mxu0 %v882
  %1763 = vmatpush.bf16.msra.mxu0 %v878
  %1764 = vmatpush.bf16.msra.mxu0 %v874
  %1765 = vmatpush.bf16.msra.mxu0 %v870
  %1766 = vmatpush.bf16.msra.mxu0 %v866
  %1767 = vmatpush.bf16.msra.mxu0 %v862
  %1768 = vmatpush.bf16.msra.mxu0 %v858
  %1769 = vmatpush.bf16.msra.mxu0 %v854
  %1770 = vmatmul.bf16.gmra.mxu0 %v1623
  %v1771 = vpop.f32.mrf.mxu0
  %v1772 = vadd.f32 0.0, %v1771
  %v1773 = vpop.f32.mrf.mxu0
  %1774 = vdwg.mxu0
  %1775 = vmatpush.bf16.msra.mxu0 %v883
  %1776 = vmatpush.bf16.msra.mxu0 %v879
  %1777 = vmatpush.bf16.msra.mxu0 %v875
  %1778 = vmatpush.bf16.msra.mxu0 %v871
  %1779 = vmatpush.bf16.msra.mxu0 %v867
  %1780 = vmatpush.bf16.msra.mxu0 %v863
  %1781 = vmatpush.bf16.msra.mxu0 %v859
  %1782 = vmatpush.bf16.msra.mxu0 %v855
  %1783 = vmatmul.bf16.gmra.mxu0 %v1623
  %v1784 = vpop.f32.mrf.mxu0
  %v1785 = vadd.f32 0.0, %v1784
  %v1786 = vpop.f32.mrf.mxu0
  %1787 = vdwg.mxu0
  %v1788 = vadd.f32 %v1732, %v1746
  %v1789 = vadd.f32 %v1733, %v1759
  %v1790 = vadd.f32 %v1734, %v1772
  %v1791 = vadd.f32 %v1735, %v1785
  %v1792 = vmul.f32 %v1788, 0.5
  %v1793 = vmul.f32 %v1789, 0.5
  %v1794 = vmul.f32 %v1790, 0.5
  %v1795 = vtanh.pop %v1792
  %v1796 = vtanh.pop %v1793
  %v1797 = vtanh.pop %v1794
  %v1798 = vmul.f32 %v1795, 0.5
  %v1799 = vmul.f32 %v1796, 0.5
  %v1800 = vmul.f32 %v1797, 0.5
  %v1801 = vadd.f32 %v1798, 0.5
  %v1802 = vadd.f32 %v1799, 0.5
  %v1803 = vadd.f32 %v1800, 0.5
  %v1804 = vtanh.pop %v1791
  %v1805 = vmul.f32 %v1802, %v1602
  %v1806 = vmul.f32 %v1801, %v1804
  %v1807 = vadd.f32 %v1805, %v1806
  %v1808 = vtanh.pop %v1807
  %v1809 = vmul.f32 %v1803, %v1808
  %v1810 = vmul.f32 %v1648, 0.5
  %v1811 = vmul.f32 %v1674, 0.5
  %v1812 = vmul.f32 %v1700, 0.5
  %v1813 = vtanh.pop %v1810
  %v1814 = vtanh.pop %v1811
  %v1815 = vtanh.pop %v1812
  %v1816 = vmul.f32 %v1813, 0.5
  %v1817 = vmul.f32 %v1814, 0.5
  %v1818 = vmul.f32 %v1815, 0.5
  %v1819 = vadd.f32 %v1816, 0.5
  %v1820 = vadd.f32 %v1817, 0.5
  %v1821 = vadd.f32 %v1818, 0.5
  %v1822 = vtanh.pop %v1726
  %v1823 = vmul.f32 %v1820, %v1620
  %v1824 = vmul.f32 %v1819, %v1822
  %v1825 = vadd.f32 %v1823, %v1824
  %v1826 = vtanh.pop %v1825
  %v1827 = vmul.f32 %v1821, %v1826
  %v1828 = vpack.c.bf16 %v1809, %v1809
  %v1829 = vpack.c.bf16 %v1827, %v1827
  %1830 = vmatpush.bf16.msra.mxu0 %v513
  %1831 = vmatpush.bf16.msra.mxu0 %v509
  %1832 = vmatpush.bf16.msra.mxu0 %v505
  %1833 = vmatpush.bf16.msra.mxu0 %v501
  %1834 = vmatpush.bf16.msra.mxu0 %v497
  %1835 = vmatpush.bf16.msra.mxu0 %v493
  %1836 = vmatpush.bf16.msra.mxu0 %v489
  %1837 = vmatpush.bf16.msra.mxu0 %v485
  %1838 = vmatmul.bf16.gmra.mxu0 %v1828
  %v1839 = vpop.f32.mrf.mxu0
  %v1840 = vadd.f32 %v285, %v1839
  %v1841 = vpop.f32.mrf.mxu0
  %1842 = vdwg.mxu0
  %1843 = vmatpush.bf16.msra.mxu0 %v545
  %1844 = vmatpush.bf16.msra.mxu0 %v541
  %1845 = vmatpush.bf16.msra.mxu0 %v537
  %1846 = vmatpush.bf16.msra.mxu0 %v533
  %1847 = vmatpush.bf16.msra.mxu0 %v529
  %1848 = vmatpush.bf16.msra.mxu0 %v525
  %1849 = vmatpush.bf16.msra.mxu0 %v521
  %1850 = vmatpush.bf16.msra.mxu0 %v517
  %1851 = vmatmul.bf16.gmra.mxu0 %v1829
  %v1852 = vpop.f32.mrf.mxu0
  %v1853 = vadd.f32 %v1840, %v1852
  %v1854 = vpop.f32.mrf.mxu0
  %1855 = vdwg.mxu0
  %1856 = vmatpush.bf16.msra.mxu0 %v514
  %1857 = vmatpush.bf16.msra.mxu0 %v510
  %1858 = vmatpush.bf16.msra.mxu0 %v506
  %1859 = vmatpush.bf16.msra.mxu0 %v502
  %1860 = vmatpush.bf16.msra.mxu0 %v498
  %1861 = vmatpush.bf16.msra.mxu0 %v494
  %1862 = vmatpush.bf16.msra.mxu0 %v490
  %1863 = vmatpush.bf16.msra.mxu0 %v486
  %1864 = vmatmul.bf16.gmra.mxu0 %v1828
  %v1865 = vpop.f32.mrf.mxu0
  %v1866 = vadd.f32 %v286, %v1865
  %v1867 = vpop.f32.mrf.mxu0
  %1868 = vdwg.mxu0
  %1869 = vmatpush.bf16.msra.mxu0 %v546
  %1870 = vmatpush.bf16.msra.mxu0 %v542
  %1871 = vmatpush.bf16.msra.mxu0 %v538
  %1872 = vmatpush.bf16.msra.mxu0 %v534
  %1873 = vmatpush.bf16.msra.mxu0 %v530
  %1874 = vmatpush.bf16.msra.mxu0 %v526
  %1875 = vmatpush.bf16.msra.mxu0 %v522
  %1876 = vmatpush.bf16.msra.mxu0 %v518
  %1877 = vmatmul.bf16.gmra.mxu0 %v1829
  %v1878 = vpop.f32.mrf.mxu0
  %v1879 = vadd.f32 %v1866, %v1878
  %v1880 = vpop.f32.mrf.mxu0
  %1881 = vdwg.mxu0
  %1882 = vmatpush.bf16.msra.mxu0 %v515
  %1883 = vmatpush.bf16.msra.mxu0 %v511
  %1884 = vmatpush.bf16.msra.mxu0 %v507
  %1885 = vmatpush.bf16.msra.mxu0 %v503
  %1886 = vmatpush.bf16.msra.mxu0 %v499
  %1887 = vmatpush.bf16.msra.mxu0 %v495
  %1888 = vmatpush.bf16.msra.mxu0 %v491
  %1889 = vmatpush.bf16.msra.mxu0 %v487
  %1890 = vmatmul.bf16.gmra.mxu0 %v1828
  %v1891 = vpop.f32.mrf.mxu0
  %v1892 = vadd.f32 %v287, %v1891
  %v1893 = vpop.f32.mrf.mxu0
  %1894 = vdwg.mxu0
  %1895 = vmatpush.bf16.msra.mxu0 %v547
  %1896 = vmatpush.bf16.msra.mxu0 %v543
  %1897 = vmatpush.bf16.msra.mxu0 %v539
  %1898 = vmatpush.bf16.msra.mxu0 %v535
  %1899 = vmatpush.bf16.msra.mxu0 %v531
  %1900 = vmatpush.bf16.msra.mxu0 %v527
  %1901 = vmatpush.bf16.msra.mxu0 %v523
  %1902 = vmatpush.bf16.msra.mxu0 %v519
  %1903 = vmatmul.bf16.gmra.mxu0 %v1829
  %v1904 = vpop.f32.mrf.mxu0
  %v1905 = vadd.f32 %v1892, %v1904
  %v1906 = vpop.f32.mrf.mxu0
  %1907 = vdwg.mxu0
  %1908 = vmatpush.bf16.msra.mxu0 %v516
  %1909 = vmatpush.bf16.msra.mxu0 %v512
  %1910 = vmatpush.bf16.msra.mxu0 %v508
  %1911 = vmatpush.bf16.msra.mxu0 %v504
  %1912 = vmatpush.bf16.msra.mxu0 %v500
  %1913 = vmatpush.bf16.msra.mxu0 %v496
  %1914 = vmatpush.bf16.msra.mxu0 %v492
  %1915 = vmatpush.bf16.msra.mxu0 %v488
  %1916 = vmatmul.bf16.gmra.mxu0 %v1828
  %v1917 = vpop.f32.mrf.mxu0
  %v1918 = vadd.f32 %v288, %v1917
  %v1919 = vpop.f32.mrf.mxu0
  %1920 = vdwg.mxu0
  %1921 = vmatpush.bf16.msra.mxu0 %v548
  %1922 = vmatpush.bf16.msra.mxu0 %v544
  %1923 = vmatpush.bf16.msra.mxu0 %v540
  %1924 = vmatpush.bf16.msra.mxu0 %v536
  %1925 = vmatpush.bf16.msra.mxu0 %v532
  %1926 = vmatpush.bf16.msra.mxu0 %v528
  %1927 = vmatpush.bf16.msra.mxu0 %v524
  %1928 = vmatpush.bf16.msra.mxu0 %v520
  %1929 = vmatmul.bf16.gmra.mxu0 %v1829
  %v1930 = vpop.f32.mrf.mxu0
  %v1931 = vadd.f32 %v1918, %v1930
  %v1932 = vpop.f32.mrf.mxu0
  %1933 = vdwg.mxu0
  %s1934 = smul.u32 6, 4
  %s1935 = smul.addr %s1934, 8
  %s1936 = scalar_lea.vmem [#allocation2], %s1935
  %v1937 = vld [vmem:[%s1936] sm:$0xff]
  %v1938 = vld [vmem:[%s1936 + $0x8] sm:$0xff]
  %v1939 = vld [vmem:[%s1936 + $0x10] sm:$0xff]
  %v1940 = vld [vmem:[%s1936 + $0x18] sm:$0xff]
  %1941 = vmatpush.bf16.msra.mxu0 %v880
  %1942 = vmatpush.bf16.msra.mxu0 %v876
  %1943 = vmatpush.bf16.msra.mxu0 %v872
  %1944 = vmatpush.bf16.msra.mxu0 %v868
  %1945 = vmatpush.bf16.msra.mxu0 %v864
  %1946 = vmatpush.bf16.msra.mxu0 %v860
  %1947 = vmatpush.bf16.msra.mxu0 %v856
  %1948 = vmatpush.bf16.msra.mxu0 %v852
  %1949 = vmatmul.bf16.gmra.mxu0 %v1828
  %v1950 = vpop.f32.mrf.mxu0
  %v1951 = vadd.f32 0.0, %v1950
  %v1952 = vpop.f32.mrf.mxu0
  %1953 = vdwg.mxu0
  %1954 = vmatpush.bf16.msra.mxu0 %v881
  %1955 = vmatpush.bf16.msra.mxu0 %v877
  %1956 = vmatpush.bf16.msra.mxu0 %v873
  %1957 = vmatpush.bf16.msra.mxu0 %v869
  %1958 = vmatpush.bf16.msra.mxu0 %v865
  %1959 = vmatpush.bf16.msra.mxu0 %v861
  %1960 = vmatpush.bf16.msra.mxu0 %v857
  %1961 = vmatpush.bf16.msra.mxu0 %v853
  %1962 = vmatmul.bf16.gmra.mxu0 %v1828
  %v1963 = vpop.f32.mrf.mxu0
  %v1964 = vadd.f32 0.0, %v1963
  %v1965 = vpop.f32.mrf.mxu0
  %1966 = vdwg.mxu0
  %1967 = vmatpush.bf16.msra.mxu0 %v882
  %1968 = vmatpush.bf16.msra.mxu0 %v878
  %1969 = vmatpush.bf16.msra.mxu0 %v874
  %1970 = vmatpush.bf16.msra.mxu0 %v870
  %1971 = vmatpush.bf16.msra.mxu0 %v866
  %1972 = vmatpush.bf16.msra.mxu0 %v862
  %1973 = vmatpush.bf16.msra.mxu0 %v858
  %1974 = vmatpush.bf16.msra.mxu0 %v854
  %1975 = vmatmul.bf16.gmra.mxu0 %v1828
  %v1976 = vpop.f32.mrf.mxu0
  %v1977 = vadd.f32 0.0, %v1976
  %v1978 = vpop.f32.mrf.mxu0
  %1979 = vdwg.mxu0
  %1980 = vmatpush.bf16.msra.mxu0 %v883
  %1981 = vmatpush.bf16.msra.mxu0 %v879
  %1982 = vmatpush.bf16.msra.mxu0 %v875
  %1983 = vmatpush.bf16.msra.mxu0 %v871
  %1984 = vmatpush.bf16.msra.mxu0 %v867
  %1985 = vmatpush.bf16.msra.mxu0 %v863
  %1986 = vmatpush.bf16.msra.mxu0 %v859
  %1987 = vmatpush.bf16.msra.mxu0 %v855
  %1988 = vmatmul.bf16.gmra.mxu0 %v1828
  %v1989 = vpop.f32.mrf.mxu0
  %v1990 = vadd.f32 0.0, %v1989
  %v1991 = vpop.f32.mrf.mxu0
  %1992 = vdwg.mxu0
  %v1993 = vadd.f32 %v1937, %v1951
  %v1994 = vadd.f32 %v1938, %v1964
  %v1995 = vadd.f32 %v1939, %v1977
  %v1996 = vadd.f32 %v1940, %v1990
  %v1997 = vmul.f32 %v1993, 0.5
  %v1998 = vmul.f32 %v1994, 0.5
  %v1999 = vmul.f32 %v1995, 0.5
  %v2000 = vtanh.pop %v1997
  %v2001 = vtanh.pop %v1998
  %v2002 = vtanh.pop %v1999
  %v2003 = vmul.f32 %v2000, 0.5
  %v2004 = vmul.f32 %v2001, 0.5
  %v2005 = vmul.f32 %v2002, 0.5
  %v2006 = vadd.f32 %v2003, 0.5
  %v2007 = vadd.f32 %v2004, 0.5
  %v2008 = vadd.f32 %v2005, 0.5
  %v2009 = vtanh.pop %v1996
  %v2010 = vmul.f32 %v2007, %v1807
  %v2011 = vmul.f32 %v2006, %v2009
  %v2012 = vadd.f32 %v2010, %v2011
  %v2013 = vtanh.pop %v2012
  %v2014 = vmul.f32 %v2008, %v2013
  %v2015 = vmul.f32 %v1853, 0.5
  %v2016 = vmul.f32 %v1879, 0.5
  %v2017 = vmul.f32 %v1905, 0.5
  %v2018 = vtanh.pop %v2015
  %v2019 = vtanh.pop %v2016
  %v2020 = vtanh.pop %v2017
  %v2021 = vmul.f32 %v2018, 0.5
  %v2022 = vmul.f32 %v2019, 0.5
  %v2023 = vmul.f32 %v2020, 0.5
  %v2024 = vadd.f32 %v2021, 0.5
  %v2025 = vadd.f32 %v2022, 0.5
  %v2026 = vadd.f32 %v2023, 0.5
  %v2027 = vtanh.pop %v1931
  %v2028 = vmul.f32 %v2025, %v1825
  %v2029 = vmul.f32 %v2024, %v2027
  %v2030 = vadd.f32 %v2028, %v2029
  %v2031 = vtanh.pop %v2030
  %v2032 = vmul.f32 %v2026, %v2031
  %v2033 = vpack.c.bf16 %v2014, %v2014
  %v2034 = vpack.c.bf16 %v2032, %v2032
  %2035 = vmatpush.bf16.msra.mxu0 %v513
  %2036 = vmatpush.bf16.msra.mxu0 %v509
  %2037 = vmatpush.bf16.msra.mxu0 %v505
  %2038 = vmatpush.bf16.msra.mxu0 %v501
  %2039 = vmatpush.bf16.msra.mxu0 %v497
  %2040 = vmatpush.bf16.msra.mxu0 %v493
  %2041 = vmatpush.bf16.msra.mxu0 %v489
  %2042 = vmatpush.bf16.msra.mxu0 %v485
  %2043 = vmatmul.bf16.gmra.mxu0 %v2033
  %v2044 = vpop.f32.mrf.mxu0
  %v2045 = vadd.f32 %v285, %v2044
  %v2046 = vpop.f32.mrf.mxu0
  %2047 = vdwg.mxu0
  %2048 = vmatpush.bf16.msra.mxu0 %v545
  %2049 = vmatpush.bf16.msra.mxu0 %v541
  %2050 = vmatpush.bf16.msra.mxu0 %v537
  %2051 = vmatpush.bf16.msra.mxu0 %v533
  %2052 = vmatpush.bf16.msra.mxu0 %v529
  %2053 = vmatpush.bf16.msra.mxu0 %v525
  %2054 = vmatpush.bf16.msra.mxu0 %v521
  %2055 = vmatpush.bf16.msra.mxu0 %v517
  %2056 = vmatmul.bf16.gmra.mxu0 %v2034
  %v2057 = vpop.f32.mrf.mxu0
  %v2058 = vadd.f32 %v2045, %v2057
  %v2059 = vpop.f32.mrf.mxu0
  %2060 = vdwg.mxu0
  %2061 = vmatpush.bf16.msra.mxu0 %v514
  %2062 = vmatpush.bf16.msra.mxu0 %v510
  %2063 = vmatpush.bf16.msra.mxu0 %v506
  %2064 = vmatpush.bf16.msra.mxu0 %v502
  %2065 = vmatpush.bf16.msra.mxu0 %v498
  %2066 = vmatpush.bf16.msra.mxu0 %v494
  %2067 = vmatpush.bf16.msra.mxu0 %v490
  %2068 = vmatpush.bf16.msra.mxu0 %v486
  %2069 = vmatmul.bf16.gmra.mxu0 %v2033
  %v2070 = vpop.f32.mrf.mxu0
  %v2071 = vadd.f32 %v286, %v2070
  %v2072 = vpop.f32.mrf.mxu0
  %2073 = vdwg.mxu0
  %2074 = vmatpush.bf16.msra.mxu0 %v546
  %2075 = vmatpush.bf16.msra.mxu0 %v542
  %2076 = vmatpush.bf16.msra.mxu0 %v538
  %2077 = vmatpush.bf16.msra.mxu0 %v534
  %2078 = vmatpush.bf16.msra.mxu0 %v530
  %2079 = vmatpush.bf16.msra.mxu0 %v526
  %2080 = vmatpush.bf16.msra.mxu0 %v522
  %2081 = vmatpush.bf16.msra.mxu0 %v518
  %2082 = vmatmul.bf16.gmra.mxu0 %v2034
  %v2083 = vpop.f32.mrf.mxu0
  %v2084 = vadd.f32 %v2071, %v2083
  %v2085 = vpop.f32.mrf.mxu0
  %2086 = vdwg.mxu0
  %2087 = vmatpush.bf16.msra.mxu0 %v515
  %2088 = vmatpush.bf16.msra.mxu0 %v511
  %2089 = vmatpush.bf16.msra.mxu0 %v507
  %2090 = vmatpush.bf16.msra.mxu0 %v503
  %2091 = vmatpush.bf16.msra.mxu0 %v499
  %2092 = vmatpush.bf16.msra.mxu0 %v495
  %2093 = vmatpush.bf16.msra.mxu0 %v491
  %2094 = vmatpush.bf16.msra.mxu0 %v487
  %2095 = vmatmul.bf16.gmra.mxu0 %v2033
  %v2096 = vpop.f32.mrf.mxu0
  %v2097 = vadd.f32 %v287, %v2096
  %v2098 = vpop.f32.mrf.mxu0
  %2099 = vdwg.mxu0
  %2100 = vmatpush.bf16.msra.mxu0 %v547
  %2101 = vmatpush.bf16.msra.mxu0 %v543
  %2102 = vmatpush.bf16.msra.mxu0 %v539
  %2103 = vmatpush.bf16.msra.mxu0 %v535
  %2104 = vmatpush.bf16.msra.mxu0 %v531
  %2105 = vmatpush.bf16.msra.mxu0 %v527
  %2106 = vmatpush.bf16.msra.mxu0 %v523
  %2107 = vmatpush.bf16.msra.mxu0 %v519
  %2108 = vmatmul.bf16.gmra.mxu0 %v2034
  %v2109 = vpop.f32.mrf.mxu0
  %v2110 = vadd.f32 %v2097, %v2109
  %v2111 = vpop.f32.mrf.mxu0
  %2112 = vdwg.mxu0
  %2113 = vmatpush.bf16.msra.mxu0 %v516
  %2114 = vmatpush.bf16.msra.mxu0 %v512
  %2115 = vmatpush.bf16.msra.mxu0 %v508
  %2116 = vmatpush.bf16.msra.mxu0 %v504
  %2117 = vmatpush.bf16.msra.mxu0 %v500
  %2118 = vmatpush.bf16.msra.mxu0 %v496
  %2119 = vmatpush.bf16.msra.mxu0 %v492
  %2120 = vmatpush.bf16.msra.mxu0 %v488
  %2121 = vmatmul.bf16.gmra.mxu0 %v2033
  %v2122 = vpop.f32.mrf.mxu0
  %v2123 = vadd.f32 %v288, %v2122
  %v2124 = vpop.f32.mrf.mxu0
  %2125 = vdwg.mxu0
  %2126 = vmatpush.bf16.msra.mxu0 %v548
  %2127 = vmatpush.bf16.msra.mxu0 %v544
  %2128 = vmatpush.bf16.msra.mxu0 %v540
  %2129 = vmatpush.bf16.msra.mxu0 %v536
  %2130 = vmatpush.bf16.msra.mxu0 %v532
  %2131 = vmatpush.bf16.msra.mxu0 %v528
  %2132 = vmatpush.bf16.msra.mxu0 %v524
  %2133 = vmatpush.bf16.msra.mxu0 %v520
  %2134 = vmatmul.bf16.gmra.mxu0 %v2034
  %v2135 = vpop.f32.mrf.mxu0
  %v2136 = vadd.f32 %v2123, %v2135
  %v2137 = vpop.f32.mrf.mxu0
  %2138 = vdwg.mxu0
  %s2139 = smul.u32 7, 4
  %s2140 = smul.addr %s2139, 8
  %s2141 = scalar_lea.vmem [#allocation2], %s2140
  %v2142 = vld [vmem:[%s2141] sm:$0xff]
  %v2143 = vld [vmem:[%s2141 + $0x8] sm:$0xff]
  %v2144 = vld [vmem:[%s2141 + $0x10] sm:$0xff]
  %v2145 = vld [vmem:[%s2141 + $0x18] sm:$0xff]
  %2146 = vmatpush.bf16.msra.mxu0 %v880
  %2147 = vmatpush.bf16.msra.mxu0 %v876
  %2148 = vmatpush.bf16.msra.mxu0 %v872
  %2149 = vmatpush.bf16.msra.mxu0 %v868
  %2150 = vmatpush.bf16.msra.mxu0 %v864
  %2151 = vmatpush.bf16.msra.mxu0 %v860
  %2152 = vmatpush.bf16.msra.mxu0 %v856
  %2153 = vmatpush.bf16.msra.mxu0 %v852
  %2154 = vmatmul.bf16.gmra.mxu0 %v2033
  %v2155 = vpop.f32.mrf.mxu0
  %v2156 = vadd.f32 0.0, %v2155
  %v2157 = vpop.f32.mrf.mxu0
  %2158 = vdwg.mxu0
  %2159 = vmatpush.bf16.msra.mxu0 %v881
  %2160 = vmatpush.bf16.msra.mxu0 %v877
  %2161 = vmatpush.bf16.msra.mxu0 %v873
  %2162 = vmatpush.bf16.msra.mxu0 %v869
  %2163 = vmatpush.bf16.msra.mxu0 %v865
  %2164 = vmatpush.bf16.msra.mxu0 %v861
  %2165 = vmatpush.bf16.msra.mxu0 %v857
  %2166 = vmatpush.bf16.msra.mxu0 %v853
  %2167 = vmatmul.bf16.gmra.mxu0 %v2033
  %v2168 = vpop.f32.mrf.mxu0
  %v2169 = vadd.f32 0.0, %v2168
  %v2170 = vpop.f32.mrf.mxu0
  %2171 = vdwg.mxu0
  %2172 = vmatpush.bf16.msra.mxu0 %v882
  %2173 = vmatpush.bf16.msra.mxu0 %v878
  %2174 = vmatpush.bf16.msra.mxu0 %v874
  %2175 = vmatpush.bf16.msra.mxu0 %v870
  %2176 = vmatpush.bf16.msra.mxu0 %v866
  %2177 = vmatpush.bf16.msra.mxu0 %v862
  %2178 = vmatpush.bf16.msra.mxu0 %v858
  %2179 = vmatpush.bf16.msra.mxu0 %v854
  %2180 = vmatmul.bf16.gmra.mxu0 %v2033
  %v2181 = vpop.f32.mrf.mxu0
  %v2182 = vadd.f32 0.0, %v2181
  %v2183 = vpop.f32.mrf.mxu0
  %2184 = vdwg.mxu0
  %2185 = vmatpush.bf16.msra.mxu0 %v883
  %2186 = vmatpush.bf16.msra.mxu0 %v879
  %2187 = vmatpush.bf16.msra.mxu0 %v875
  %2188 = vmatpush.bf16.msra.mxu0 %v871
  %2189 = vmatpush.bf16.msra.mxu0 %v867
  %2190 = vmatpush.bf16.msra.mxu0 %v863
  %2191 = vmatpush.bf16.msra.mxu0 %v859
  %2192 = vmatpush.bf16.msra.mxu0 %v855
  %2193 = vmatmul.bf16.gmra.mxu0 %v2033
  %v2194 = vpop.f32.mrf.mxu0
  %v2195 = vadd.f32 0.0, %v2194
  %v2196 = vpop.f32.mrf.mxu0
  %2197 = vdwg.mxu0
  %v2198 = vadd.f32 %v2142, %v2156
  %v2199 = vadd.f32 %v2143, %v2169
  %v2200 = vadd.f32 %v2144, %v2182
  %v2201 = vadd.f32 %v2145, %v2195
  %v2202 = vmul.f32 %v2198, 0.5
  %v2203 = vmul.f32 %v2199, 0.5
  %v2204 = vmul.f32 %v2200, 0.5
  %v2205 = vtanh.pop %v2202
  %v2206 = vtanh.pop %v2203
  %v2207 = vtanh.pop %v2204
  %v2208 = vmul.f32 %v2205, 0.5
  %v2209 = vmul.f32 %v2206, 0.5
  %v2210 = vmul.f32 %v2207, 0.5
  %v2211 = vadd.f32 %v2208, 0.5
  %v2212 = vadd.f32 %v2209, 0.5
  %v2213 = vadd.f32 %v2210, 0.5
  %v2214 = vtanh.pop %v2201
  %v2215 = vmul.f32 %v2212, %v2012
  %v2216 = vmul.f32 %v2211, %v2214
  %v2217 = vadd.f32 %v2215, %v2216
  %v2218 = vtanh.pop %v2217
  %v2219 = vmul.f32 %v2213, %v2218
  %v2220 = vmul.f32 %v2058, 0.5
  %v2221 = vmul.f32 %v2084, 0.5
  %v2222 = vmul.f32 %v2110, 0.5
  %v2223 = vtanh.pop %v2220
  %v2224 = vtanh.pop %v2221
  %v2225 = vtanh.pop %v2222
  %v2226 = vmul.f32 %v2223, 0.5
  %v2227 = vmul.f32 %v2224, 0.5
  %v2228 = vmul.f32 %v2225, 0.5
  %v2229 = vadd.f32 %v2226, 0.5
  %v2230 = vadd.f32 %v2227, 0.5
  %v2231 = vadd.f32 %v2228, 0.5
  %v2232 = vtanh.pop %v2136
  %v2233 = vmul.f32 %v2230, %v2030
  %v2234 = vmul.f32 %v2229, %v2232
  %v2235 = vadd.f32 %v2233, %v2234
  %v2236 = vtanh.pop %v2235
  %v2237 = vmul.f32 %v2231, %v2236
  %v2238 = vpack.c.bf16 %v2219, %v2219
  %v2239 = vpack.c.bf16 %v2237, %v2237
  %2240 = vmatpush.bf16.msra.mxu0 %v513
  %2241 = vmatpush.bf16.msra.mxu0 %v509
  %2242 = vmatpush.bf16.msra.mxu0 %v505
  %2243 = vmatpush.bf16.msra.mxu0 %v501
  %2244 = vmatpush.bf16.msra.mxu0 %v497
  %2245 = vmatpush.bf16.msra.mxu0 %v493
  %2246 = vmatpush.bf16.msra.mxu0 %v489
  %2247 = vmatpush.bf16.msra.mxu0 %v485
  %2248 = vmatmul.bf16.gmra.mxu0 %v2238
  %v2249 = vpop.f32.mrf.mxu0
  %v2250 = vadd.f32 %v285, %v2249
  %v2251 = vpop.f32.mrf.mxu0
  %2252 = vdwg.mxu0
  %2253 = vmatpush.bf16.msra.mxu0 %v545
  %2254 = vmatpush.bf16.msra.mxu0 %v541
  %2255 = vmatpush.bf16.msra.mxu0 %v537
  %2256 = vmatpush.bf16.msra.mxu0 %v533
  %2257 = vmatpush.bf16.msra.mxu0 %v529
  %2258 = vmatpush.bf16.msra.mxu0 %v525
  %2259 = vmatpush.bf16.msra.mxu0 %v521
  %2260 = vmatpush.bf16.msra.mxu0 %v517
  %2261 = vmatmul.bf16.gmra.mxu0 %v2239
  %v2262 = vpop.f32.mrf.mxu0
  %v2263 = vadd.f32 %v2250, %v2262
  %v2264 = vpop.f32.mrf.mxu0
  %2265 = vdwg.mxu0
  %2266 = vmatpush.bf16.msra.mxu0 %v514
  %2267 = vmatpush.bf16.msra.mxu0 %v510
  %2268 = vmatpush.bf16.msra.mxu0 %v506
  %2269 = vmatpush.bf16.msra.mxu0 %v502
  %2270 = vmatpush.bf16.msra.mxu0 %v498
  %2271 = vmatpush.bf16.msra.mxu0 %v494
  %2272 = vmatpush.bf16.msra.mxu0 %v490
  %2273 = vmatpush.bf16.msra.mxu0 %v486
  %2274 = vmatmul.bf16.gmra.mxu0 %v2238
  %v2275 = vpop.f32.mrf.mxu0
  %v2276 = vadd.f32 %v286, %v2275
  %v2277 = vpop.f32.mrf.mxu0
  %2278 = vdwg.mxu0
  %2279 = vmatpush.bf16.msra.mxu0 %v546
  %2280 = vmatpush.bf16.msra.mxu0 %v542
  %2281 = vmatpush.bf16.msra.mxu0 %v538
  %2282 = vmatpush.bf16.msra.mxu0 %v534
  %2283 = vmatpush.bf16.msra.mxu0 %v530
  %2284 = vmatpush.bf16.msra.mxu0 %v526
  %2285 = vmatpush.bf16.msra.mxu0 %v522
  %2286 = vmatpush.bf16.msra.mxu0 %v518
  %2287 = vmatmul.bf16.gmra.mxu0 %v2239
  %v2288 = vpop.f32.mrf.mxu0
  %v2289 = vadd.f32 %v2276, %v2288
  %v2290 = vpop.f32.mrf.mxu0
  %2291 = vdwg.mxu0
  %2292 = vmatpush.bf16.msra.mxu0 %v515
  %2293 = vmatpush.bf16.msra.mxu0 %v511
  %2294 = vmatpush.bf16.msra.mxu0 %v507
  %2295 = vmatpush.bf16.msra.mxu0 %v503
  %2296 = vmatpush.bf16.msra.mxu0 %v499
  %2297 = vmatpush.bf16.msra.mxu0 %v495
  %2298 = vmatpush.bf16.msra.mxu0 %v491
  %2299 = vmatpush.bf16.msra.mxu0 %v487
  %2300 = vmatmul.bf16.gmra.mxu0 %v2238
  %v2301 = vpop.f32.mrf.mxu0
  %v2302 = vadd.f32 %v287, %v2301
  %v2303 = vpop.f32.mrf.mxu0
  %2304 = vdwg.mxu0
  %2305 = vmatpush.bf16.msra.mxu0 %v547
  %2306 = vmatpush.bf16.msra.mxu0 %v543
  %2307 = vmatpush.bf16.msra.mxu0 %v539
  %2308 = vmatpush.bf16.msra.mxu0 %v535
  %2309 = vmatpush.bf16.msra.mxu0 %v531
  %2310 = vmatpush.bf16.msra.mxu0 %v527
  %2311 = vmatpush.bf16.msra.mxu0 %v523
  %2312 = vmatpush.bf16.msra.mxu0 %v519
  %2313 = vmatmul.bf16.gmra.mxu0 %v2239
  %v2314 = vpop.f32.mrf.mxu0
  %v2315 = vadd.f32 %v2302, %v2314
  %v2316 = vpop.f32.mrf.mxu0
  %2317 = vdwg.mxu0
  %2318 = vmatpush.bf16.msra.mxu0 %v516
  %2319 = vmatpush.bf16.msra.mxu0 %v512
  %2320 = vmatpush.bf16.msra.mxu0 %v508
  %2321 = vmatpush.bf16.msra.mxu0 %v504
  %2322 = vmatpush.bf16.msra.mxu0 %v500
  %2323 = vmatpush.bf16.msra.mxu0 %v496
  %2324 = vmatpush.bf16.msra.mxu0 %v492
  %2325 = vmatpush.bf16.msra.mxu0 %v488
  %2326 = vmatmul.bf16.gmra.mxu0 %v2238
  %v2327 = vpop.f32.mrf.mxu0
  %v2328 = vadd.f32 %v288, %v2327
  %v2329 = vpop.f32.mrf.mxu0
  %2330 = vdwg.mxu0
  %2331 = vmatpush.bf16.msra.mxu0 %v548
  %2332 = vmatpush.bf16.msra.mxu0 %v544
  %2333 = vmatpush.bf16.msra.mxu0 %v540
  %2334 = vmatpush.bf16.msra.mxu0 %v536
  %2335 = vmatpush.bf16.msra.mxu0 %v532
  %2336 = vmatpush.bf16.msra.mxu0 %v528
  %2337 = vmatpush.bf16.msra.mxu0 %v524
  %2338 = vmatpush.bf16.msra.mxu0 %v520
  %2339 = vmatmul.bf16.gmra.mxu0 %v2239
  %v2340 = vpop.f32.mrf.mxu0
  %v2341 = vadd.f32 %v2328, %v2340
  %v2342 = vpop.f32.mrf.mxu0
  %2343 = vdwg.mxu0
  %v2344 = vmul.f32 %v2263, 0.5
  %v2345 = vmul.f32 %v2289, 0.5
  %v2346 = vmul.f32 %v2315, 0.5
  %v2347 = vtanh.pop %v2344
  %v2348 = vtanh.pop %v2345
  %v2349 = vtanh.pop %v2346
  %v2350 = vmul.f32 %v2347, 0.5
  %v2351 = vmul.f32 %v2348, 0.5
  %v2352 = vmul.f32 %v2349, 0.5
  %v2353 = vadd.f32 %v2350, 0.5
  %v2354 = vadd.f32 %v2351, 0.5
  %v2355 = vadd.f32 %v2352, 0.5
  %v2356 = vtanh.pop %v2341
  %v2357 = vmul.f32 %v2354, %v2235
  %v2358 = vmul.f32 %v2353, %v2356
  %v2359 = vadd.f32 %v2357, %v2358
  %v2360 = vtanh.pop %v2359
  %v2361 = vmul.f32 %v2355, %v2360
  %v2362 = vld [vmem:[%s6] sm:$0xff]
  %v2363 = vld [vmem:[%s6 + $0x8] sm:$0xff]
  %v2364 = vld [vmem:[%s6 + $0x10] sm:$0xff]
  %v2365 = vld [vmem:[%s6 + $0x18] sm:$0xff]
  %v2366 = vld [vmem:[%s6 + $0x20] sm:$0xff]
  %v2367 = vld [vmem:[%s6 + $0x28] sm:$0xff]
  %v2368 = vld [vmem:[%s6 + $0x30] sm:$0xff]
  %v2369 = vld [vmem:[%s6 + $0x38] sm:$0xff]
  %v2370 = vld [vmem:[%s6 + $0x40] sm:$0xff]
  %v2371 = vld [vmem:[%s6 + $0x48] sm:$0xff]
  %v2372 = vld [vmem:[%s6 + $0x50] sm:$0xff]
  %v2373 = vld [vmem:[%s6 + $0x58] sm:$0xff]
  %v2374 = vld [vmem:[%s6 + $0x60] sm:$0xff]
  %v2375 = vld [vmem:[%s6 + $0x68] sm:$0xff]
  %v2376 = vld [vmem:[%s6 + $0x70] sm:$0xff]
  %v2377 = vld [vmem:[%s6 + $0x78] sm:$0xff]
  %v2378 = vld [vmem:[#allocation3] sm:$0x1]
  %v2380 = vperm.slane %v2378, 0
  %2382 = vmatpush.msra.mxu0 %v2377
  %2383 = vmatpush.msra.mxu0 %v2376
  %2384 = vmatpush.msra.mxu0 %v2375
  %2385 = vmatpush.msra.mxu0 %v2374
  %2386 = vmatpush.msra.mxu0 %v2373
  %2387 = vmatpush.msra.mxu0 %v2372
  %2388 = vmatpush.msra.mxu0 %v2371
  %2389 = vmatpush.msra.mxu0 %v2370
  %2390 = vmatpush.msra.mxu0 %v2369
  %2391 = vmatpush.msra.mxu0 %v2368
  %2392 = vmatpush.msra.mxu0 %v2367
  %2393 = vmatpush.msra.mxu0 %v2366
  %2394 = vmatpush.msra.mxu0 %v2365
  %2395 = vmatpush.msra.mxu0 %v2364
  %2396 = vmatpush.msra.mxu0 %v2363
  %2397 = vmatpush.msra.mxu0 %v2362
  %2398 = vmatmul.f32.gmra.mxu0 %v2361
  %v2399 = vpop.f32.mrf.mxu0
  %v2400 = vadd.f32 %v2380, %v2399
  %2401 = vdwg.mxu0
  %vm2402 = vcmask 7168
  %2403 = vst.msk [vmem:[%s8] sm:$0xff] %vm2402, %v2400
  // Predicated region
  $region34: #{lstm_model_forward.1} parent=0 // pred_check
    _
  $region35: #{lstm_model_forward.1} parent=0 // pred_check_branch
    %2405 = sbr.rel (0) target = $region37
  $region36: #{lstm_model_forward.1} parent=0 // pred_region
    _
  $region37: #{lstm_model_forward.1} parent=0 // pred_fallthru
    _
  // Predicated region
  $region38: #{lstm_model_forward.1} parent=0 // pred_check
    _
  $region39: #{lstm_model_forward.1} parent=0 // pred_check_branch
    %2407 = sbr.rel (0) target = $region41
  $region40: #{lstm_model_forward.1} parent=0 // pred_region
    _
  $region41: #{lstm_model_forward.1} parent=0 // pred_fallthru
    _

</llo_original>
